<compile_context>
chip_gen: v5e
topology: v5e:2x2
jax: 0.10.0
libtpu: 0.0.40
codegen_flags: <defaults>
</compile_context>

<pallas_src>
import functools
import math

import jax
import jax.numpy as jnp
from jax import lax
from jax.experimental import pallas as pl
from jax.experimental.pallas import tpu as pltpu


def _round_up(x, m):
    return (x + m - 1) // m * m


def _resblock_kernel(x_ref, w1_ref, b1_ref, w2_ref, b2_ref, o_ref, xpad_ref, mid_ref,
                     *, H, W, C, R, hc):
    # x_ref  : (H, W, C) f32      unpadded NHWC image (batch dim squeezed by BlockSpec)
    # w1_ref : (9*C, C) bf16      conv1 weight, rows = (dh, dw, cin) flattened
    # b1_ref : (1, C) f32
    # w2_ref : (9*C, C) bf16
    # b2_ref : (1, C) f32
    # o_ref  : (H, W, C) f32
    # xpad_ref, mid_ref : (P, C) bf16 flat zero-padded layouts with row stride R.
    #   IOFF (multiple of 16) is the flat offset of data row 0 -> every big store is a
    #   packed-tile-aligned store; ORG is the flat offset of padded element (0, 0).
    IOFF = R + 16
    ORG = IOFF - (R + 1)
    P = xpad_ref.shape[0]
    HALO = R + 16                       # == P - IOFF - H*R  (head and tail halo sizes)

    # Zero only the top/bottom halo regions; the interior [IOFF, IOFF + H*R) is fully
    # overwritten every grid step.  (No program_id guard: with megacore "parallel"
    # sharding each core owns its own scratch, so this must run every step.)
    halo_zeros = jnp.zeros((HALO, C), jnp.bfloat16)
    xpad_ref[0:IOFF, :] = halo_zeros
    xpad_ref[IOFF + H * R:P, :] = halo_zeros
    mid_ref[0:IOFF, :] = halo_zeros
    mid_ref[IOFF + H * R:P, :] = halo_zeros

    # Loop-invariant junk-column mask (columns >= W of each R-wide flattened row),
    # hoisted out of the chunk loops.  Do NOT remove: the zeroed junk columns of
    # `mid` provide conv2's left/right zero padding.
    keep = lax.broadcasted_iota(jnp.int32, (R, C), 0) < W            # (R, C) bool

    def aligned(off):
        return off if isinstance(off, int) else pl.multiple_of(off, 16)

    def copy_pad_chunk(h0, hh):
        # One-time f32 -> bf16 cast; right-pad each row from W to the row stride R
        # with zeros (these zeros are conv1's horizontal zero padding).
        chunk = x_ref[pl.ds(h0, hh), :, :].astype(jnp.bfloat16)          # (hh, W, C)
        padded = jnp.concatenate(
            [chunk, jnp.zeros((hh, R - W, C), jnp.bfloat16)], axis=1)    # (hh, R, C)
        dst = aligned(IOFF + h0 * R)
        xpad_ref[pl.ds(dst, hh * R), :] = padded.reshape(hh * R, C)      # aligned store

    def taps(src_ref, h0, n):
        # 9 row-offset slices of the flat padded layout -> one (n, 9C) bf16 patch
        # (no per-tap casts: the source scratches are already bf16).
        start = ORG + h0 * R
        cols = [src_ref[pl.ds(start + dh * R + dw, n), :]
                for dh in range(3) for dw in range(3)]
        return jnp.concatenate(cols, axis=-1)

    def conv1_chunk(h0, hh):
        n = hh * R
        patch = taps(xpad_ref, h0, n)                                    # (n, 9C) bf16
        acc = jnp.dot(patch, w1_ref[...], preferred_element_type=jnp.float32)
        acc = jnp.maximum(acc + b1_ref[...], 0.0)
        acc = jnp.where(keep[None], acc.reshape(hh, R, C), 0.0).reshape(n, C)
        dst = aligned(IOFF + h0 * R)
        mid_ref[pl.ds(dst, n), :] = acc.astype(jnp.bfloat16)             # aligned store

    def conv2_chunk(h0, hh):
        n = hh * R
        patch = taps(mid_ref, h0, n)                                     # (n, 9C) bf16
        acc = jnp.dot(patch, w2_ref[...], preferred_element_type=jnp.float32)
        acc = (acc + b2_ref[...]).reshape(hh, R, C)[:, :W, :]            # drop junk cols
        res = x_ref[pl.ds(h0, hh), :, :] + acc                           # f32 residual
        # TODO(synk): C=64 (<128 lanes) makes this a masked store; evaluate a
        #             lane-dense (H, W*C) output view if the repack wins end-to-end.
        o_ref[pl.ds(h0, hh), :, :] = res.astype(o_ref.dtype)

    n_full = H // hc
    rem = H % hc

    def run(fn):
        if n_full <= 8:          # short: unroll (static offsets, LLO visibility)
            for ci in range(n_full):
                fn(ci * hc, hc)
        else:                    # long: roll to bound live ranges / compile time
            def body(ci, carry):
                fn(ci * hc, hc)
                return carry
            lax.fori_loop(0, n_full, body, 0)
        if rem:
            fn(n_full * hc, rem)

    run(copy_pad_chunk)          # stage 1: pad + single bf16 cast of input into VMEM
    run(conv1_chunk)             # stage 2: conv1 + bias + ReLU -> mid (bf16)
    run(conv2_chunk)             # stage 3: conv2 + bias + residual -> out (f32)


def residual_block_nobn(x_nchw, w1, b1, w2, b2, *, row_chunk=None):
    """x_nchw: (B, C, H, W) f32.  w*: (3,3,C,C) HWIO, b*: (C,).  Returns (B, C, H, W)."""
    B, C, H, W = x_nchw.shape
    R = _round_up(W + 2, 16)            # flattened padded row stride (bf16-pack aligned)
    P = (H + 2) * R + 32                # flat length of each padded scratch

    # NCHW -> NHWC so channels sit on the lane axis.
    # TODO(synk): keep the surrounding model NHWC to avoid these two transpose passes.
    x_nhwc = jnp.transpose(x_nchw, (0, 2, 3, 1))

    # Conv weights as single (9*C, C) bf16 matrices -> one deep-K MXU matmul per conv.
    w1m = w1.reshape(9 * C, C).astype(jnp.bfloat16)
    w2m = w2.reshape(9 * C, C).astype(jnp.bfloat16)
    b1_2d = b1.reshape(1, C).astype(jnp.float32)
    b2_2d = b2.reshape(1, C).astype(jnp.float32)

    # Row chunk: keep the bf16 im2col patch around ~2 MiB and make hc*R a whole number
    # of 256-wide MXU tiles when possible.
    if row_chunk is None:
        hc = max(1, min(H, (2 << 20) // (R * 9 * C * 2)))
        m = 256 // math.gcd(R, 256)
        if hc >= m:
            hc = (hc // m) * m
    else:
        hc = max(1, min(H, row_chunk))

    kernel = functools.partial(_resblock_kernel, H=H, W=W, C=C, R=R, hc=hc)

    # VMEM budget: actual working set (double-buffered in/out blocks + two bf16
    # scratches + double-buffered weights) with ~2x headroom, capped below v7x's
    # 64 MiB per-TC VMEM instead of requesting all of it.
    io_block = H * W * C * 4
    need = 4 * io_block + 2 * (P * C * 2) + 4 * (9 * C * C * 2) + (2 << 20)
    vmem_limit = int(min(max(2 * need, 32 << 20), 56 << 20))

    out_nhwc = pl.pallas_call(
        kernel,
        out_shape=jax.ShapeDtypeStruct((B, H, W, C), x_nchw.dtype),
        grid_spec=pltpu.PrefetchScalarGridSpec(
            num_scalar_prefetch=0,
            grid=(B,),
            in_specs=[
                pl.BlockSpec((None, H, W, C), lambda b: (b, 0, 0, 0)),   # x (NHWC)
                pl.BlockSpec((9 * C, C), lambda b: (0, 0)),              # w1
                pl.BlockSpec((1, C), lambda b: (0, 0)),                  # b1
                pl.BlockSpec((9 * C, C), lambda b: (0, 0)),              # w2
                pl.BlockSpec((1, C), lambda b: (0, 0)),                  # b2
            ],
            out_specs=pl.BlockSpec((None, H, W, C), lambda b: (b, 0, 0, 0)),
            scratch_shapes=[pltpu.VMEM((P, C), jnp.bfloat16),   # padded bf16 input
                            pltpu.VMEM((P, C), jnp.bfloat16)],  # padded ReLU(conv1)
        ),
        compiler_params=pltpu.CompilerParams(
            dimension_semantics=("parallel",),        # megacore-shard the batch (v7x)
            vmem_limit_bytes=vmem_limit),
    )(x_nhwc, w1m, b1_2d, w2m, b2_2d)

    # TODO(synk): for large images (whole-image block + scratches near v7x's 64 MiB
    #             budget) or B < num_cores, add a second "parallel" row-strip grid
    #             axis with halo rows via manual DMA so both cores stay busy, VMEM is
    #             bounded, and the input DMA pipelines.
    return jnp.transpose(out_nhwc, (0, 3, 1, 2))      # NHWC -> NCHW


def _reference(x_nchw, w1, b1, w2, b2):
    """Plain-JAX f32 reference using lax.conv for correctness checking."""
    dn = lax.conv_dimension_numbers(x_nchw.shape, (3, 3, w1.shape[2], w1.shape[3]),
                                    ("NCHW", "HWIO", "NCHW"))

    def conv(x, w, b):
        y = lax.conv_general_dilated(x, w, window_strides=(1, 1),
                                     padding="SAME", dimension_numbers=dn)
        return y + b.reshape(1, -1, 1, 1)

    out = jax.nn.relu(conv(x_nchw, w1, b1))
    out = conv(out, w2, b2)
    return x_nchw + out


def init_params(key, nf):
    """Deterministic init matching kaiming_normal_(a=0, mode='fan_in') * 0.1, bias=0."""
    fan_in = nf * 3 * 3
    std = (2.0 / fan_in) ** 0.5
    k1, k2 = jax.random.split(key)
    w1 = jax.random.normal(k1, (3, 3, nf, nf), jnp.float32) * std * 0.1
    w2 = jax.random.normal(k2, (3, 3, nf, nf), jnp.float32) * std * 0.1
    b1 = jnp.zeros((nf,), jnp.float32)
    b2 = jnp.zeros((nf,), jnp.float32)
    return w1, b1, w2, b2


if __name__ == "__main__":
    key = jax.random.PRNGKey(0)
    k_x, k_p = jax.random.split(key)

    B, nf, H, W = 2, 64, 16, 16               # nf=64 matches the module default
    x = jax.random.normal(k_x, (B, nf, H, W), jnp.float32)
    w1, b1, w2, b2 = init_params(k_p, nf)

    out = jax.block_until_ready(residual_block_nobn(x, w1, b1, w2, b2))

    ref = jax.block_until_ready(_reference(x, w1, b1, w2, b2))
    assert out.shape == (B, nf, H, W)
    # bf16 matmul operands with f32 accumulation -> looser tolerance than pure f32.
    assert jnp.allclose(out, ref, atol=5e-3, rtol=5e-3), "mismatch vs reference conv"

    print("KERNEL_OK")
</pallas_src>

<mosaic_0001>
module attributes {stable_mosaic.version = 11 : i64} {
  func.func @_resblock_kernel(%arg0: i32, %arg1: memref<1x16x16x64xf32, #tpu.memory_space<vmem>>, %arg2: memref<576x64xbf16, #tpu.memory_space<vmem>>, %arg3: memref<1x64xf32, #tpu.memory_space<vmem>>, %arg4: memref<576x64xbf16, #tpu.memory_space<vmem>>, %arg5: memref<1x64xf32, #tpu.memory_space<vmem>>, %arg6: memref<1x16x16x64xf32, #tpu.memory_space<vmem>>, %arg7: memref<608x64xbf16, #tpu.memory_space<vmem>>, %arg8: memref<608x64xbf16, #tpu.memory_space<vmem>>) attributes {dimension_semantics = [#tpu.dimension_semantics<parallel>], iteration_bounds = array<i64: 2>, scalar_prefetch = 0 : i64, scratch_operands = 2 : i64, tpu.core_type = #tpu.core_type<tc>, window_params = [{transform_indices = @transform_0, window_bounds = array<i64: 1, 16, 16, 64>}, {pipeline_mode = #tpu.pipeline_mode<synchronous>, transform_indices = @transform_1, window_bounds = array<i64: 576, 64>}, {pipeline_mode = #tpu.pipeline_mode<synchronous>, transform_indices = @transform_2, window_bounds = array<i64: 1, 64>}, {pipeline_mode = #tpu.pipeline_mode<synchronous>, transform_indices = @transform_3, window_bounds = array<i64: 576, 64>}, {pipeline_mode = #tpu.pipeline_mode<synchronous>, transform_indices = @transform_4, window_bounds = array<i64: 1, 64>}, {transform_indices = @transform_5, window_bounds = array<i64: 1, 16, 16, 64>}]} {
    %cst = arith.constant 0.000000e+00 : bf16
    %0 = vector.broadcast %cst : bf16 to vector<48x64xbf16>
    %c0 = arith.constant 0 : index
    %c0_0 = arith.constant 0 : index
    %1 = vector.load %arg7[%c0, %c0_0] : memref<608x64xbf16, #tpu.memory_space<vmem>>, vector<48x64xbf16>
    tpu.vector_store %arg7[%c0, %c0_0], %0 {strides = array<i32>} : memref<608x64xbf16, #tpu.memory_space<vmem>>, vector<48x64xbf16>,
    %c560 = arith.constant 560 : index
    %c0_1 = arith.constant 0 : index
    %2 = vector.load %arg7[%c560, %c0_1] : memref<608x64xbf16, #tpu.memory_space<vmem>>, vector<48x64xbf16>
    tpu.vector_store %arg7[%c560, %c0_1], %0 {strides = array<i32>} : memref<608x64xbf16, #tpu.memory_space<vmem>>, vector<48x64xbf16>,
    %c0_2 = arith.constant 0 : index
    %c0_3 = arith.constant 0 : index
    %3 = vector.load %arg8[%c0_2, %c0_3] : memref<608x64xbf16, #tpu.memory_space<vmem>>, vector<48x64xbf16>
    tpu.vector_store %arg8[%c0_2, %c0_3], %0 {strides = array<i32>} : memref<608x64xbf16, #tpu.memory_space<vmem>>, vector<48x64xbf16>,
    %c560_4 = arith.constant 560 : index
    %c0_5 = arith.constant 0 : index
    %4 = vector.load %arg8[%c560_4, %c0_5] : memref<608x64xbf16, #tpu.memory_space<vmem>>, vector<48x64xbf16>
    tpu.vector_store %arg8[%c560_4, %c0_5], %0 {strides = array<i32>} : memref<608x64xbf16, #tpu.memory_space<vmem>>, vector<48x64xbf16>,
    %5 = tpu.iota {dimensions = array<i32: 0>} : vector<32x64xi32>
    %c16_i32 = arith.constant 16 : i32
    %6 = vector.broadcast %c16_i32 : i32 to vector<32x64xi32>
    %7 = arith.cmpi slt, %5, %6 : vector<32x64xi32>
    %c0_6 = arith.constant 0 : index
    %c0_7 = arith.constant 0 : index
    %c0_8 = arith.constant 0 : index
    %c0_9 = arith.constant 0 : index
    %8 = vector.load %arg1[%c0_6, %c0_7, %c0_8, %c0_9] : memref<1x16x16x64xf32, #tpu.memory_space<vmem>>, vector<1x16x16x64xf32>
    %9 = vector.shape_cast %8 : vector<1x16x16x64xf32> to vector<16x16x64xf32>
    %10 = arith.truncf %9 : vector<16x16x64xf32> to vector<16x16x64xbf16>
    %cst_10 = arith.constant 0.000000e+00 : bf16
    %11 = vector.broadcast %cst_10 : bf16 to vector<16x16x64xbf16>
    %12 = tpu.concatenate %10, %11 in 1 : vector<16x16x64xbf16>, vector<16x16x64xbf16> -> vector<16x32x64xbf16>
    %13 = vector.shape_cast %12 : vector<16x32x64xbf16> to vector<512x64xbf16>
    %c48 = arith.constant 48 : index
    %c0_11 = arith.constant 0 : index
    %14 = vector.load %arg7[%c48, %c0_11] : memref<608x64xbf16, #tpu.memory_space<vmem>>, vector<512x64xbf16>
    tpu.vector_store %arg7[%c48, %c0_11], %13 {strides = array<i32>} : memref<608x64xbf16, #tpu.memory_space<vmem>>, vector<512x64xbf16>,
    %c15 = arith.constant 15 : index
    %c0_12 = arith.constant 0 : index
    %15 = vector.load %arg7[%c15, %c0_12] : memref<608x64xbf16, #tpu.memory_space<vmem>>, vector<512x64xbf16>
    %c16 = arith.constant 16 : index
    %c0_13 = arith.constant 0 : index
    %16 = vector.load %arg7[%c16, %c0_13] : memref<608x64xbf16, #tpu.memory_space<vmem>>, vector<512x64xbf16>
    %c17 = arith.constant 17 : index
    %c0_14 = arith.constant 0 : index
    %17 = vector.load %arg7[%c17, %c0_14] : memref<608x64xbf16, #tpu.memory_space<vmem>>, vector<512x64xbf16>
    %c47 = arith.constant 47 : index
    %c0_15 = arith.constant 0 : index
    %18 = vector.load %arg7[%c47, %c0_15] : memref<608x64xbf16, #tpu.memory_space<vmem>>, vector<512x64xbf16>
    %c48_16 = arith.constant 48 : index
    %c0_17 = arith.constant 0 : index
    %19 = vector.load %arg7[%c48_16, %c0_17] : memref<608x64xbf16, #tpu.memory_space<vmem>>, vector<512x64xbf16>
    %c49 = arith.constant 49 : index
    %c0_18 = arith.constant 0 : index
    %20 = vector.load %arg7[%c49, %c0_18] : memref<608x64xbf16, #tpu.memory_space<vmem>>, vector<512x64xbf16>
    %c79 = arith.constant 79 : index
    %c0_19 = arith.constant 0 : index
    %21 = vector.load %arg7[%c79, %c0_19] : memref<608x64xbf16, #tpu.memory_space<vmem>>, vector<512x64xbf16>
    %c80 = arith.constant 80 : index
    %c0_20 = arith.constant 0 : index
    %22 = vector.load %arg7[%c80, %c0_20] : memref<608x64xbf16, #tpu.memory_space<vmem>>, vector<512x64xbf16>
    %c81 = arith.constant 81 : index
    %c0_21 = arith.constant 0 : index
    %23 = vector.load %arg7[%c81, %c0_21] : memref<608x64xbf16, #tpu.memory_space<vmem>>, vector<512x64xbf16>
    %24 = tpu.concatenate %15, %16, %17, %18, %19, %20, %21, %22, %23 in 1 : vector<512x64xbf16>, vector<512x64xbf16>, vector<512x64xbf16>, vector<512x64xbf16>, vector<512x64xbf16>, vector<512x64xbf16>, vector<512x64xbf16>, vector<512x64xbf16>, vector<512x64xbf16> -> vector<512x576xbf16>
    %c0_22 = arith.constant 0 : index
    %c0_23 = arith.constant 0 : index
    %25 = vector.load %arg2[%c0_22, %c0_23] : memref<576x64xbf16, #tpu.memory_space<vmem>>, vector<576x64xbf16>
    %cst_24 = arith.constant dense<0.000000e+00> : vector<512x64xf32>
    %26 = tpu.matmul %24, %25, %cst_24 {dimension_numbers = #tpu.dot_dimension_numbers<[1], [0], [0], [1], [0, 0, 1, 1], [], []>} : vector<512x576xbf16>, vector<576x64xbf16>, vector<512x64xf32> -> vector<512x64xf32>
    %c0_25 = arith.constant 0 : index
    %c0_26 = arith.constant 0 : index
    %27 = vector.load %arg3[%c0_25, %c0_26] : memref<1x64xf32, #tpu.memory_space<vmem>>, vector<1x64xf32>
    %28 = vector.broadcast %27 : vector<1x64xf32> to vector<512x64xf32>
    %29 = arith.addf %26, %28 : vector<512x64xf32>
    %cst_27 = arith.constant 0.000000e+00 : f32
    %30 = vector.broadcast %cst_27 : f32 to vector<512x64xf32>
    %31 = arith.maximumf %29, %30 : vector<512x64xf32>
    %32 = vector.shape_cast %7 : vector<32x64xi1> to vector<1x32x64xi1>
    %33 = vector.shape_cast %31 : vector<512x64xf32> to vector<16x32x64xf32>
    %cst_28 = arith.constant 0.000000e+00 : f32
    %34 = vector.shape_cast %32 : vector<1x32x64xi1> to vector<1x32x64xi1>
    %35 = vector.broadcast %34 : vector<1x32x64xi1> to vector<16x32x64xi1>
    %36 = vector.broadcast %cst_28 : f32 to vector<16x32x64xf32>
    %37 = arith.select %35, %33, %36 : vector<16x32x64xi1>, vector<16x32x64xf32>
    %38 = vector.shape_cast %37 : vector<16x32x64xf32> to vector<512x64xf32>
    %39 = arith.truncf %38 : vector<512x64xf32> to vector<512x64xbf16>
    %c48_29 = arith.constant 48 : index
    %c0_30 = arith.constant 0 : index
    %40 = vector.load %arg8[%c48_29, %c0_30] : memref<608x64xbf16, #tpu.memory_space<vmem>>, vector<512x64xbf16>
    tpu.vector_store %arg8[%c48_29, %c0_30], %39 {strides = array<i32>} : memref<608x64xbf16, #tpu.memory_space<vmem>>, vector<512x64xbf16>,
    %c15_31 = arith.constant 15 : index
    %c0_32 = arith.constant 0 : index
    %41 = vector.load %arg8[%c15_31, %c0_32] : memref<608x64xbf16, #tpu.memory_space<vmem>>, vector<512x64xbf16>
    %c16_33 = arith.constant 16 : index
    %c0_34 = arith.constant 0 : index
    %42 = vector.load %arg8[%c16_33, %c0_34] : memref<608x64xbf16, #tpu.memory_space<vmem>>, vector<512x64xbf16>
    %c17_35 = arith.constant 17 : index
    %c0_36 = arith.constant 0 : index
    %43 = vector.load %arg8[%c17_35, %c0_36] : memref<608x64xbf16, #tpu.memory_space<vmem>>, vector<512x64xbf16>
    %c47_37 = arith.constant 47 : index
    %c0_38 = arith.constant 0 : index
    %44 = vector.load %arg8[%c47_37, %c0_38] : memref<608x64xbf16, #tpu.memory_space<vmem>>, vector<512x64xbf16>
    %c48_39 = arith.constant 48 : index
    %c0_40 = arith.constant 0 : index
    %45 = vector.load %arg8[%c48_39, %c0_40] : memref<608x64xbf16, #tpu.memory_space<vmem>>, vector<512x64xbf16>
    %c49_41 = arith.constant 49 : index
    %c0_42 = arith.constant 0 : index
    %46 = vector.load %arg8[%c49_41, %c0_42] : memref<608x64xbf16, #tpu.memory_space<vmem>>, vector<512x64xbf16>
    %c79_43 = arith.constant 79 : index
    %c0_44 = arith.constant 0 : index
    %47 = vector.load %arg8[%c79_43, %c0_44] : memref<608x64xbf16, #tpu.memory_space<vmem>>, vector<512x64xbf16>
    %c80_45 = arith.constant 80 : index
    %c0_46 = arith.constant 0 : index
    %48 = vector.load %arg8[%c80_45, %c0_46] : memref<608x64xbf16, #tpu.memory_space<vmem>>, vector<512x64xbf16>
    %c81_47 = arith.constant 81 : index
    %c0_48 = arith.constant 0 : index
    %49 = vector.load %arg8[%c81_47, %c0_48] : memref<608x64xbf16, #tpu.memory_space<vmem>>, vector<512x64xbf16>
    %50 = tpu.concatenate %41, %42, %43, %44, %45, %46, %47, %48, %49 in 1 : vector<512x64xbf16>, vector<512x64xbf16>, vector<512x64xbf16>, vector<512x64xbf16>, vector<512x64xbf16>, vector<512x64xbf16>, vector<512x64xbf16>, vector<512x64xbf16>, vector<512x64xbf16> -> vector<512x576xbf16>
    %c0_49 = arith.constant 0 : index
    %c0_50 = arith.constant 0 : index
    %51 = vector.load %arg4[%c0_49, %c0_50] : memref<576x64xbf16, #tpu.memory_space<vmem>>, vector<576x64xbf16>
    %cst_51 = arith.constant dense<0.000000e+00> : vector<512x64xf32>
    %52 = tpu.matmul %50, %51, %cst_51 {dimension_numbers = #tpu.dot_dimension_numbers<[1], [0], [0], [1], [0, 0, 1, 1], [], []>} : vector<512x576xbf16>, vector<576x64xbf16>, vector<512x64xf32> -> vector<512x64xf32>
    %c0_52 = arith.constant 0 : index
    %c0_53 = arith.constant 0 : index
    %53 = vector.load %arg5[%c0_52, %c0_53] : memref<1x64xf32, #tpu.memory_space<vmem>>, vector<1x64xf32>
    %54 = vector.broadcast %53 : vector<1x64xf32> to vector<512x64xf32>
    %55 = arith.addf %52, %54 : vector<512x64xf32>
    %56 = vector.shape_cast %55 : vector<512x64xf32> to vector<16x32x64xf32>
    %57 = vector.extract_strided_slice %56 {offsets = [0, 0, 0], sizes = [16, 16, 64], strides = [1, 1, 1]} : vector<16x32x64xf32> to vector<16x16x64xf32>
    %c0_54 = arith.constant 0 : index
    %c0_55 = arith.constant 0 : index
    %c0_56 = arith.constant 0 : index
    %c0_57 = arith.constant 0 : index
    %58 = vector.load %arg1[%c0_54, %c0_55, %c0_56, %c0_57] : memref<1x16x16x64xf32, #tpu.memory_space<vmem>>, vector<1x16x16x64xf32>
    %59 = vector.shape_cast %58 : vector<1x16x16x64xf32> to vector<16x16x64xf32>
    %60 = arith.addf %59, %57 : vector<16x16x64xf32>
    %c0_58 = arith.constant 0 : index
    %c0_59 = arith.constant 0 : index
    %c0_60 = arith.constant 0 : index
    %c0_61 = arith.constant 0 : index
    %61 = vector.load %arg6[%c0_58, %c0_59, %c0_60, %c0_61] : memref<1x16x16x64xf32, #tpu.memory_space<vmem>>, vector<1x16x16x64xf32>
    %62 = vector.shape_cast %61 : vector<1x16x16x64xf32> to vector<16x16x64xf32>
    %63 = vector.shape_cast %60 : vector<16x16x64xf32> to vector<1x16x16x64xf32>
    tpu.vector_store %arg6[%c0_58, %c0_59, %c0_60, %c0_61], %63 {strides = array<i32>} : memref<1x16x16x64xf32, #tpu.memory_space<vmem>>, vector<1x16x16x64xf32>,
    return
  }
  func.func @transform_0(%arg0: i32) -> (i32, i32, i32, i32) {
    %c0_i32 = arith.constant 0 : i32
    %c0_i32_0 = arith.constant 0 : i32
    %c0_i32_1 = arith.constant 0 : i32
    %c0_i32_2 = arith.constant 0 : i32
    return %arg0, %c0_i32, %c0_i32_0, %c0_i32_1 : i32, i32, i32, i32
  }
  func.func @transform_1(%arg0: i32) -> (i32, i32) {
    %c0_i32 = arith.constant 0 : i32
    %c0_i32_0 = arith.constant 0 : i32
    %c0_i32_1 = arith.constant 0 : i32
    return %c0_i32, %c0_i32_0 : i32, i32
  }
  func.func @transform_2(%arg0: i32) -> (i32, i32) {
    %c0_i32 = arith.constant 0 : i32
    %c0_i32_0 = arith.constant 0 : i32
    %c0_i32_1 = arith.constant 0 : i32
    return %c0_i32, %c0_i32_0 : i32, i32
  }
  func.func @transform_3(%arg0: i32) -> (i32, i32) {
    %c0_i32 = arith.constant 0 : i32
    %c0_i32_0 = arith.constant 0 : i32
    %c0_i32_1 = arith.constant 0 : i32
    return %c0_i32, %c0_i32_0 : i32, i32
  }
  func.func @transform_4(%arg0: i32) -> (i32, i32) {
    %c0_i32 = arith.constant 0 : i32
    %c0_i32_0 = arith.constant 0 : i32
    %c0_i32_1 = arith.constant 0 : i32
    return %c0_i32, %c0_i32_0 : i32, i32
  }
  func.func @transform_5(%arg0: i32) -> (i32, i32, i32, i32) {
    %c0_i32 = arith.constant 0 : i32
    %c0_i32_0 = arith.constant 0 : i32
    %c0_i32_1 = arith.constant 0 : i32
    %c0_i32_2 = arith.constant 0 : i32
    return %arg0, %c0_i32, %c0_i32_0, %c0_i32_1 : i32, i32, i32, i32
  }
}

</mosaic_0001>

<llo_original>
// kernel: tpu_custom_call.1
$region0: #{tpu_custom_call.1}
  #allocation0 [shape = 'u32[]', space=smem, size = 0x4, offset = 0x4, fixed_abs, tag = 'smem constant byte address 0x4 - core index']
  #allocation1 [shape = 'u32[72,128]{1,0:T(1,128)}', space=vmem, size = 0x9000, scoped, tag = 'internal scratch']
  #allocation2 [shape = 'bf16[608,64]{1,0:T(8,128)(2,1)}', space=vmem, size = 0x26000, scoped, tag = 'scratch operand']
  #allocation3 [shape = 'bf16[608,64]{1,0:T(8,128)(2,1)}', space=vmem, size = 0x26000, scoped, tag = 'scratch operand']
  %s0 = inlined_call_operand.vmem [shape: f32[2,16,16,64], index: 0, kind: input, shape index: {}]
  %s1 = inlined_call_operand.vmem [shape: bf16[576,64], index: 1, kind: input, shape index: {}]
  %s2 = inlined_call_operand.vmem [shape: f32[1,64], index: 2, kind: input, shape index: {}]
  %s3 = inlined_call_operand.vmem [shape: bf16[576,64], index: 3, kind: input, shape index: {}]
  %s4 = inlined_call_operand.vmem [shape: f32[1,64], index: 4, kind: input, shape index: {}]
  %s5 = inlined_call_operand.hbm [shape: f32[2,16,16,64], index: 5, kind: output, shape index: {}]
  %s6 = sld [smem:[#allocation0]]
  $region53: #{tpu_custom_call.1} parent=0
    _
  %s8 = ssub.s32 1, %s6
  %s9 = scalar_select 0, %s8, %s6
  $region1: #{tpu_custom_call.1} parent=0
    #allocation4 [shape = 'u8[262144]{0}', space=vmem, size = 0x40000, scoped, tag = 'output window, operand 0']
    #allocation5 [shape = 's32[2]{0}', space=sflag, size = 0x8, scoped, tag = 'scoped memory for tpu_custom_call.1']
    %10 = vsyncpa [#allocation5], 0
    %s11 = scalar_lea.sflag [#allocation5], 1
    %12 = vsyncpa %s11, 0
    loop: start=0, step=1, limit=4
    $region2: #{tpu_custom_call.1} parent=1 // loop_pre_header
      _
    $region3: #{tpu_custom_call.1} parent=1 // loop_header
      %s14 = sphi 0, %s18
      %p15 = scmp.ge.s32.totalorder %s14, 4
      %s24 = sphi 0, %s26
      %s27 = sphi 0, %s24
      %s28 = sphi 0, %s27
      %s44 = sphi 0, %s28
      %s48 = sphi 0, %s48
      %s50 = sphi 0, %s48
      %s51 = sphi 0, %s50
      %s65 = sphi 0, %s51
      %s69 = sphi 0, %s69
      %s71 = sphi 0, %s69
      %s72 = sphi 0, %s71
      %s86 = sphi 0, %s72
      %s90 = sphi 0, %s90
      %s92 = sphi 0, %s90
      %s93 = sphi 0, %s92
      %s107 = sphi 0, %s93
      %s111 = sphi 0, %s111
      %s113 = sphi 0, %s111
      %s114 = sphi 0, %s113
      %s128 = sphi 0, %s114
      %s134 = sphi 0, %s136
      %s137 = sphi 0, %s134
      %s138 = sphi 0, %s137
      %s154 = sphi 0, %s138
    $region4: #{tpu_custom_call.1} parent=1 // loop_header_branch
      %17 = sbr.rel (%p15) target = $region8
    $region5: #{tpu_custom_call.1} parent=1 // loop_body
      %s19 = ssub.s32 %s14, 1
      %s20 = ssub.s32 %s14, 2
      %s21 = sadd.s32 %s14, 1
      %s22 = ssub.s32 %s14, %s21
      %p23 = scmp.eq.s32.totalorder %s22, 0
      %s25 = sadd.s32 %s24, 1
      %s26 = scalar_select %p23, %s24, %s25
      %p29 = pneg %p23
      %p30 = scmp.eq.s32.totalorder %s14, 1
      %p31 = por %p29, %p30
      %p32 = scmp.ne.s32.totalorder %s24, %s27
      %p33 = scmp.eq.s32.totalorder %s14, 0
      %p34 = por %p32, %p33
      %p35 = scmp.ne.s32.totalorder %s24, %s27
      %p36 = scmp.eq.s32.totalorder %s19, 1
      %p37 = por %p35, %p36
      %p38 = scmp.ne.s32.totalorder %s27, %s28
      %p39 = scmp.eq.s32.totalorder %s19, 0
      %p40 = por %p38, %p39
      %p41 = scmp.ne.s32.totalorder %s27, %s28
      %p42 = scmp.eq.s32.totalorder %s20, 1
      %p43 = por %p41, %p42
      %p45 = scmp.ne.s32.totalorder %s28, %s44
      %p46 = scmp.eq.s32.totalorder %s20, 0
      %p47 = por %p45, %p46
      %s49 = sadd.s32 %s48, 1
      %p52 = scmp.eq.s32.totalorder %s14, 1
      %p53 = scmp.ne.s32.totalorder %s48, %s50
      %p54 = scmp.eq.s32.totalorder %s14, 0
      %p55 = por %p53, %p54
      %p56 = scmp.ne.s32.totalorder %s48, %s50
      %p57 = scmp.eq.s32.totalorder %s19, 1
      %p58 = por %p56, %p57
      %p59 = scmp.ne.s32.totalorder %s50, %s51
      %p60 = scmp.eq.s32.totalorder %s19, 0
      %p61 = por %p59, %p60
      %p62 = scmp.ne.s32.totalorder %s50, %s51
      %p63 = scmp.eq.s32.totalorder %s20, 1
      %p64 = por %p62, %p63
      %p66 = scmp.ne.s32.totalorder %s51, %s65
      %p67 = scmp.eq.s32.totalorder %s20, 0
      %p68 = por %p66, %p67
      %s70 = sadd.s32 %s69, 1
      %p73 = scmp.eq.s32.totalorder %s14, 1
      %p74 = scmp.ne.s32.totalorder %s69, %s71
      %p75 = scmp.eq.s32.totalorder %s14, 0
      %p76 = por %p74, %p75
      %p77 = scmp.ne.s32.totalorder %s69, %s71
      %p78 = scmp.eq.s32.totalorder %s19, 1
      %p79 = por %p77, %p78
      %p80 = scmp.ne.s32.totalorder %s71, %s72
      %p81 = scmp.eq.s32.totalorder %s19, 0
      %p82 = por %p80, %p81
      %p83 = scmp.ne.s32.totalorder %s71, %s72
      %p84 = scmp.eq.s32.totalorder %s20, 1
      %p85 = por %p83, %p84
      %p87 = scmp.ne.s32.totalorder %s72, %s86
      %p88 = scmp.eq.s32.totalorder %s20, 0
      %p89 = por %p87, %p88
      %s91 = sadd.s32 %s90, 1
      %p94 = scmp.eq.s32.totalorder %s14, 1
      %p95 = scmp.ne.s32.totalorder %s90, %s92
      %p96 = scmp.eq.s32.totalorder %s14, 0
      %p97 = por %p95, %p96
      %p98 = scmp.ne.s32.totalorder %s90, %s92
      %p99 = scmp.eq.s32.totalorder %s19, 1
      %p100 = por %p98, %p99
      %p101 = scmp.ne.s32.totalorder %s92, %s93
      %p102 = scmp.eq.s32.totalorder %s19, 0
      %p103 = por %p101, %p102
      %p104 = scmp.ne.s32.totalorder %s92, %s93
      %p105 = scmp.eq.s32.totalorder %s20, 1
      %p106 = por %p104, %p105
      %p108 = scmp.ne.s32.totalorder %s93, %s107
      %p109 = scmp.eq.s32.totalorder %s20, 0
      %p110 = por %p108, %p109
      %s112 = sadd.s32 %s111, 1
      %p115 = scmp.eq.s32.totalorder %s14, 1
      %p116 = scmp.ne.s32.totalorder %s111, %s113
      %p117 = scmp.eq.s32.totalorder %s14, 0
      %p118 = por %p116, %p117
      %p119 = scmp.ne.s32.totalorder %s111, %s113
      %p120 = scmp.eq.s32.totalorder %s19, 1
      %p121 = por %p119, %p120
      %p122 = scmp.ne.s32.totalorder %s113, %s114
      %p123 = scmp.eq.s32.totalorder %s19, 0
      %p124 = por %p122, %p123
      %p125 = scmp.ne.s32.totalorder %s113, %s114
      %p126 = scmp.eq.s32.totalorder %s20, 1
      %p127 = por %p125, %p126
      %p129 = scmp.ne.s32.totalorder %s114, %s128
      %p130 = scmp.eq.s32.totalorder %s20, 0
      %p131 = por %p129, %p130
      %s132 = ssub.s32 %s14, %s21
      %p133 = scmp.eq.s32.totalorder %s132, 0
      %s135 = sadd.s32 %s134, 1
      %s136 = scalar_select %p133, %s134, %s135
      %p139 = pneg %p133
      %p140 = scmp.eq.s32.totalorder %s14, 1
      %p141 = por %p139, %p140
      %p142 = scmp.ne.s32.totalorder %s134, %s137
      %p143 = scmp.eq.s32.totalorder %s14, 0
      %p144 = por %p142, %p143
      %p145 = scmp.ne.s32.totalorder %s134, %s137
      %p146 = scmp.eq.s32.totalorder %s19, 1
      %p147 = por %p145, %p146
      %p148 = scmp.ne.s32.totalorder %s137, %s138
      %p149 = scmp.eq.s32.totalorder %s19, 0
      %p150 = por %p148, %p149
      %p151 = scmp.ne.s32.totalorder %s137, %s138
      %p152 = scmp.eq.s32.totalorder %s20, 1
      %p153 = por %p151, %p152
      %p155 = scmp.ne.s32.totalorder %s138, %s154
      %p156 = scmp.eq.s32.totalorder %s20, 0
      %p157 = por %p155, %p156
      %p158 = scmp.le.s32.totalorder 1, %s14
      %p159 = scmp.lt.s32.totalorder %s14, 3
      %p160 = pnand %p158, %p159
      %p161 = pneg %p160
      // Predicated region
      $region9: #{tpu_custom_call.1} parent=5 // pred_check
        _
      $region10: #{tpu_custom_call.1} parent=5 // pred_check_branch
        %163 = sbr.rel (%p160) target = $region12
      $region11: #{tpu_custom_call.1} parent=5 // pred_region
        %s164 = ssub.s32 %s14, 1
        // Predicated region
        $region13: #{tpu_custom_call.1} parent=11 // pred_check
          %p165 = pneg %p61
        $region14: #{tpu_custom_call.1} parent=11 // pred_check_branch
          %167 = sbr.rel (%p165) target = $region16
        $region15: #{tpu_custom_call.1} parent=11 // pred_region
          _
        $region16: #{tpu_custom_call.1} parent=11 // pred_fallthru
          _
        // Predicated region
        $region17: #{tpu_custom_call.1} parent=11 // pred_check
          %p168 = pneg %p82
        $region18: #{tpu_custom_call.1} parent=11 // pred_check_branch
          %170 = sbr.rel (%p168) target = $region20
        $region19: #{tpu_custom_call.1} parent=11 // pred_region
          _
        $region20: #{tpu_custom_call.1} parent=11 // pred_fallthru
          _
        // Predicated region
        $region21: #{tpu_custom_call.1} parent=11 // pred_check
          %p171 = pneg %p103
        $region22: #{tpu_custom_call.1} parent=11 // pred_check_branch
          %173 = sbr.rel (%p171) target = $region24
        $region23: #{tpu_custom_call.1} parent=11 // pred_region
          _
        $region24: #{tpu_custom_call.1} parent=11 // pred_fallthru
          _
        // Predicated region
        $region25: #{tpu_custom_call.1} parent=11 // pred_check
          %p174 = pneg %p124
        $region26: #{tpu_custom_call.1} parent=11 // pred_check_branch
          %176 = sbr.rel (%p174) target = $region28
        $region27: #{tpu_custom_call.1} parent=11 // pred_region
          _
        $region28: #{tpu_custom_call.1} parent=11 // pred_fallthru
          _
      $region12: #{tpu_custom_call.1} parent=5 // pred_fallthru
        _
      %p177 = scmp.lt.s32.totalorder %s14, 2
      // Predicated region
      $region29: #{tpu_custom_call.1} parent=5 // pred_check
        %p178 = pneg %p177
      $region30: #{tpu_custom_call.1} parent=5 // pred_check_branch
        %180 = sbr.rel (%p178) target = $region32
      $region31: #{tpu_custom_call.1} parent=5 // pred_region
        // Predicated region
        $region33: #{tpu_custom_call.1} parent=31 // pred_check
          %p181 = pneg %p34
        $region34: #{tpu_custom_call.1} parent=31 // pred_check_branch
          %183 = sbr.rel (%p181) target = $region36
        $region35: #{tpu_custom_call.1} parent=31 // pred_region
          %p184 = scmp.lt.s32.totalorder %s14, 1
          %s185 = scalar_select %p184, %s14, 1
          %s186 = smul.addr %s185, 32
          %s187 = smul.addr %s186, 8
          %s188 = scalar_lea.vmem %s0, %s187
        $region36: #{tpu_custom_call.1} parent=31 // pred_fallthru
          _
      $region32: #{tpu_custom_call.1} parent=5 // pred_fallthru
        _
      %p189 = scmp.le.s32.totalorder 1, %s14
      %p190 = scmp.lt.s32.totalorder %s14, 3
      %p191 = pnand %p189, %p190
      %p192 = pneg %p191
      // Predicated region
      $region37: #{tpu_custom_call.1} parent=5 // pred_check
        _
      $region38: #{tpu_custom_call.1} parent=5 // pred_check_branch
        %194 = sbr.rel (%p191) target = $region40
      $region39: #{tpu_custom_call.1} parent=5 // pred_region
        %s195 = ssub.s32 %s14, 1
        %p196 = scmp.lt.s32.totalorder %s19, 1
        %s197 = scalar_select %p196, %s19, 1
        %s198 = smul.addr %s197, 32
        %s199 = smul.addr %s198, 8
        %s200 = scalar_lea.vmem %s0, %s199
        %p201 = pneg %p40
        %p202 = pneg %p37
        %p203 = pneg %p61
        %p204 = pneg %p58
        %p205 = pneg %p82
        %p206 = pneg %p79
        %p207 = pneg %p103
        %p208 = pneg %p100
        %p209 = pneg %p124
        %p210 = pneg %p121
        %p211 = pneg %p150
        %p212 = pneg %p147
        %s213 = sand.u32 %s137, 1
        %s214 = scalar_lea.sflag [#allocation5], %s213
        %s215 = sand.u32 %s137, 1
        %s216 = smul.addr %s215, 256
        %s217 = scalar_lea.vmem [#allocation4], %s216
        %p218 = scmp.lt.s32.totalorder %s19, 1
        %s219 = scalar_select %p218, %s19, 1
        %s220 = smul.addr %s219, 32
        %s221 = smul.addr %s220, 8
        %s222 = scalar_lea.vmem %s0, %s221
        %vm224 = vcmask 519168
        %225 = vst.msk [vmem:[#allocation2] sm:$0xf] %vm224, 0
        %226 = vst.msk [vmem:[#allocation2 + $0x4] sm:$0xf] %vm224, 0
        %227 = vst.msk [vmem:[#allocation2 + $0x8] sm:$0xf] %vm224, 0
        %228 = vst.msk [vmem:[#allocation2 + $0xc] sm:$0xf] %vm224, 0
        %229 = vst.msk [vmem:[#allocation2 + $0x10] sm:$0xf] %vm224, 0
        %230 = vst.msk [vmem:[#allocation2 + $0x14] sm:$0xf] %vm224, 0
        %231 = vst.msk [vmem:[#allocation2 + $0x118] sm:$0xf] %vm224, 0
        %232 = vst.msk [vmem:[#allocation2 + $0x11c] sm:$0xf] %vm224, 0
        %233 = vst.msk [vmem:[#allocation2 + $0x120] sm:$0xf] %vm224, 0
        %234 = vst.msk [vmem:[#allocation2 + $0x124] sm:$0xf] %vm224, 0
        %235 = vst.msk [vmem:[#allocation2 + $0x128] sm:$0xf] %vm224, 0
        %236 = vst.msk [vmem:[#allocation2 + $0x12c] sm:$0xf] %vm224, 0
        %237 = vst.msk [vmem:[#allocation3] sm:$0xf] %vm224, 0
        %238 = vst.msk [vmem:[#allocation3 + $0x4] sm:$0xf] %vm224, 0
        %239 = vst.msk [vmem:[#allocation3 + $0x8] sm:$0xf] %vm224, 0
        %240 = vst.msk [vmem:[#allocation3 + $0xc] sm:$0xf] %vm224, 0
        %241 = vst.msk [vmem:[#allocation3 + $0x10] sm:$0xf] %vm224, 0
        %242 = vst.msk [vmem:[#allocation3 + $0x14] sm:$0xf] %vm224, 0
        %243 = vst.msk [vmem:[#allocation3 + $0x118] sm:$0xf] %vm224, 0
        %244 = vst.msk [vmem:[#allocation3 + $0x11c] sm:$0xf] %vm224, 0
        %245 = vst.msk [vmem:[#allocation3 + $0x120] sm:$0xf] %vm224, 0
        %246 = vst.msk [vmem:[#allocation3 + $0x124] sm:$0xf] %vm224, 0
        %247 = vst.msk [vmem:[#allocation3 + $0x128] sm:$0xf] %vm224, 0
        %248 = vst.msk [vmem:[#allocation3 + $0x12c] sm:$0xf] %vm224, 0
        %v249 = vlaneseq
        %v250 = vshrl.u32 %v249, 7
        %v251 = vadd.s32 %v250, 8
        %v252 = vadd.s32 %v250, 16
        %v253 = vadd.s32 %v250, 24
        %vm254 = vcmp.lt.s32.totalorder %v250, 16
        %vm255 = vcmp.lt.s32.totalorder %v251, 16
        %vm256 = vcmp.lt.s32.totalorder %v252, 16
        %vm257 = vcmp.lt.s32.totalorder %v253, 16
        %v258 = vld [vmem:[%s222] sm:$0xff]
        %v259 = vld [vmem:[%s222 + $0x8] sm:$0xff]
        %v260 = vld [vmem:[%s222 + $0x10] sm:$0xff]
        %v261 = vld [vmem:[%s222 + $0x18] sm:$0xff]
        %v262 = vld [vmem:[%s222 + $0x20] sm:$0xff]
        %v263 = vld [vmem:[%s222 + $0x28] sm:$0xff]
        %v264 = vld [vmem:[%s222 + $0x30] sm:$0xff]
        %v265 = vld [vmem:[%s222 + $0x38] sm:$0xff]
        %v266 = vld [vmem:[%s222 + $0x40] sm:$0xff]
        %v267 = vld [vmem:[%s222 + $0x48] sm:$0xff]
        %v268 = vld [vmem:[%s222 + $0x50] sm:$0xff]
        %v269 = vld [vmem:[%s222 + $0x58] sm:$0xff]
        %v270 = vld [vmem:[%s222 + $0x60] sm:$0xff]
        %v271 = vld [vmem:[%s222 + $0x68] sm:$0xff]
        %v272 = vld [vmem:[%s222 + $0x70] sm:$0xff]
        %v273 = vld [vmem:[%s222 + $0x78] sm:$0xff]
        %v274 = vld [vmem:[%s222 + $0x80] sm:$0xff]
        %v275 = vld [vmem:[%s222 + $0x88] sm:$0xff]
        %v276 = vld [vmem:[%s222 + $0x90] sm:$0xff]
        %v277 = vld [vmem:[%s222 + $0x98] sm:$0xff]
        %v278 = vld [vmem:[%s222 + $0xa0] sm:$0xff]
        %v279 = vld [vmem:[%s222 + $0xa8] sm:$0xff]
        %v280 = vld [vmem:[%s222 + $0xb0] sm:$0xff]
        %v281 = vld [vmem:[%s222 + $0xb8] sm:$0xff]
        %v282 = vld [vmem:[%s222 + $0xc0] sm:$0xff]
        %v283 = vld [vmem:[%s222 + $0xc8] sm:$0xff]
        %v284 = vld [vmem:[%s222 + $0xd0] sm:$0xff]
        %v285 = vld [vmem:[%s222 + $0xd8] sm:$0xff]
        %v286 = vld [vmem:[%s222 + $0xe0] sm:$0xff]
        %v287 = vld [vmem:[%s222 + $0xe8] sm:$0xff]
        %v288 = vld [vmem:[%s222 + $0xf0] sm:$0xff]
        %v289 = vld [vmem:[%s222 + $0xf8] sm:$0xff]
        %v290 = vpack.c.bf16 %v258, %v258
        %v291 = vpack.c.bf16 %v259, %v259
        %v292 = vpack.c.bf16 %v260, %v260
        %v293 = vpack.c.bf16 %v261, %v261
        %v294 = vpack.c.bf16 %v262, %v262
        %v295 = vpack.c.bf16 %v263, %v263
        %v296 = vpack.c.bf16 %v264, %v264
        %v297 = vpack.c.bf16 %v265, %v265
        %v298 = vpack.c.bf16 %v266, %v266
        %v299 = vpack.c.bf16 %v267, %v267
        %v300 = vpack.c.bf16 %v268, %v268
        %v301 = vpack.c.bf16 %v269, %v269
        %v302 = vpack.c.bf16 %v270, %v270
        %v303 = vpack.c.bf16 %v271, %v271
        %v304 = vpack.c.bf16 %v272, %v272
        %v305 = vpack.c.bf16 %v273, %v273
        %v306 = vpack.c.bf16 %v274, %v274
        %v307 = vpack.c.bf16 %v275, %v275
        %v308 = vpack.c.bf16 %v276, %v276
        %v309 = vpack.c.bf16 %v277, %v277
        %v310 = vpack.c.bf16 %v278, %v278
        %v311 = vpack.c.bf16 %v279, %v279
        %v312 = vpack.c.bf16 %v280, %v280
        %v313 = vpack.c.bf16 %v281, %v281
        %v314 = vpack.c.bf16 %v282, %v282
        %v315 = vpack.c.bf16 %v283, %v283
        %v316 = vpack.c.bf16 %v284, %v284
        %v317 = vpack.c.bf16 %v285, %v285
        %v318 = vpack.c.bf16 %v286, %v286
        %v319 = vpack.c.bf16 %v287, %v287
        %v320 = vpack.c.bf16 %v288, %v288
        %v321 = vpack.c.bf16 %v289, %v289
        %v354 = vunpack.c.l.b16 %v290
        %v355 = vunpack.c.l.b16 %v291
        %v356 = vunpack.c.l.b16 %v292
        %v357 = vunpack.c.l.b16 %v293
        %v358 = vunpack.c.l.b16 %v294
        %v359 = vunpack.c.l.b16 %v295
        %v360 = vunpack.c.l.b16 %v296
        %v361 = vunpack.c.l.b16 %v297
        %v362 = vunpack.c.l.b16 %v298
        %v363 = vunpack.c.l.b16 %v299
        %v364 = vunpack.c.l.b16 %v300
        %v365 = vunpack.c.l.b16 %v301
        %v366 = vunpack.c.l.b16 %v302
        %v367 = vunpack.c.l.b16 %v303
        %v368 = vunpack.c.l.b16 %v304
        %v369 = vunpack.c.l.b16 %v305
        %v370 = vunpack.c.l.b16 %v306
        %v371 = vunpack.c.l.b16 %v307
        %v372 = vunpack.c.l.b16 %v308
        %v373 = vunpack.c.l.b16 %v309
        %v374 = vunpack.c.l.b16 %v310
        %v375 = vunpack.c.l.b16 %v311
        %v376 = vunpack.c.l.b16 %v312
        %v377 = vunpack.c.l.b16 %v313
        %v378 = vunpack.c.l.b16 %v314
        %v379 = vunpack.c.l.b16 %v315
        %v380 = vunpack.c.l.b16 %v316
        %v381 = vunpack.c.l.b16 %v317
        %v382 = vunpack.c.l.b16 %v318
        %v383 = vunpack.c.l.b16 %v319
        %v384 = vunpack.c.l.b16 %v320
        %v385 = vunpack.c.l.b16 %v321
        %v387 = vunpack.c.l.b16 0
        %v388 = vunpack.c.h.b16 0
        %v389 = vpack.c.b16 %v354, %v354
        %v390 = vpack.c.b16 %v355, %v355
        %v391 = vpack.c.b16 %v387, %v387
        %v392 = vpack.c.b16 %v388, %v388
        %v393 = vpack.c.b16 %v356, %v356
        %v394 = vpack.c.b16 %v357, %v357
        %v395 = vpack.c.b16 %v358, %v358
        %v396 = vpack.c.b16 %v359, %v359
        %v397 = vpack.c.b16 %v360, %v360
        %v398 = vpack.c.b16 %v361, %v361
        %v399 = vpack.c.b16 %v362, %v362
        %v400 = vpack.c.b16 %v363, %v363
        %v401 = vpack.c.b16 %v364, %v364
        %v402 = vpack.c.b16 %v365, %v365
        %v403 = vpack.c.b16 %v366, %v366
        %v404 = vpack.c.b16 %v367, %v367
        %v405 = vpack.c.b16 %v368, %v368
        %v406 = vpack.c.b16 %v369, %v369
        %v407 = vpack.c.b16 %v370, %v370
        %v408 = vpack.c.b16 %v371, %v371
        %v409 = vpack.c.b16 %v372, %v372
        %v410 = vpack.c.b16 %v373, %v373
        %v411 = vpack.c.b16 %v374, %v374
        %v412 = vpack.c.b16 %v375, %v375
        %v413 = vpack.c.b16 %v376, %v376
        %v414 = vpack.c.b16 %v377, %v377
        %v415 = vpack.c.b16 %v378, %v378
        %v416 = vpack.c.b16 %v379, %v379
        %v417 = vpack.c.b16 %v380, %v380
        %v418 = vpack.c.b16 %v381, %v381
        %v419 = vpack.c.b16 %v382, %v382
        %v420 = vpack.c.b16 %v383, %v383
        %v421 = vpack.c.b16 %v384, %v384
        %v422 = vpack.c.b16 %v385, %v385
        %457 = vst.msk [vmem:[#allocation2 + $0x18] sm:$0xf] %vm224, %v389
        %458 = vst.msk [vmem:[#allocation2 + $0x1c] sm:$0xf] %vm224, %v390
        %459 = vst.msk [vmem:[#allocation2 + $0x20] sm:$0xf] %vm224, %v391
        %460 = vst.msk [vmem:[#allocation2 + $0x24] sm:$0xf] %vm224, %v392
        %461 = vst.msk [vmem:[#allocation2 + $0x28] sm:$0xf] %vm224, %v393
        %462 = vst.msk [vmem:[#allocation2 + $0x2c] sm:$0xf] %vm224, %v394
        %463 = vst.msk [vmem:[#allocation2 + $0x30] sm:$0xf] %vm224, %v391
        %464 = vst.msk [vmem:[#allocation2 + $0x34] sm:$0xf] %vm224, %v392
        %465 = vst.msk [vmem:[#allocation2 + $0x38] sm:$0xf] %vm224, %v395
        %466 = vst.msk [vmem:[#allocation2 + $0x3c] sm:$0xf] %vm224, %v396
        %467 = vst.msk [vmem:[#allocation2 + $0x40] sm:$0xf] %vm224, %v391
        %468 = vst.msk [vmem:[#allocation2 + $0x44] sm:$0xf] %vm224, %v392
        %469 = vst.msk [vmem:[#allocation2 + $0x48] sm:$0xf] %vm224, %v397
        %470 = vst.msk [vmem:[#allocation2 + $0x4c] sm:$0xf] %vm224, %v398
        %471 = vst.msk [vmem:[#allocation2 + $0x50] sm:$0xf] %vm224, %v391
        %472 = vst.msk [vmem:[#allocation2 + $0x54] sm:$0xf] %vm224, %v392
        %473 = vst.msk [vmem:[#allocation2 + $0x58] sm:$0xf] %vm224, %v399
        %474 = vst.msk [vmem:[#allocation2 + $0x5c] sm:$0xf] %vm224, %v400
        %475 = vst.msk [vmem:[#allocation2 + $0x60] sm:$0xf] %vm224, %v391
        %476 = vst.msk [vmem:[#allocation2 + $0x64] sm:$0xf] %vm224, %v392
        %477 = vst.msk [vmem:[#allocation2 + $0x68] sm:$0xf] %vm224, %v401
        %478 = vst.msk [vmem:[#allocation2 + $0x6c] sm:$0xf] %vm224, %v402
        %479 = vst.msk [vmem:[#allocation2 + $0x70] sm:$0xf] %vm224, %v391
        %480 = vst.msk [vmem:[#allocation2 + $0x74] sm:$0xf] %vm224, %v392
        %481 = vst.msk [vmem:[#allocation2 + $0x78] sm:$0xf] %vm224, %v403
        %482 = vst.msk [vmem:[#allocation2 + $0x7c] sm:$0xf] %vm224, %v404
        %483 = vst.msk [vmem:[#allocation2 + $0x80] sm:$0xf] %vm224, %v391
        %484 = vst.msk [vmem:[#allocation2 + $0x84] sm:$0xf] %vm224, %v392
        %485 = vst.msk [vmem:[#allocation2 + $0x88] sm:$0xf] %vm224, %v405
        %486 = vst.msk [vmem:[#allocation2 + $0x8c] sm:$0xf] %vm224, %v406
        %487 = vst.msk [vmem:[#allocation2 + $0x90] sm:$0xf] %vm224, %v391
        %488 = vst.msk [vmem:[#allocation2 + $0x94] sm:$0xf] %vm224, %v392
        %489 = vst.msk [vmem:[#allocation2 + $0x98] sm:$0xf] %vm224, %v407
        %490 = vst.msk [vmem:[#allocation2 + $0x9c] sm:$0xf] %vm224, %v408
        %491 = vst.msk [vmem:[#allocation2 + $0xa0] sm:$0xf] %vm224, %v391
        %492 = vst.msk [vmem:[#allocation2 + $0xa4] sm:$0xf] %vm224, %v392
        %493 = vst.msk [vmem:[#allocation2 + $0xa8] sm:$0xf] %vm224, %v409
        %494 = vst.msk [vmem:[#allocation2 + $0xac] sm:$0xf] %vm224, %v410
        %495 = vst.msk [vmem:[#allocation2 + $0xb0] sm:$0xf] %vm224, %v391
        %496 = vst.msk [vmem:[#allocation2 + $0xb4] sm:$0xf] %vm224, %v392
        %497 = vst.msk [vmem:[#allocation2 + $0xb8] sm:$0xf] %vm224, %v411
        %498 = vst.msk [vmem:[#allocation2 + $0xbc] sm:$0xf] %vm224, %v412
        %499 = vst.msk [vmem:[#allocation2 + $0xc0] sm:$0xf] %vm224, %v391
        %500 = vst.msk [vmem:[#allocation2 + $0xc4] sm:$0xf] %vm224, %v392
        %501 = vst.msk [vmem:[#allocation2 + $0xc8] sm:$0xf] %vm224, %v413
        %502 = vst.msk [vmem:[#allocation2 + $0xcc] sm:$0xf] %vm224, %v414
        %503 = vst.msk [vmem:[#allocation2 + $0xd0] sm:$0xf] %vm224, %v391
        %504 = vst.msk [vmem:[#allocation2 + $0xd4] sm:$0xf] %vm224, %v392
        %505 = vst.msk [vmem:[#allocation2 + $0xd8] sm:$0xf] %vm224, %v415
        %506 = vst.msk [vmem:[#allocation2 + $0xdc] sm:$0xf] %vm224, %v416
        %507 = vst.msk [vmem:[#allocation2 + $0xe0] sm:$0xf] %vm224, %v391
        %508 = vst.msk [vmem:[#allocation2 + $0xe4] sm:$0xf] %vm224, %v392
        %509 = vst.msk [vmem:[#allocation2 + $0xe8] sm:$0xf] %vm224, %v417
        %510 = vst.msk [vmem:[#allocation2 + $0xec] sm:$0xf] %vm224, %v418
        %511 = vst.msk [vmem:[#allocation2 + $0xf0] sm:$0xf] %vm224, %v391
        %512 = vst.msk [vmem:[#allocation2 + $0xf4] sm:$0xf] %vm224, %v392
        %513 = vst.msk [vmem:[#allocation2 + $0xf8] sm:$0xf] %vm224, %v419
        %514 = vst.msk [vmem:[#allocation2 + $0xfc] sm:$0xf] %vm224, %v420
        %515 = vst.msk [vmem:[#allocation2 + $0x100] sm:$0xf] %vm224, %v391
        %516 = vst.msk [vmem:[#allocation2 + $0x104] sm:$0xf] %vm224, %v392
        %517 = vst.msk [vmem:[#allocation2 + $0x108] sm:$0xf] %vm224, %v421
        %518 = vst.msk [vmem:[#allocation2 + $0x10c] sm:$0xf] %vm224, %v422
        %519 = vst.msk [vmem:[#allocation2 + $0x110] sm:$0xf] %vm224, %v391
        %520 = vst.msk [vmem:[#allocation2 + $0x114] sm:$0xf] %vm224, %v392
        %v521 = vld [vmem:[#allocation2 + $0x4] sm:$0x8]
        %v522 = vld [vmem:[#allocation2 + $0x8] sm:$0xf]
        %v523 = vld [vmem:[#allocation2 + $0xc] sm:$0xf]
        %v524 = vld [vmem:[#allocation2 + $0x10] sm:$0xf]
        %v525 = vld [vmem:[#allocation2 + $0x14] sm:$0xf]
        %v526 = vld [vmem:[#allocation2 + $0x18] sm:$0xf]
        %v527 = vld [vmem:[#allocation2 + $0x1c] sm:$0xf]
        %v528 = vld [vmem:[#allocation2 + $0x20] sm:$0xf]
        %v529 = vld [vmem:[#allocation2 + $0x24] sm:$0xf]
        %v530 = vld [vmem:[#allocation2 + $0x28] sm:$0xf]
        %v531 = vld [vmem:[#allocation2 + $0x2c] sm:$0xf]
        %v532 = vld [vmem:[#allocation2 + $0x30] sm:$0xf]
        %v533 = vld [vmem:[#allocation2 + $0x34] sm:$0xf]
        %v534 = vld [vmem:[#allocation2 + $0x38] sm:$0xf]
        %v535 = vld [vmem:[#allocation2 + $0x3c] sm:$0xf]
        %v536 = vld [vmem:[#allocation2 + $0x40] sm:$0xf]
        %v537 = vld [vmem:[#allocation2 + $0x44] sm:$0xf]
        %v538 = vld [vmem:[#allocation2 + $0x48] sm:$0xf]
        %v539 = vld [vmem:[#allocation2 + $0x4c] sm:$0xf]
        %v540 = vld [vmem:[#allocation2 + $0x50] sm:$0xf]
        %v541 = vld [vmem:[#allocation2 + $0x54] sm:$0xf]
        %v542 = vld [vmem:[#allocation2 + $0x58] sm:$0xf]
        %v543 = vld [vmem:[#allocation2 + $0x5c] sm:$0xf]
        %v544 = vld [vmem:[#allocation2 + $0x60] sm:$0xf]
        %v545 = vld [vmem:[#allocation2 + $0x64] sm:$0xf]
        %v546 = vld [vmem:[#allocation2 + $0x68] sm:$0xf]
        %v547 = vld [vmem:[#allocation2 + $0x6c] sm:$0xf]
        %v548 = vld [vmem:[#allocation2 + $0x70] sm:$0xf]
        %v549 = vld [vmem:[#allocation2 + $0x74] sm:$0xf]
        %v550 = vld [vmem:[#allocation2 + $0x78] sm:$0xf]
        %v551 = vld [vmem:[#allocation2 + $0x7c] sm:$0xf]
        %v552 = vld [vmem:[#allocation2 + $0x80] sm:$0xf]
        %v553 = vld [vmem:[#allocation2 + $0x84] sm:$0xf]
        %v554 = vld [vmem:[#allocation2 + $0x88] sm:$0xf]
        %v555 = vld [vmem:[#allocation2 + $0x8c] sm:$0xf]
        %v556 = vld [vmem:[#allocation2 + $0x90] sm:$0xf]
        %v557 = vld [vmem:[#allocation2 + $0x94] sm:$0xf]
        %v558 = vld [vmem:[#allocation2 + $0x98] sm:$0xf]
        %v559 = vld [vmem:[#allocation2 + $0x9c] sm:$0xf]
        %v560 = vld [vmem:[#allocation2 + $0xa0] sm:$0xf]
        %v561 = vld [vmem:[#allocation2 + $0xa4] sm:$0xf]
        %v562 = vld [vmem:[#allocation2 + $0xa8] sm:$0xf]
        %v563 = vld [vmem:[#allocation2 + $0xac] sm:$0xf]
        %v564 = vld [vmem:[#allocation2 + $0xb0] sm:$0xf]
        %v565 = vld [vmem:[#allocation2 + $0xb4] sm:$0xf]
        %v566 = vld [vmem:[#allocation2 + $0xb8] sm:$0xf]
        %v567 = vld [vmem:[#allocation2 + $0xbc] sm:$0xf]
        %v568 = vld [vmem:[#allocation2 + $0xc0] sm:$0xf]
        %v569 = vld [vmem:[#allocation2 + $0xc4] sm:$0xf]
        %v570 = vld [vmem:[#allocation2 + $0xc8] sm:$0xf]
        %v571 = vld [vmem:[#allocation2 + $0xcc] sm:$0xf]
        %v572 = vld [vmem:[#allocation2 + $0xd0] sm:$0xf]
        %v573 = vld [vmem:[#allocation2 + $0xd4] sm:$0xf]
        %v574 = vld [vmem:[#allocation2 + $0xd8] sm:$0xf]
        %v575 = vld [vmem:[#allocation2 + $0xdc] sm:$0xf]
        %v576 = vld [vmem:[#allocation2 + $0xe0] sm:$0xf]
        %v577 = vld [vmem:[#allocation2 + $0xe4] sm:$0xf]
        %v578 = vld [vmem:[#allocation2 + $0xe8] sm:$0xf]
        %v579 = vld [vmem:[#allocation2 + $0xec] sm:$0xf]
        %v580 = vld [vmem:[#allocation2 + $0xf0] sm:$0xf]
        %v581 = vld [vmem:[#allocation2 + $0xf4] sm:$0xf]
        %v582 = vld [vmem:[#allocation2 + $0xf8] sm:$0xf]
        %v583 = vld [vmem:[#allocation2 + $0xfc] sm:$0xf]
        %v584 = vld [vmem:[#allocation2 + $0x100] sm:$0xf]
        %v585 = vld [vmem:[#allocation2 + $0x104] sm:$0xf]
        %v586 = vld [vmem:[#allocation2 + $0x108] sm:$0x1]
        %v587 = vld [vmem:[#allocation2 + $0x14] sm:$0x8]
        %v588 = vld [vmem:[#allocation2 + $0x108] sm:$0xf]
        %v589 = vld [vmem:[#allocation2 + $0x10c] sm:$0xf]
        %v590 = vld [vmem:[#allocation2 + $0x110] sm:$0xf]
        %v591 = vld [vmem:[#allocation2 + $0x114] sm:$0xf]
        %v592 = vld [vmem:[#allocation2 + $0x118] sm:$0x1]
        %v593 = vld [vmem:[#allocation2 + $0x24] sm:$0x8]
        %v594 = vld [vmem:[#allocation2 + $0x118] sm:$0xf]
        %v595 = vld [vmem:[#allocation2 + $0x11c] sm:$0xf]
        %v596 = vld [vmem:[#allocation2 + $0x120] sm:$0xf]
        %v597 = vld [vmem:[#allocation2 + $0x124] sm:$0xf]
        %v598 = vld [vmem:[#allocation2 + $0x128] sm:$0x1]
        %v664 = vunpack.c.l.b16 %v521
        %v665 = vunpack.c.l.b16 %v522
        %v666 = vunpack.c.l.b16 %v523
        %v667 = vunpack.c.l.b16 %v524
        %v668 = vunpack.c.l.b16 %v525
        %v669 = vunpack.c.l.b16 %v526
        %v670 = vunpack.c.l.b16 %v527
        %v671 = vunpack.c.l.b16 %v528
        %v672 = vunpack.c.l.b16 %v529
        %v673 = vunpack.c.l.b16 %v530
        %v674 = vunpack.c.l.b16 %v531
        %v675 = vunpack.c.l.b16 %v532
        %v676 = vunpack.c.l.b16 %v533
        %v677 = vunpack.c.l.b16 %v534
        %v678 = vunpack.c.l.b16 %v535
        %v679 = vunpack.c.l.b16 %v536
        %v680 = vunpack.c.l.b16 %v537
        %v681 = vunpack.c.l.b16 %v538
        %v682 = vunpack.c.l.b16 %v539
        %v683 = vunpack.c.l.b16 %v540
        %v684 = vunpack.c.l.b16 %v541
        %v685 = vunpack.c.l.b16 %v542
        %v686 = vunpack.c.l.b16 %v543
        %v687 = vunpack.c.l.b16 %v544
        %v688 = vunpack.c.l.b16 %v545
        %v689 = vunpack.c.l.b16 %v546
        %v690 = vunpack.c.l.b16 %v547
        %v691 = vunpack.c.l.b16 %v548
        %v692 = vunpack.c.l.b16 %v549
        %v693 = vunpack.c.l.b16 %v550
        %v694 = vunpack.c.l.b16 %v551
        %v695 = vunpack.c.l.b16 %v552
        %v696 = vunpack.c.l.b16 %v553
        %v697 = vunpack.c.l.b16 %v554
        %v698 = vunpack.c.l.b16 %v555
        %v699 = vunpack.c.l.b16 %v556
        %v700 = vunpack.c.l.b16 %v557
        %v701 = vunpack.c.l.b16 %v558
        %v702 = vunpack.c.l.b16 %v559
        %v703 = vunpack.c.l.b16 %v560
        %v704 = vunpack.c.l.b16 %v561
        %v705 = vunpack.c.l.b16 %v562
        %v706 = vunpack.c.l.b16 %v563
        %v707 = vunpack.c.l.b16 %v564
        %v708 = vunpack.c.l.b16 %v565
        %v709 = vunpack.c.l.b16 %v566
        %v710 = vunpack.c.l.b16 %v567
        %v711 = vunpack.c.l.b16 %v568
        %v712 = vunpack.c.l.b16 %v569
        %v713 = vunpack.c.l.b16 %v570
        %v714 = vunpack.c.l.b16 %v571
        %v715 = vunpack.c.l.b16 %v572
        %v716 = vunpack.c.l.b16 %v573
        %v717 = vunpack.c.l.b16 %v574
        %v718 = vunpack.c.l.b16 %v575
        %v719 = vunpack.c.l.b16 %v576
        %v720 = vunpack.c.l.b16 %v577
        %v721 = vunpack.c.l.b16 %v578
        %v722 = vunpack.c.l.b16 %v579
        %v723 = vunpack.c.l.b16 %v580
        %v724 = vunpack.c.l.b16 %v581
        %v725 = vunpack.c.l.b16 %v582
        %v726 = vunpack.c.l.b16 %v583
        %v727 = vunpack.c.l.b16 %v584
        %v728 = vunpack.c.l.b16 %v585
        %v729 = vpack.c.b16 %v665, %v664
        %v730 = vpack.c.b16 %v667, %v666
        %v731 = vpack.c.b16 %v669, %v668
        %v732 = vpack.c.b16 %v671, %v670
        %v733 = vpack.c.b16 %v673, %v672
        %v734 = vpack.c.b16 %v675, %v674
        %v735 = vpack.c.b16 %v677, %v676
        %v736 = vpack.c.b16 %v679, %v678
        %v737 = vpack.c.b16 %v681, %v680
        %v738 = vpack.c.b16 %v683, %v682
        %v739 = vpack.c.b16 %v685, %v684
        %v740 = vpack.c.b16 %v687, %v686
        %v741 = vpack.c.b16 %v689, %v688
        %v742 = vpack.c.b16 %v691, %v690
        %v743 = vpack.c.b16 %v693, %v692
        %v744 = vpack.c.b16 %v695, %v694
        %v745 = vpack.c.b16 %v697, %v696
        %v746 = vpack.c.b16 %v699, %v698
        %v747 = vpack.c.b16 %v701, %v700
        %v748 = vpack.c.b16 %v703, %v702
        %v749 = vpack.c.b16 %v705, %v704
        %v750 = vpack.c.b16 %v707, %v706
        %v751 = vpack.c.b16 %v709, %v708
        %v752 = vpack.c.b16 %v711, %v710
        %v753 = vpack.c.b16 %v713, %v712
        %v754 = vpack.c.b16 %v715, %v714
        %v755 = vpack.c.b16 %v717, %v716
        %v756 = vpack.c.b16 %v719, %v718
        %v757 = vpack.c.b16 %v721, %v720
        %v758 = vpack.c.b16 %v723, %v722
        %v759 = vpack.c.b16 %v725, %v724
        %v760 = vpack.c.b16 %v727, %v726
        %v761 = vpack.c.b16 %v728, %v728
        %v762 = vpack.c.b16 %v666, %v665
        %v763 = vpack.c.b16 %v668, %v667
        %v764 = vpack.c.b16 %v670, %v669
        %v765 = vpack.c.b16 %v672, %v671
        %v766 = vpack.c.b16 %v674, %v673
        %v767 = vpack.c.b16 %v676, %v675
        %v768 = vpack.c.b16 %v678, %v677
        %v769 = vpack.c.b16 %v680, %v679
        %v770 = vpack.c.b16 %v682, %v681
        %v771 = vpack.c.b16 %v684, %v683
        %v772 = vpack.c.b16 %v686, %v685
        %v773 = vpack.c.b16 %v688, %v687
        %v774 = vpack.c.b16 %v690, %v689
        %v775 = vpack.c.b16 %v692, %v691
        %v776 = vpack.c.b16 %v694, %v693
        %v777 = vpack.c.b16 %v696, %v695
        %v778 = vpack.c.b16 %v698, %v697
        %v779 = vpack.c.b16 %v700, %v699
        %v780 = vpack.c.b16 %v702, %v701
        %v781 = vpack.c.b16 %v704, %v703
        %v782 = vpack.c.b16 %v706, %v705
        %v783 = vpack.c.b16 %v708, %v707
        %v784 = vpack.c.b16 %v710, %v709
        %v785 = vpack.c.b16 %v712, %v711
        %v786 = vpack.c.b16 %v714, %v713
        %v787 = vpack.c.b16 %v716, %v715
        %v788 = vpack.c.b16 %v718, %v717
        %v789 = vpack.c.b16 %v720, %v719
        %v790 = vpack.c.b16 %v722, %v721
        %v791 = vpack.c.b16 %v724, %v723
        %v792 = vpack.c.b16 %v726, %v725
        %v793 = vpack.c.b16 %v728, %v727
        %vm794 = vsmask.f32 3328
        %v796 = vshrl.u32 %v762, 16
        %v798 = vrot.slane %v796, 4
        %v799 = vshll.u32 %v762, 16
        %v801 = vrot.slane %v799, 5
        %v802 = vor.u32 %v798, %v801
        %v804 = vshrl.u32 %v763, 16
        %v806 = vrot.slane %v804, 4
        %v807 = vshll.u32 %v763, 16
        %v809 = vrot.slane %v807, 5
        %v810 = vor.u32 %v806, %v809
        %v811 = vsel %vm794, %v802, %v810
        %v813 = vshrl.u32 %v764, 16
        %v815 = vrot.slane %v813, 4
        %v816 = vshll.u32 %v764, 16
        %v818 = vrot.slane %v816, 5
        %v819 = vor.u32 %v815, %v818
        %v820 = vsel %vm794, %v810, %v819
        %v822 = vshrl.u32 %v765, 16
        %v824 = vrot.slane %v822, 4
        %v825 = vshll.u32 %v765, 16
        %v827 = vrot.slane %v825, 5
        %v828 = vor.u32 %v824, %v827
        %v829 = vsel %vm794, %v819, %v828
        %v831 = vshrl.u32 %v766, 16
        %v833 = vrot.slane %v831, 4
        %v834 = vshll.u32 %v766, 16
        %v836 = vrot.slane %v834, 5
        %v837 = vor.u32 %v833, %v836
        %v838 = vsel %vm794, %v828, %v837
        %v840 = vshrl.u32 %v767, 16
        %v842 = vrot.slane %v840, 4
        %v843 = vshll.u32 %v767, 16
        %v845 = vrot.slane %v843, 5
        %v846 = vor.u32 %v842, %v845
        %v847 = vsel %vm794, %v837, %v846
        %v849 = vshrl.u32 %v768, 16
        %v851 = vrot.slane %v849, 4
        %v852 = vshll.u32 %v768, 16
        %v854 = vrot.slane %v852, 5
        %v855 = vor.u32 %v851, %v854
        %v856 = vsel %vm794, %v846, %v855
        %v858 = vshrl.u32 %v769, 16
        %v860 = vrot.slane %v858, 4
        %v861 = vshll.u32 %v769, 16
        %v863 = vrot.slane %v861, 5
        %v864 = vor.u32 %v860, %v863
        %v865 = vsel %vm794, %v855, %v864
        %v867 = vshrl.u32 %v770, 16
        %v869 = vrot.slane %v867, 4
        %v870 = vshll.u32 %v770, 16
        %v872 = vrot.slane %v870, 5
        %v873 = vor.u32 %v869, %v872
        %v874 = vsel %vm794, %v864, %v873
        %v876 = vshrl.u32 %v771, 16
        %v878 = vrot.slane %v876, 4
        %v879 = vshll.u32 %v771, 16
        %v881 = vrot.slane %v879, 5
        %v882 = vor.u32 %v878, %v881
        %v883 = vsel %vm794, %v873, %v882
        %v885 = vshrl.u32 %v772, 16
        %v887 = vrot.slane %v885, 4
        %v888 = vshll.u32 %v772, 16
        %v890 = vrot.slane %v888, 5
        %v891 = vor.u32 %v887, %v890
        %v892 = vsel %vm794, %v882, %v891
        %v894 = vshrl.u32 %v773, 16
        %v896 = vrot.slane %v894, 4
        %v897 = vshll.u32 %v773, 16
        %v899 = vrot.slane %v897, 5
        %v900 = vor.u32 %v896, %v899
        %v901 = vsel %vm794, %v891, %v900
        %v903 = vshrl.u32 %v774, 16
        %v905 = vrot.slane %v903, 4
        %v906 = vshll.u32 %v774, 16
        %v908 = vrot.slane %v906, 5
        %v909 = vor.u32 %v905, %v908
        %v910 = vsel %vm794, %v900, %v909
        %v912 = vshrl.u32 %v775, 16
        %v914 = vrot.slane %v912, 4
        %v915 = vshll.u32 %v775, 16
        %v917 = vrot.slane %v915, 5
        %v918 = vor.u32 %v914, %v917
        %v919 = vsel %vm794, %v909, %v918
        %v921 = vshrl.u32 %v776, 16
        %v923 = vrot.slane %v921, 4
        %v924 = vshll.u32 %v776, 16
        %v926 = vrot.slane %v924, 5
        %v927 = vor.u32 %v923, %v926
        %v928 = vsel %vm794, %v918, %v927
        %v930 = vshrl.u32 %v777, 16
        %v932 = vrot.slane %v930, 4
        %v933 = vshll.u32 %v777, 16
        %v935 = vrot.slane %v933, 5
        %v936 = vor.u32 %v932, %v935
        %v937 = vsel %vm794, %v927, %v936
        %v939 = vshrl.u32 %v778, 16
        %v941 = vrot.slane %v939, 4
        %v942 = vshll.u32 %v778, 16
        %v944 = vrot.slane %v942, 5
        %v945 = vor.u32 %v941, %v944
        %v946 = vsel %vm794, %v936, %v945
        %v948 = vshrl.u32 %v779, 16
        %v950 = vrot.slane %v948, 4
        %v951 = vshll.u32 %v779, 16
        %v953 = vrot.slane %v951, 5
        %v954 = vor.u32 %v950, %v953
        %v955 = vsel %vm794, %v945, %v954
        %v957 = vshrl.u32 %v780, 16
        %v959 = vrot.slane %v957, 4
        %v960 = vshll.u32 %v780, 16
        %v962 = vrot.slane %v960, 5
        %v963 = vor.u32 %v959, %v962
        %v964 = vsel %vm794, %v954, %v963
        %v966 = vshrl.u32 %v781, 16
        %v968 = vrot.slane %v966, 4
        %v969 = vshll.u32 %v781, 16
        %v971 = vrot.slane %v969, 5
        %v972 = vor.u32 %v968, %v971
        %v973 = vsel %vm794, %v963, %v972
        %v975 = vshrl.u32 %v782, 16
        %v977 = vrot.slane %v975, 4
        %v978 = vshll.u32 %v782, 16
        %v980 = vrot.slane %v978, 5
        %v981 = vor.u32 %v977, %v980
        %v982 = vsel %vm794, %v972, %v981
        %v984 = vshrl.u32 %v783, 16
        %v986 = vrot.slane %v984, 4
        %v987 = vshll.u32 %v783, 16
        %v989 = vrot.slane %v987, 5
        %v990 = vor.u32 %v986, %v989
        %v991 = vsel %vm794, %v981, %v990
        %v993 = vshrl.u32 %v784, 16
        %v995 = vrot.slane %v993, 4
        %v996 = vshll.u32 %v784, 16
        %v998 = vrot.slane %v996, 5
        %v999 = vor.u32 %v995, %v998
        %v1000 = vsel %vm794, %v990, %v999
        %v1002 = vshrl.u32 %v785, 16
        %v1004 = vrot.slane %v1002, 4
        %v1005 = vshll.u32 %v785, 16
        %v1007 = vrot.slane %v1005, 5
        %v1008 = vor.u32 %v1004, %v1007
        %v1009 = vsel %vm794, %v999, %v1008
        %v1011 = vshrl.u32 %v786, 16
        %v1013 = vrot.slane %v1011, 4
        %v1014 = vshll.u32 %v786, 16
        %v1016 = vrot.slane %v1014, 5
        %v1017 = vor.u32 %v1013, %v1016
        %v1018 = vsel %vm794, %v1008, %v1017
        %v1020 = vshrl.u32 %v787, 16
        %v1022 = vrot.slane %v1020, 4
        %v1023 = vshll.u32 %v787, 16
        %v1025 = vrot.slane %v1023, 5
        %v1026 = vor.u32 %v1022, %v1025
        %v1027 = vsel %vm794, %v1017, %v1026
        %v1029 = vshrl.u32 %v788, 16
        %v1031 = vrot.slane %v1029, 4
        %v1032 = vshll.u32 %v788, 16
        %v1034 = vrot.slane %v1032, 5
        %v1035 = vor.u32 %v1031, %v1034
        %v1036 = vsel %vm794, %v1026, %v1035
        %v1038 = vshrl.u32 %v789, 16
        %v1040 = vrot.slane %v1038, 4
        %v1041 = vshll.u32 %v789, 16
        %v1043 = vrot.slane %v1041, 5
        %v1044 = vor.u32 %v1040, %v1043
        %v1045 = vsel %vm794, %v1035, %v1044
        %v1047 = vshrl.u32 %v790, 16
        %v1049 = vrot.slane %v1047, 4
        %v1050 = vshll.u32 %v790, 16
        %v1052 = vrot.slane %v1050, 5
        %v1053 = vor.u32 %v1049, %v1052
        %v1054 = vsel %vm794, %v1044, %v1053
        %v1056 = vshrl.u32 %v791, 16
        %v1058 = vrot.slane %v1056, 4
        %v1059 = vshll.u32 %v791, 16
        %v1061 = vrot.slane %v1059, 5
        %v1062 = vor.u32 %v1058, %v1061
        %v1063 = vsel %vm794, %v1053, %v1062
        %v1065 = vshrl.u32 %v792, 16
        %v1067 = vrot.slane %v1065, 4
        %v1068 = vshll.u32 %v792, 16
        %v1070 = vrot.slane %v1068, 5
        %v1071 = vor.u32 %v1067, %v1070
        %v1072 = vsel %vm794, %v1062, %v1071
        %v1074 = vshrl.u32 %v793, 16
        %v1076 = vrot.slane %v1074, 4
        %v1077 = vshll.u32 %v793, 16
        %v1079 = vrot.slane %v1077, 5
        %v1080 = vor.u32 %v1076, %v1079
        %v1081 = vsel %vm794, %v1071, %v1080
        %1082 = vrot.lane.b32.xlu0 %v802, 64
        %v1083 = vpop.permute.xlu0 %1082
        %1084 = vrot.lane.b32.xlu0 %v811, 64
        %v1085 = vpop.permute.xlu0 %1084
        %1086 = vrot.lane.b32.xlu0 %v820, 64
        %v1087 = vpop.permute.xlu0 %1086
        %1088 = vrot.lane.b32.xlu0 %v829, 64
        %v1089 = vpop.permute.xlu0 %1088
        %1090 = vrot.lane.b32.xlu0 %v838, 64
        %v1091 = vpop.permute.xlu0 %1090
        %1092 = vrot.lane.b32.xlu0 %v847, 64
        %v1093 = vpop.permute.xlu0 %1092
        %1094 = vrot.lane.b32.xlu0 %v856, 64
        %v1095 = vpop.permute.xlu0 %1094
        %1096 = vrot.lane.b32.xlu0 %v865, 64
        %v1097 = vpop.permute.xlu0 %1096
        %1098 = vrot.lane.b32.xlu0 %v874, 64
        %v1099 = vpop.permute.xlu0 %1098
        %1100 = vrot.lane.b32.xlu0 %v883, 64
        %v1101 = vpop.permute.xlu0 %1100
        %1102 = vrot.lane.b32.xlu0 %v892, 64
        %v1103 = vpop.permute.xlu0 %1102
        %1104 = vrot.lane.b32.xlu0 %v901, 64
        %v1105 = vpop.permute.xlu0 %1104
        %1106 = vrot.lane.b32.xlu0 %v910, 64
        %v1107 = vpop.permute.xlu0 %1106
        %1108 = vrot.lane.b32.xlu0 %v919, 64
        %v1109 = vpop.permute.xlu0 %1108
        %1110 = vrot.lane.b32.xlu0 %v928, 64
        %v1111 = vpop.permute.xlu0 %1110
        %1112 = vrot.lane.b32.xlu0 %v937, 64
        %v1113 = vpop.permute.xlu0 %1112
        %1114 = vrot.lane.b32.xlu0 %v946, 64
        %v1115 = vpop.permute.xlu0 %1114
        %1116 = vrot.lane.b32.xlu0 %v955, 64
        %v1117 = vpop.permute.xlu0 %1116
        %1118 = vrot.lane.b32.xlu0 %v964, 64
        %v1119 = vpop.permute.xlu0 %1118
        %1120 = vrot.lane.b32.xlu0 %v973, 64
        %v1121 = vpop.permute.xlu0 %1120
        %1122 = vrot.lane.b32.xlu0 %v982, 64
        %v1123 = vpop.permute.xlu0 %1122
        %1124 = vrot.lane.b32.xlu0 %v991, 64
        %v1125 = vpop.permute.xlu0 %1124
        %1126 = vrot.lane.b32.xlu0 %v1000, 64
        %v1127 = vpop.permute.xlu0 %1126
        %1128 = vrot.lane.b32.xlu0 %v1009, 64
        %v1129 = vpop.permute.xlu0 %1128
        %1130 = vrot.lane.b32.xlu0 %v1018, 64
        %v1131 = vpop.permute.xlu0 %1130
        %1132 = vrot.lane.b32.xlu0 %v1027, 64
        %v1133 = vpop.permute.xlu0 %1132
        %1134 = vrot.lane.b32.xlu0 %v1036, 64
        %v1135 = vpop.permute.xlu0 %1134
        %1136 = vrot.lane.b32.xlu0 %v1045, 64
        %v1137 = vpop.permute.xlu0 %1136
        %1138 = vrot.lane.b32.xlu0 %v1054, 64
        %v1139 = vpop.permute.xlu0 %1138
        %1140 = vrot.lane.b32.xlu0 %v1063, 64
        %v1141 = vpop.permute.xlu0 %1140
        %1142 = vrot.lane.b32.xlu0 %v1072, 64
        %v1143 = vpop.permute.xlu0 %1142
        %1144 = vrot.lane.b32.xlu0 %v1081, 64
        %v1145 = vpop.permute.xlu0 %1144
        %1146 = vrot.lane.b32.xlu0 %v1080, 64
        %v1147 = vpop.permute.xlu0 %1146
        %v1149 = vunpack.c.l.b16 %v586
        %v1150 = vpack.c.b16 %v1149, %v1149
        %vm1151 = vcmask 1042432
        %v1152 = vrot.slane %v762, 5
        %v1153 = vrot.slane %v763, 5
        %v1154 = vsel %vm1151, %v1152, %v1153
        %v1155 = vrot.slane %v764, 5
        %v1156 = vsel %vm1151, %v1153, %v1155
        %v1157 = vrot.slane %v765, 5
        %v1158 = vsel %vm1151, %v1155, %v1157
        %v1159 = vrot.slane %v766, 5
        %v1160 = vsel %vm1151, %v1157, %v1159
        %v1161 = vrot.slane %v767, 5
        %v1162 = vsel %vm1151, %v1159, %v1161
        %v1163 = vrot.slane %v768, 5
        %v1164 = vsel %vm1151, %v1161, %v1163
        %v1165 = vrot.slane %v769, 5
        %v1166 = vsel %vm1151, %v1163, %v1165
        %v1167 = vrot.slane %v770, 5
        %v1168 = vsel %vm1151, %v1165, %v1167
        %v1169 = vrot.slane %v771, 5
        %v1170 = vsel %vm1151, %v1167, %v1169
        %v1171 = vrot.slane %v772, 5
        %v1172 = vsel %vm1151, %v1169, %v1171
        %v1173 = vrot.slane %v773, 5
        %v1174 = vsel %vm1151, %v1171, %v1173
        %v1175 = vrot.slane %v774, 5
        %v1176 = vsel %vm1151, %v1173, %v1175
        %v1177 = vrot.slane %v775, 5
        %v1178 = vsel %vm1151, %v1175, %v1177
        %v1179 = vrot.slane %v776, 5
        %v1180 = vsel %vm1151, %v1177, %v1179
        %v1181 = vrot.slane %v777, 5
        %v1182 = vsel %vm1151, %v1179, %v1181
        %v1183 = vrot.slane %v778, 5
        %v1184 = vsel %vm1151, %v1181, %v1183
        %v1185 = vrot.slane %v779, 5
        %v1186 = vsel %vm1151, %v1183, %v1185
        %v1187 = vrot.slane %v780, 5
        %v1188 = vsel %vm1151, %v1185, %v1187
        %v1189 = vrot.slane %v781, 5
        %v1190 = vsel %vm1151, %v1187, %v1189
        %v1191 = vrot.slane %v782, 5
        %v1192 = vsel %vm1151, %v1189, %v1191
        %v1193 = vrot.slane %v783, 5
        %v1194 = vsel %vm1151, %v1191, %v1193
        %v1195 = vrot.slane %v784, 5
        %v1196 = vsel %vm1151, %v1193, %v1195
        %v1197 = vrot.slane %v785, 5
        %v1198 = vsel %vm1151, %v1195, %v1197
        %v1199 = vrot.slane %v786, 5
        %v1200 = vsel %vm1151, %v1197, %v1199
        %v1201 = vrot.slane %v787, 5
        %v1202 = vsel %vm1151, %v1199, %v1201
        %v1203 = vrot.slane %v788, 5
        %v1204 = vsel %vm1151, %v1201, %v1203
        %v1205 = vrot.slane %v789, 5
        %v1206 = vsel %vm1151, %v1203, %v1205
        %v1207 = vrot.slane %v790, 5
        %v1208 = vsel %vm1151, %v1205, %v1207
        %v1209 = vrot.slane %v791, 5
        %v1210 = vsel %vm1151, %v1207, %v1209
        %v1211 = vrot.slane %v792, 5
        %v1212 = vsel %vm1151, %v1209, %v1211
        %v1213 = vrot.slane %v793, 5
        %v1214 = vsel %vm1151, %v1211, %v1213
        %v1215 = vrot.slane %v1150, 5
        %v1216 = vsel %vm1151, %v1213, %v1215
        %v1222 = vunpack.c.l.b16 %v587
        %v1223 = vunpack.c.l.b16 %v588
        %v1224 = vunpack.c.l.b16 %v589
        %v1225 = vunpack.c.l.b16 %v590
        %v1226 = vunpack.c.l.b16 %v591
        %v1227 = vpack.c.b16 %v669, %v1222
        %v1228 = vpack.c.b16 %v1223, %v728
        %v1229 = vpack.c.b16 %v1225, %v1224
        %v1230 = vpack.c.b16 %v1226, %v1226
        %1231 = vrot.lane.b32.xlu0 %v1227, 64
        %v1232 = vpop.permute.xlu0 %1231
        %1233 = vrot.lane.b32.xlu0 %v732, 64
        %v1234 = vpop.permute.xlu0 %1233
        %1235 = vrot.lane.b32.xlu0 %v733, 64
        %v1236 = vpop.permute.xlu0 %1235
        %1237 = vrot.lane.b32.xlu0 %v734, 64
        %v1238 = vpop.permute.xlu0 %1237
        %1239 = vrot.lane.b32.xlu0 %v735, 64
        %v1240 = vpop.permute.xlu0 %1239
        %1241 = vrot.lane.b32.xlu0 %v736, 64
        %v1242 = vpop.permute.xlu0 %1241
        %1243 = vrot.lane.b32.xlu0 %v737, 64
        %v1244 = vpop.permute.xlu0 %1243
        %1245 = vrot.lane.b32.xlu0 %v738, 64
        %v1246 = vpop.permute.xlu0 %1245
        %1247 = vrot.lane.b32.xlu0 %v739, 64
        %v1248 = vpop.permute.xlu0 %1247
        %1249 = vrot.lane.b32.xlu0 %v740, 64
        %v1250 = vpop.permute.xlu0 %1249
        %1251 = vrot.lane.b32.xlu0 %v741, 64
        %v1252 = vpop.permute.xlu0 %1251
        %1253 = vrot.lane.b32.xlu0 %v742, 64
        %v1254 = vpop.permute.xlu0 %1253
        %1255 = vrot.lane.b32.xlu0 %v743, 64
        %v1256 = vpop.permute.xlu0 %1255
        %1257 = vrot.lane.b32.xlu0 %v744, 64
        %v1258 = vpop.permute.xlu0 %1257
        %1259 = vrot.lane.b32.xlu0 %v745, 64
        %v1260 = vpop.permute.xlu0 %1259
        %1261 = vrot.lane.b32.xlu0 %v746, 64
        %v1262 = vpop.permute.xlu0 %1261
        %1263 = vrot.lane.b32.xlu0 %v747, 64
        %v1264 = vpop.permute.xlu0 %1263
        %1265 = vrot.lane.b32.xlu0 %v748, 64
        %v1266 = vpop.permute.xlu0 %1265
        %1267 = vrot.lane.b32.xlu0 %v749, 64
        %v1268 = vpop.permute.xlu0 %1267
        %1269 = vrot.lane.b32.xlu0 %v750, 64
        %v1270 = vpop.permute.xlu0 %1269
        %1271 = vrot.lane.b32.xlu0 %v751, 64
        %v1272 = vpop.permute.xlu0 %1271
        %1273 = vrot.lane.b32.xlu0 %v752, 64
        %v1274 = vpop.permute.xlu0 %1273
        %1275 = vrot.lane.b32.xlu0 %v753, 64
        %v1276 = vpop.permute.xlu0 %1275
        %1277 = vrot.lane.b32.xlu0 %v754, 64
        %v1278 = vpop.permute.xlu0 %1277
        %1279 = vrot.lane.b32.xlu0 %v755, 64
        %v1280 = vpop.permute.xlu0 %1279
        %1281 = vrot.lane.b32.xlu0 %v756, 64
        %v1282 = vpop.permute.xlu0 %1281
        %1283 = vrot.lane.b32.xlu0 %v757, 64
        %v1284 = vpop.permute.xlu0 %1283
        %1285 = vrot.lane.b32.xlu0 %v758, 64
        %v1286 = vpop.permute.xlu0 %1285
        %1287 = vrot.lane.b32.xlu0 %v759, 64
        %v1288 = vpop.permute.xlu0 %1287
        %1289 = vrot.lane.b32.xlu0 %v760, 64
        %v1290 = vpop.permute.xlu0 %1289
        %1291 = vrot.lane.b32.xlu0 %v1228, 64
        %v1292 = vpop.permute.xlu0 %1291
        %1293 = vrot.lane.b32.xlu0 %v1229, 64
        %v1294 = vpop.permute.xlu0 %1293
        %1295 = vrot.lane.b32.xlu0 %v1230, 64
        %v1296 = vpop.permute.xlu0 %1295
        %v1297 = vpack.c.b16 %v1224, %v1223
        %v1298 = vpack.c.b16 %v1226, %v1225
        %v1300 = vshrl.u32 %v1297, 16
        %v1302 = vrot.slane %v1300, 4
        %v1303 = vshll.u32 %v1297, 16
        %v1305 = vrot.slane %v1303, 5
        %v1306 = vor.u32 %v1302, %v1305
        %v1307 = vsel %vm794, %v1080, %v1306
        %v1309 = vshrl.u32 %v1298, 16
        %v1311 = vrot.slane %v1309, 4
        %v1312 = vshll.u32 %v1298, 16
        %v1314 = vrot.slane %v1312, 5
        %v1315 = vor.u32 %v1311, %v1314
        %v1316 = vsel %vm794, %v1306, %v1315
        %v1318 = vunpack.c.l.b16 %v592
        %v1319 = vpack.c.b16 %v1318, %v1318
        %v1320 = vrot.slane %v1297, 5
        %v1321 = vsel %vm1151, %v1213, %v1320
        %v1322 = vrot.slane %v1298, 5
        %v1323 = vsel %vm1151, %v1320, %v1322
        %v1324 = vrot.slane %v1319, 5
        %v1325 = vsel %vm1151, %v1322, %v1324
        %1326 = vrot.lane.b32.xlu0 %v1155, 64
        %v1327 = vpop.permute.xlu0 %1326
        %1328 = vrot.lane.b32.xlu0 %v1158, 64
        %v1329 = vpop.permute.xlu0 %1328
        %1330 = vrot.lane.b32.xlu0 %v1160, 64
        %v1331 = vpop.permute.xlu0 %1330
        %1332 = vrot.lane.b32.xlu0 %v1162, 64
        %v1333 = vpop.permute.xlu0 %1332
        %1334 = vrot.lane.b32.xlu0 %v1164, 64
        %v1335 = vpop.permute.xlu0 %1334
        %1336 = vrot.lane.b32.xlu0 %v1166, 64
        %v1337 = vpop.permute.xlu0 %1336
        %1338 = vrot.lane.b32.xlu0 %v1168, 64
        %v1339 = vpop.permute.xlu0 %1338
        %1340 = vrot.lane.b32.xlu0 %v1170, 64
        %v1341 = vpop.permute.xlu0 %1340
        %1342 = vrot.lane.b32.xlu0 %v1172, 64
        %v1343 = vpop.permute.xlu0 %1342
        %1344 = vrot.lane.b32.xlu0 %v1174, 64
        %v1345 = vpop.permute.xlu0 %1344
        %1346 = vrot.lane.b32.xlu0 %v1176, 64
        %v1347 = vpop.permute.xlu0 %1346
        %1348 = vrot.lane.b32.xlu0 %v1178, 64
        %v1349 = vpop.permute.xlu0 %1348
        %1350 = vrot.lane.b32.xlu0 %v1180, 64
        %v1351 = vpop.permute.xlu0 %1350
        %1352 = vrot.lane.b32.xlu0 %v1182, 64
        %v1353 = vpop.permute.xlu0 %1352
        %1354 = vrot.lane.b32.xlu0 %v1184, 64
        %v1355 = vpop.permute.xlu0 %1354
        %1356 = vrot.lane.b32.xlu0 %v1186, 64
        %v1357 = vpop.permute.xlu0 %1356
        %1358 = vrot.lane.b32.xlu0 %v1188, 64
        %v1359 = vpop.permute.xlu0 %1358
        %1360 = vrot.lane.b32.xlu0 %v1190, 64
        %v1361 = vpop.permute.xlu0 %1360
        %1362 = vrot.lane.b32.xlu0 %v1192, 64
        %v1363 = vpop.permute.xlu0 %1362
        %1364 = vrot.lane.b32.xlu0 %v1194, 64
        %v1365 = vpop.permute.xlu0 %1364
        %1366 = vrot.lane.b32.xlu0 %v1196, 64
        %v1367 = vpop.permute.xlu0 %1366
        %1368 = vrot.lane.b32.xlu0 %v1198, 64
        %v1369 = vpop.permute.xlu0 %1368
        %1370 = vrot.lane.b32.xlu0 %v1200, 64
        %v1371 = vpop.permute.xlu0 %1370
        %1372 = vrot.lane.b32.xlu0 %v1202, 64
        %v1373 = vpop.permute.xlu0 %1372
        %1374 = vrot.lane.b32.xlu0 %v1204, 64
        %v1375 = vpop.permute.xlu0 %1374
        %1376 = vrot.lane.b32.xlu0 %v1206, 64
        %v1377 = vpop.permute.xlu0 %1376
        %1378 = vrot.lane.b32.xlu0 %v1208, 64
        %v1379 = vpop.permute.xlu0 %1378
        %1380 = vrot.lane.b32.xlu0 %v1210, 64
        %v1381 = vpop.permute.xlu0 %1380
        %1382 = vrot.lane.b32.xlu0 %v1212, 64
        %v1383 = vpop.permute.xlu0 %1382
        %1384 = vrot.lane.b32.xlu0 %v1214, 64
        %v1385 = vpop.permute.xlu0 %1384
        %1386 = vrot.lane.b32.xlu0 %v1321, 64
        %v1387 = vpop.permute.xlu0 %1386
        %1388 = vrot.lane.b32.xlu0 %v1323, 64
        %v1389 = vpop.permute.xlu0 %1388
        %1390 = vrot.lane.b32.xlu0 %v1325, 64
        %v1391 = vpop.permute.xlu0 %1390
        %v1397 = vunpack.c.l.b16 %v593
        %v1398 = vunpack.c.l.b16 %v594
        %v1399 = vunpack.c.l.b16 %v595
        %v1400 = vunpack.c.l.b16 %v596
        %v1401 = vunpack.c.l.b16 %v597
        %v1402 = vpack.c.b16 %v673, %v1397
        %v1403 = vpack.c.b16 %v1398, %v1226
        %v1404 = vpack.c.b16 %v1400, %v1399
        %v1405 = vpack.c.b16 %v1401, %v1401
        %v1406 = vpack.c.b16 %v1399, %v1398
        %v1407 = vpack.c.b16 %v1401, %v1400
        %v1409 = vshrl.u32 %v1406, 16
        %v1411 = vrot.slane %v1409, 4
        %v1412 = vshll.u32 %v1406, 16
        %v1414 = vrot.slane %v1412, 5
        %v1415 = vor.u32 %v1411, %v1414
        %v1416 = vsel %vm794, %v1315, %v1415
        %v1418 = vshrl.u32 %v1407, 16
        %v1420 = vrot.slane %v1418, 4
        %v1421 = vshll.u32 %v1407, 16
        %v1423 = vrot.slane %v1421, 5
        %v1424 = vor.u32 %v1420, %v1423
        %v1425 = vsel %vm794, %v1415, %v1424
        %1426 = vrot.lane.b32.xlu0 %v837, 64
        %v1427 = vpop.permute.xlu0 %1426
        %1428 = vrot.lane.b32.xlu0 %v1307, 64
        %v1429 = vpop.permute.xlu0 %1428
        %1430 = vrot.lane.b32.xlu0 %v1316, 64
        %v1431 = vpop.permute.xlu0 %1430
        %1432 = vrot.lane.b32.xlu0 %v1416, 64
        %v1433 = vpop.permute.xlu0 %1432
        %1434 = vrot.lane.b32.xlu0 %v1425, 64
        %v1435 = vpop.permute.xlu0 %1434
        %1436 = vrot.lane.b32.xlu0 %v1424, 64
        %v1437 = vpop.permute.xlu0 %1436
        %v1439 = vunpack.c.l.b16 %v598
        %v1440 = vpack.c.b16 %v1439, %v1439
        %v1441 = vrot.slane %v1406, 5
        %v1442 = vsel %vm1151, %v1322, %v1441
        %v1443 = vrot.slane %v1407, 5
        %v1444 = vsel %vm1151, %v1441, %v1443
        %v1445 = vrot.slane %v1440, 5
        %v1446 = vsel %vm1151, %v1443, %v1445
        %vm1447 = vcmask 523264
        %v1450 = vsel %vm1447, %v729, %v1083
        %v1453 = vsel %vm1447, %v730, %v1085
        %v1456 = vsel %vm1447, %v731, %v1087
        %v1459 = vsel %vm1447, %v732, %v1089
        %v1462 = vsel %vm1447, %v733, %v1091
        %v1465 = vsel %vm1447, %v734, %v1093
        %v1468 = vsel %vm1447, %v735, %v1095
        %v1471 = vsel %vm1447, %v736, %v1097
        %v1474 = vsel %vm1447, %v737, %v1099
        %v1477 = vsel %vm1447, %v738, %v1101
        %v1480 = vsel %vm1447, %v739, %v1103
        %v1483 = vsel %vm1447, %v740, %v1105
        %v1486 = vsel %vm1447, %v741, %v1107
        %v1489 = vsel %vm1447, %v742, %v1109
        %v1492 = vsel %vm1447, %v743, %v1111
        %v1495 = vsel %vm1447, %v744, %v1113
        %v1498 = vsel %vm1447, %v745, %v1115
        %v1501 = vsel %vm1447, %v746, %v1117
        %v1504 = vsel %vm1447, %v747, %v1119
        %v1507 = vsel %vm1447, %v748, %v1121
        %v1510 = vsel %vm1447, %v749, %v1123
        %v1513 = vsel %vm1447, %v750, %v1125
        %v1516 = vsel %vm1447, %v751, %v1127
        %v1519 = vsel %vm1447, %v752, %v1129
        %v1522 = vsel %vm1447, %v753, %v1131
        %v1525 = vsel %vm1447, %v754, %v1133
        %v1528 = vsel %vm1447, %v755, %v1135
        %v1531 = vsel %vm1447, %v756, %v1137
        %v1534 = vsel %vm1447, %v757, %v1139
        %v1537 = vsel %vm1447, %v758, %v1141
        %v1540 = vsel %vm1447, %v759, %v1143
        %v1543 = vsel %vm1447, %v760, %v1145
        %v1546 = vsel %vm1447, %v761, %v1147
        %v1549 = vsel %vm1447, %v1152, %v1232
        %v1552 = vsel %vm1447, %v1154, %v1234
        %v1555 = vsel %vm1447, %v1156, %v1236
        %v1558 = vsel %vm1447, %v1158, %v1238
        %v1561 = vsel %vm1447, %v1160, %v1240
        %v1564 = vsel %vm1447, %v1162, %v1242
        %v1567 = vsel %vm1447, %v1164, %v1244
        %v1570 = vsel %vm1447, %v1166, %v1246
        %v1573 = vsel %vm1447, %v1168, %v1248
        %v1576 = vsel %vm1447, %v1170, %v1250
        %v1579 = vsel %vm1447, %v1172, %v1252
        %v1582 = vsel %vm1447, %v1174, %v1254
        %v1585 = vsel %vm1447, %v1176, %v1256
        %v1588 = vsel %vm1447, %v1178, %v1258
        %v1591 = vsel %vm1447, %v1180, %v1260
        %v1594 = vsel %vm1447, %v1182, %v1262
        %v1597 = vsel %vm1447, %v1184, %v1264
        %v1600 = vsel %vm1447, %v1186, %v1266
        %v1603 = vsel %vm1447, %v1188, %v1268
        %v1606 = vsel %vm1447, %v1190, %v1270
        %v1609 = vsel %vm1447, %v1192, %v1272
        %v1612 = vsel %vm1447, %v1194, %v1274
        %v1615 = vsel %vm1447, %v1196, %v1276
        %v1618 = vsel %vm1447, %v1198, %v1278
        %v1621 = vsel %vm1447, %v1200, %v1280
        %v1624 = vsel %vm1447, %v1202, %v1282
        %v1627 = vsel %vm1447, %v1204, %v1284
        %v1630 = vsel %vm1447, %v1206, %v1286
        %v1633 = vsel %vm1447, %v1208, %v1288
        %v1636 = vsel %vm1447, %v1210, %v1290
        %v1639 = vsel %vm1447, %v1212, %v1292
        %v1642 = vsel %vm1447, %v1214, %v1294
        %v1645 = vsel %vm1447, %v1216, %v1296
        %v1648 = vsel %vm1447, %v819, %v1327
        %v1651 = vsel %vm1447, %v829, %v1329
        %v1654 = vsel %vm1447, %v838, %v1331
        %v1657 = vsel %vm1447, %v847, %v1333
        %v1660 = vsel %vm1447, %v856, %v1335
        %v1663 = vsel %vm1447, %v865, %v1337
        %v1666 = vsel %vm1447, %v874, %v1339
        %v1669 = vsel %vm1447, %v883, %v1341
        %v1672 = vsel %vm1447, %v892, %v1343
        %v1675 = vsel %vm1447, %v901, %v1345
        %v1678 = vsel %vm1447, %v910, %v1347
        %v1681 = vsel %vm1447, %v919, %v1349
        %v1684 = vsel %vm1447, %v928, %v1351
        %v1687 = vsel %vm1447, %v937, %v1353
        %v1690 = vsel %vm1447, %v946, %v1355
        %v1693 = vsel %vm1447, %v955, %v1357
        %v1696 = vsel %vm1447, %v964, %v1359
        %v1699 = vsel %vm1447, %v973, %v1361
        %v1702 = vsel %vm1447, %v982, %v1363
        %v1705 = vsel %vm1447, %v991, %v1365
        %v1708 = vsel %vm1447, %v1000, %v1367
        %v1711 = vsel %vm1447, %v1009, %v1369
        %v1714 = vsel %vm1447, %v1018, %v1371
        %v1717 = vsel %vm1447, %v1027, %v1373
        %v1720 = vsel %vm1447, %v1036, %v1375
        %v1723 = vsel %vm1447, %v1045, %v1377
        %v1726 = vsel %vm1447, %v1054, %v1379
        %v1729 = vsel %vm1447, %v1063, %v1381
        %v1732 = vsel %vm1447, %v1072, %v1383
        %v1735 = vsel %vm1447, %v1081, %v1385
        %v1738 = vsel %vm1447, %v1307, %v1387
        %v1741 = vsel %vm1447, %v1316, %v1389
        %v1744 = vsel %vm1447, %v1315, %v1391
        %v1747 = vsel %vm1447, %v1402, %v1427
        %v1750 = vsel %vm1447, %v1228, %v1429
        %v1753 = vsel %vm1447, %v1229, %v1431
        %v1756 = vsel %vm1447, %v1403, %v1433
        %v1759 = vsel %vm1447, %v1404, %v1435
        %v1762 = vsel %vm1447, %v1405, %v1437
        %v1763 = vld [vmem:[%s1] sm:$0xf]
        %v1764 = vld [vmem:[%s1 + $0x4] sm:$0xf]
        %v1765 = vld [vmem:[%s1 + $0x8] sm:$0xf]
        %v1766 = vld [vmem:[%s1 + $0xc] sm:$0xf]
        %v1767 = vld [vmem:[%s1 + $0x10] sm:$0xf]
        %v1768 = vld [vmem:[%s1 + $0x14] sm:$0xf]
        %v1769 = vld [vmem:[%s1 + $0x18] sm:$0xf]
        %v1770 = vld [vmem:[%s1 + $0x1c] sm:$0xf]
        %v1771 = vld [vmem:[%s1 + $0x20] sm:$0xf]
        %v1772 = vld [vmem:[%s1 + $0x24] sm:$0xf]
        %v1773 = vld [vmem:[%s1 + $0x28] sm:$0xf]
        %v1774 = vld [vmem:[%s1 + $0x2c] sm:$0xf]
        %v1775 = vld [vmem:[%s1 + $0x30] sm:$0xf]
        %v1776 = vld [vmem:[%s1 + $0x34] sm:$0xf]
        %v1777 = vld [vmem:[%s1 + $0x38] sm:$0xf]
        %v1778 = vld [vmem:[%s1 + $0x3c] sm:$0xf]
        %v1779 = vld [vmem:[%s1 + $0x40] sm:$0xf]
        %v1780 = vld [vmem:[%s1 + $0x44] sm:$0xf]
        %v1781 = vld [vmem:[%s1 + $0x48] sm:$0xf]
        %v1782 = vld [vmem:[%s1 + $0x4c] sm:$0xf]
        %v1783 = vld [vmem:[%s1 + $0x50] sm:$0xf]
        %v1784 = vld [vmem:[%s1 + $0x54] sm:$0xf]
        %v1785 = vld [vmem:[%s1 + $0x58] sm:$0xf]
        %v1786 = vld [vmem:[%s1 + $0x5c] sm:$0xf]
        %v1787 = vld [vmem:[%s1 + $0x60] sm:$0xf]
        %v1788 = vld [vmem:[%s1 + $0x64] sm:$0xf]
        %v1789 = vld [vmem:[%s1 + $0x68] sm:$0xf]
        %v1790 = vld [vmem:[%s1 + $0x6c] sm:$0xf]
        %v1791 = vld [vmem:[%s1 + $0x70] sm:$0xf]
        %v1792 = vld [vmem:[%s1 + $0x74] sm:$0xf]
        %v1793 = vld [vmem:[%s1 + $0x78] sm:$0xf]
        %v1794 = vld [vmem:[%s1 + $0x7c] sm:$0xf]
        %v1795 = vld [vmem:[%s1 + $0x80] sm:$0xf]
        %v1796 = vld [vmem:[%s1 + $0x84] sm:$0xf]
        %v1797 = vld [vmem:[%s1 + $0x88] sm:$0xf]
        %v1798 = vld [vmem:[%s1 + $0x8c] sm:$0xf]
        %v1799 = vld [vmem:[%s1 + $0x90] sm:$0xf]
        %v1800 = vld [vmem:[%s1 + $0x94] sm:$0xf]
        %v1801 = vld [vmem:[%s1 + $0x98] sm:$0xf]
        %v1802 = vld [vmem:[%s1 + $0x9c] sm:$0xf]
        %v1803 = vld [vmem:[%s1 + $0xa0] sm:$0xf]
        %v1804 = vld [vmem:[%s1 + $0xa4] sm:$0xf]
        %v1805 = vld [vmem:[%s1 + $0xa8] sm:$0xf]
        %v1806 = vld [vmem:[%s1 + $0xac] sm:$0xf]
        %v1807 = vld [vmem:[%s1 + $0xb0] sm:$0xf]
        %v1808 = vld [vmem:[%s1 + $0xb4] sm:$0xf]
        %v1809 = vld [vmem:[%s1 + $0xb8] sm:$0xf]
        %v1810 = vld [vmem:[%s1 + $0xbc] sm:$0xf]
        %v1811 = vld [vmem:[%s1 + $0xc0] sm:$0xf]
        %v1812 = vld [vmem:[%s1 + $0xc4] sm:$0xf]
        %v1813 = vld [vmem:[%s1 + $0xc8] sm:$0xf]
        %v1814 = vld [vmem:[%s1 + $0xcc] sm:$0xf]
        %v1815 = vld [vmem:[%s1 + $0xd0] sm:$0xf]
        %v1816 = vld [vmem:[%s1 + $0xd4] sm:$0xf]
        %v1817 = vld [vmem:[%s1 + $0xd8] sm:$0xf]
        %v1818 = vld [vmem:[%s1 + $0xdc] sm:$0xf]
        %v1819 = vld [vmem:[%s1 + $0xe0] sm:$0xf]
        %v1820 = vld [vmem:[%s1 + $0xe4] sm:$0xf]
        %v1821 = vld [vmem:[%s1 + $0xe8] sm:$0xf]
        %v1822 = vld [vmem:[%s1 + $0xec] sm:$0xf]
        %v1823 = vld [vmem:[%s1 + $0xf0] sm:$0xf]
        %v1824 = vld [vmem:[%s1 + $0xf4] sm:$0xf]
        %v1825 = vld [vmem:[%s1 + $0xf8] sm:$0xf]
        %v1826 = vld [vmem:[%s1 + $0xfc] sm:$0xf]
        %v1827 = vld [vmem:[%s1 + $0x100] sm:$0xf]
        %v1828 = vld [vmem:[%s1 + $0x104] sm:$0xf]
        %v1829 = vld [vmem:[%s1 + $0x108] sm:$0xf]
        %v1830 = vld [vmem:[%s1 + $0x10c] sm:$0xf]
        %v1831 = vld [vmem:[%s1 + $0x110] sm:$0xf]
        %v1832 = vld [vmem:[%s1 + $0x114] sm:$0xf]
        %v1833 = vld [vmem:[%s1 + $0x118] sm:$0xf]
        %v1834 = vld [vmem:[%s1 + $0x11c] sm:$0xf]
        %v1835 = vld [vmem:[%s2] sm:$0x1]
        %v1837 = vperm.slane %v1835, 0
        %vm1839 = vsmask.f32 4352
        %v1840 = vshrl.u32 %v1450, 16
        %v1842 = vrot.slane %v1840, 3
        %v1843 = vshll.u32 %v1450, 16
        %v1845 = vrot.slane %v1843, 4
        %v1846 = vor.u32 %v1842, %v1845
        %v1847 = vshrl.u32 %v1453, 16
        %v1849 = vrot.slane %v1847, 3
        %v1850 = vshll.u32 %v1453, 16
        %v1852 = vrot.slane %v1850, 4
        %v1853 = vor.u32 %v1849, %v1852
        %v1854 = vsel %vm1839, %v1846, %v1853
        %v1855 = vshrl.u32 %v1549, 16
        %v1857 = vrot.slane %v1855, 3
        %v1858 = vshll.u32 %v1549, 16
        %v1860 = vrot.slane %v1858, 4
        %v1861 = vor.u32 %v1857, %v1860
        %v1862 = vshrl.u32 %v1552, 16
        %v1864 = vrot.slane %v1862, 3
        %v1865 = vshll.u32 %v1552, 16
        %v1867 = vrot.slane %v1865, 4
        %v1868 = vor.u32 %v1864, %v1867
        %v1869 = vsel %vm1839, %v1861, %v1868
        %v1870 = vshrl.u32 %v1648, 16
        %v1872 = vrot.slane %v1870, 3
        %v1873 = vshll.u32 %v1648, 16
        %v1875 = vrot.slane %v1873, 4
        %v1876 = vor.u32 %v1872, %v1875
        %v1877 = vshrl.u32 %v1651, 16
        %v1879 = vrot.slane %v1877, 3
        %v1880 = vshll.u32 %v1651, 16
        %v1882 = vrot.slane %v1880, 4
        %v1883 = vor.u32 %v1879, %v1882
        %v1884 = vsel %vm1839, %v1876, %v1883
        %v1885 = vshrl.u32 %v1747, 16
        %v1887 = vrot.slane %v1885, 3
        %v1888 = vshll.u32 %v1747, 16
        %v1890 = vrot.slane %v1888, 4
        %v1891 = vor.u32 %v1887, %v1890
        %v1892 = vshrl.u32 %v1465, 16
        %v1894 = vrot.slane %v1892, 3
        %v1895 = vshll.u32 %v1465, 16
        %v1897 = vrot.slane %v1895, 4
        %v1898 = vor.u32 %v1894, %v1897
        %v1899 = vsel %vm1839, %v1891, %v1898
        %v1901 = vshrl.u32 %v1159, 16
        %v1903 = vrot.slane %v1901, 3
        %v1904 = vshll.u32 %v1159, 16
        %v1906 = vrot.slane %v1904, 4
        %v1907 = vor.u32 %v1903, %v1906
        %v1908 = vshrl.u32 %v1162, 16
        %v1910 = vrot.slane %v1908, 3
        %v1911 = vshll.u32 %v1162, 16
        %v1913 = vrot.slane %v1911, 4
        %v1914 = vor.u32 %v1910, %v1913
        %v1915 = vsel %vm1839, %v1907, %v1914
        %v1916 = vshrl.u32 %v1456, 16
        %v1918 = vrot.slane %v1916, 3
        %v1919 = vshll.u32 %v1456, 16
        %v1921 = vrot.slane %v1919, 4
        %v1922 = vor.u32 %v1918, %v1921
        %v1923 = vsel %vm1839, %v1853, %v1922
        %v1924 = vshrl.u32 %v1555, 16
        %v1926 = vrot.slane %v1924, 3
        %v1927 = vshll.u32 %v1555, 16
        %v1929 = vrot.slane %v1927, 4
        %v1930 = vor.u32 %v1926, %v1929
        %v1931 = vsel %vm1839, %v1868, %v1930
        %v1932 = vshrl.u32 %v1654, 16
        %v1934 = vrot.slane %v1932, 3
        %v1935 = vshll.u32 %v1654, 16
        %v1937 = vrot.slane %v1935, 4
        %v1938 = vor.u32 %v1934, %v1937
        %v1939 = vsel %vm1839, %v1883, %v1938
        %v1940 = vshrl.u32 %v1468, 16
        %v1942 = vrot.slane %v1940, 3
        %v1943 = vshll.u32 %v1468, 16
        %v1945 = vrot.slane %v1943, 4
        %v1946 = vor.u32 %v1942, %v1945
        %v1947 = vsel %vm1839, %v1898, %v1946
        %v1948 = vshrl.u32 %v1164, 16
        %v1950 = vrot.slane %v1948, 3
        %v1951 = vshll.u32 %v1164, 16
        %v1953 = vrot.slane %v1951, 4
        %v1954 = vor.u32 %v1950, %v1953
        %v1955 = vsel %vm1839, %v1914, %v1954
        %v1956 = vshrl.u32 %v1459, 16
        %v1958 = vrot.slane %v1956, 3
        %v1959 = vshll.u32 %v1459, 16
        %v1961 = vrot.slane %v1959, 4
        %v1962 = vor.u32 %v1958, %v1961
        %v1963 = vsel %vm1839, %v1922, %v1962
        %v1964 = vshrl.u32 %v1558, 16
        %v1966 = vrot.slane %v1964, 3
        %v1967 = vshll.u32 %v1558, 16
        %v1969 = vrot.slane %v1967, 4
        %v1970 = vor.u32 %v1966, %v1969
        %v1971 = vsel %vm1839, %v1930, %v1970
        %v1972 = vshrl.u32 %v1657, 16
        %v1974 = vrot.slane %v1972, 3
        %v1975 = vshll.u32 %v1657, 16
        %v1977 = vrot.slane %v1975, 4
        %v1978 = vor.u32 %v1974, %v1977
        %v1979 = vsel %vm1839, %v1938, %v1978
        %v1980 = vshrl.u32 %v1471, 16
        %v1982 = vrot.slane %v1980, 3
        %v1983 = vshll.u32 %v1471, 16
        %v1985 = vrot.slane %v1983, 4
        %v1986 = vor.u32 %v1982, %v1985
        %v1987 = vsel %vm1839, %v1946, %v1986
        %v1988 = vshrl.u32 %v1166, 16
        %v1990 = vrot.slane %v1988, 3
        %v1991 = vshll.u32 %v1166, 16
        %v1993 = vrot.slane %v1991, 4
        %v1994 = vor.u32 %v1990, %v1993
        %v1995 = vsel %vm1839, %v1954, %v1994
        %v1996 = vshrl.u32 %v1462, 16
        %v1998 = vrot.slane %v1996, 3
        %v1999 = vshll.u32 %v1462, 16
        %v2001 = vrot.slane %v1999, 4
        %v2002 = vor.u32 %v1998, %v2001
        %v2003 = vsel %vm1839, %v1962, %v2002
        %v2004 = vshrl.u32 %v1561, 16
        %v2006 = vrot.slane %v2004, 3
        %v2007 = vshll.u32 %v1561, 16
        %v2009 = vrot.slane %v2007, 4
        %v2010 = vor.u32 %v2006, %v2009
        %v2011 = vsel %vm1839, %v1970, %v2010
        %v2012 = vshrl.u32 %v1660, 16
        %v2014 = vrot.slane %v2012, 3
        %v2015 = vshll.u32 %v1660, 16
        %v2017 = vrot.slane %v2015, 4
        %v2018 = vor.u32 %v2014, %v2017
        %v2019 = vsel %vm1839, %v1978, %v2018
        %v2020 = vshrl.u32 %v1474, 16
        %v2022 = vrot.slane %v2020, 3
        %v2023 = vshll.u32 %v1474, 16
        %v2025 = vrot.slane %v2023, 4
        %v2026 = vor.u32 %v2022, %v2025
        %v2027 = vsel %vm1839, %v1986, %v2026
        %v2028 = vshrl.u32 %v1168, 16
        %v2030 = vrot.slane %v2028, 3
        %v2031 = vshll.u32 %v1168, 16
        %v2033 = vrot.slane %v2031, 4
        %v2034 = vor.u32 %v2030, %v2033
        %v2035 = vsel %vm1839, %v1994, %v2034
        %v2036 = vsel %vm1839, %v2002, %v1898
        %v2037 = vshrl.u32 %v1564, 16
        %v2039 = vrot.slane %v2037, 3
        %v2040 = vshll.u32 %v1564, 16
        %v2042 = vrot.slane %v2040, 4
        %v2043 = vor.u32 %v2039, %v2042
        %v2044 = vsel %vm1839, %v2010, %v2043
        %v2045 = vshrl.u32 %v1663, 16
        %v2047 = vrot.slane %v2045, 3
        %v2048 = vshll.u32 %v1663, 16
        %v2050 = vrot.slane %v2048, 4
        %v2051 = vor.u32 %v2047, %v2050
        %v2052 = vsel %vm1839, %v2018, %v2051
        %v2053 = vshrl.u32 %v1477, 16
        %v2055 = vrot.slane %v2053, 3
        %v2056 = vshll.u32 %v1477, 16
        %v2058 = vrot.slane %v2056, 4
        %v2059 = vor.u32 %v2055, %v2058
        %v2060 = vsel %vm1839, %v2026, %v2059
        %v2061 = vshrl.u32 %v1170, 16
        %v2063 = vrot.slane %v2061, 3
        %v2064 = vshll.u32 %v1170, 16
        %v2066 = vrot.slane %v2064, 4
        %v2067 = vor.u32 %v2063, %v2066
        %v2068 = vsel %vm1839, %v2034, %v2067
        %v2069 = vshrl.u32 %v1567, 16
        %v2071 = vrot.slane %v2069, 3
        %v2072 = vshll.u32 %v1567, 16
        %v2074 = vrot.slane %v2072, 4
        %v2075 = vor.u32 %v2071, %v2074
        %v2076 = vsel %vm1839, %v2043, %v2075
        %v2077 = vshrl.u32 %v1666, 16
        %v2079 = vrot.slane %v2077, 3
        %v2080 = vshll.u32 %v1666, 16
        %v2082 = vrot.slane %v2080, 4
        %v2083 = vor.u32 %v2079, %v2082
        %v2084 = vsel %vm1839, %v2051, %v2083
        %v2085 = vshrl.u32 %v1480, 16
        %v2087 = vrot.slane %v2085, 3
        %v2088 = vshll.u32 %v1480, 16
        %v2090 = vrot.slane %v2088, 4
        %v2091 = vor.u32 %v2087, %v2090
        %v2092 = vsel %vm1839, %v2059, %v2091
        %v2093 = vshrl.u32 %v1172, 16
        %v2095 = vrot.slane %v2093, 3
        %v2096 = vshll.u32 %v1172, 16
        %v2098 = vrot.slane %v2096, 4
        %v2099 = vor.u32 %v2095, %v2098
        %v2100 = vsel %vm1839, %v2067, %v2099
        %v2101 = vshrl.u32 %v1570, 16
        %v2103 = vrot.slane %v2101, 3
        %v2104 = vshll.u32 %v1570, 16
        %v2106 = vrot.slane %v2104, 4
        %v2107 = vor.u32 %v2103, %v2106
        %v2108 = vsel %vm1839, %v2075, %v2107
        %v2109 = vshrl.u32 %v1669, 16
        %v2111 = vrot.slane %v2109, 3
        %v2112 = vshll.u32 %v1669, 16
        %v2114 = vrot.slane %v2112, 4
        %v2115 = vor.u32 %v2111, %v2114
        %v2116 = vsel %vm1839, %v2083, %v2115
        %v2117 = vshrl.u32 %v1483, 16
        %v2119 = vrot.slane %v2117, 3
        %v2120 = vshll.u32 %v1483, 16
        %v2122 = vrot.slane %v2120, 4
        %v2123 = vor.u32 %v2119, %v2122
        %v2124 = vsel %vm1839, %v2091, %v2123
        %v2125 = vshrl.u32 %v1174, 16
        %v2127 = vrot.slane %v2125, 3
        %v2128 = vshll.u32 %v1174, 16
        %v2130 = vrot.slane %v2128, 4
        %v2131 = vor.u32 %v2127, %v2130
        %v2132 = vsel %vm1839, %v2099, %v2131
        %v2133 = vshrl.u32 %v1573, 16
        %v2135 = vrot.slane %v2133, 3
        %v2136 = vshll.u32 %v1573, 16
        %v2138 = vrot.slane %v2136, 4
        %v2139 = vor.u32 %v2135, %v2138
        %v2140 = vsel %vm1839, %v2107, %v2139
        %v2141 = vshrl.u32 %v1672, 16
        %v2143 = vrot.slane %v2141, 3
        %v2144 = vshll.u32 %v1672, 16
        %v2146 = vrot.slane %v2144, 4
        %v2147 = vor.u32 %v2143, %v2146
        %v2148 = vsel %vm1839, %v2115, %v2147
        %v2149 = vshrl.u32 %v1486, 16
        %v2151 = vrot.slane %v2149, 3
        %v2152 = vshll.u32 %v1486, 16
        %v2154 = vrot.slane %v2152, 4
        %v2155 = vor.u32 %v2151, %v2154
        %v2156 = vsel %vm1839, %v2123, %v2155
        %v2157 = vshrl.u32 %v1176, 16
        %v2159 = vrot.slane %v2157, 3
        %v2160 = vshll.u32 %v1176, 16
        %v2162 = vrot.slane %v2160, 4
        %v2163 = vor.u32 %v2159, %v2162
        %v2164 = vsel %vm1839, %v2131, %v2163
        %v2165 = vshrl.u32 %v1576, 16
        %v2167 = vrot.slane %v2165, 3
        %v2168 = vshll.u32 %v1576, 16
        %v2170 = vrot.slane %v2168, 4
        %v2171 = vor.u32 %v2167, %v2170
        %v2172 = vsel %vm1839, %v2139, %v2171
        %v2173 = vshrl.u32 %v1675, 16
        %v2175 = vrot.slane %v2173, 3
        %v2176 = vshll.u32 %v1675, 16
        %v2178 = vrot.slane %v2176, 4
        %v2179 = vor.u32 %v2175, %v2178
        %v2180 = vsel %vm1839, %v2147, %v2179
        %v2181 = vshrl.u32 %v1489, 16
        %v2183 = vrot.slane %v2181, 3
        %v2184 = vshll.u32 %v1489, 16
        %v2186 = vrot.slane %v2184, 4
        %v2187 = vor.u32 %v2183, %v2186
        %v2188 = vsel %vm1839, %v2155, %v2187
        %v2189 = vshrl.u32 %v1178, 16
        %v2191 = vrot.slane %v2189, 3
        %v2192 = vshll.u32 %v1178, 16
        %v2194 = vrot.slane %v2192, 4
        %v2195 = vor.u32 %v2191, %v2194
        %v2196 = vsel %vm1839, %v2163, %v2195
        %v2197 = vshrl.u32 %v1579, 16
        %v2199 = vrot.slane %v2197, 3
        %v2200 = vshll.u32 %v1579, 16
        %v2202 = vrot.slane %v2200, 4
        %v2203 = vor.u32 %v2199, %v2202
        %v2204 = vsel %vm1839, %v2171, %v2203
        %v2205 = vshrl.u32 %v1678, 16
        %v2207 = vrot.slane %v2205, 3
        %v2208 = vshll.u32 %v1678, 16
        %v2210 = vrot.slane %v2208, 4
        %v2211 = vor.u32 %v2207, %v2210
        %v2212 = vsel %vm1839, %v2179, %v2211
        %v2213 = vshrl.u32 %v1492, 16
        %v2215 = vrot.slane %v2213, 3
        %v2216 = vshll.u32 %v1492, 16
        %v2218 = vrot.slane %v2216, 4
        %v2219 = vor.u32 %v2215, %v2218
        %v2220 = vsel %vm1839, %v2187, %v2219
        %v2221 = vshrl.u32 %v1180, 16
        %v2223 = vrot.slane %v2221, 3
        %v2224 = vshll.u32 %v1180, 16
        %v2226 = vrot.slane %v2224, 4
        %v2227 = vor.u32 %v2223, %v2226
        %v2228 = vsel %vm1839, %v2195, %v2227
        %v2229 = vshrl.u32 %v1582, 16
        %v2231 = vrot.slane %v2229, 3
        %v2232 = vshll.u32 %v1582, 16
        %v2234 = vrot.slane %v2232, 4
        %v2235 = vor.u32 %v2231, %v2234
        %v2236 = vsel %vm1839, %v2203, %v2235
        %v2237 = vshrl.u32 %v1681, 16
        %v2239 = vrot.slane %v2237, 3
        %v2240 = vshll.u32 %v1681, 16
        %v2242 = vrot.slane %v2240, 4
        %v2243 = vor.u32 %v2239, %v2242
        %v2244 = vsel %vm1839, %v2211, %v2243
        %v2245 = vshrl.u32 %v1495, 16
        %v2247 = vrot.slane %v2245, 3
        %v2248 = vshll.u32 %v1495, 16
        %v2250 = vrot.slane %v2248, 4
        %v2251 = vor.u32 %v2247, %v2250
        %v2252 = vsel %vm1839, %v2219, %v2251
        %v2253 = vshrl.u32 %v1182, 16
        %v2255 = vrot.slane %v2253, 3
        %v2256 = vshll.u32 %v1182, 16
        %v2258 = vrot.slane %v2256, 4
        %v2259 = vor.u32 %v2255, %v2258
        %v2260 = vsel %vm1839, %v2227, %v2259
        %v2261 = vshrl.u32 %v1585, 16
        %v2263 = vrot.slane %v2261, 3
        %v2264 = vshll.u32 %v1585, 16
        %v2266 = vrot.slane %v2264, 4
        %v2267 = vor.u32 %v2263, %v2266
        %v2268 = vsel %vm1839, %v2235, %v2267
        %v2269 = vshrl.u32 %v1684, 16
        %v2271 = vrot.slane %v2269, 3
        %v2272 = vshll.u32 %v1684, 16
        %v2274 = vrot.slane %v2272, 4
        %v2275 = vor.u32 %v2271, %v2274
        %v2276 = vsel %vm1839, %v2243, %v2275
        %v2277 = vshrl.u32 %v1498, 16
        %v2279 = vrot.slane %v2277, 3
        %v2280 = vshll.u32 %v1498, 16
        %v2282 = vrot.slane %v2280, 4
        %v2283 = vor.u32 %v2279, %v2282
        %v2284 = vsel %vm1839, %v2251, %v2283
        %v2285 = vshrl.u32 %v1184, 16
        %v2287 = vrot.slane %v2285, 3
        %v2288 = vshll.u32 %v1184, 16
        %v2290 = vrot.slane %v2288, 4
        %v2291 = vor.u32 %v2287, %v2290
        %v2292 = vsel %vm1839, %v2259, %v2291
        %v2293 = vshrl.u32 %v1588, 16
        %v2295 = vrot.slane %v2293, 3
        %v2296 = vshll.u32 %v1588, 16
        %v2298 = vrot.slane %v2296, 4
        %v2299 = vor.u32 %v2295, %v2298
        %v2300 = vsel %vm1839, %v2267, %v2299
        %v2301 = vshrl.u32 %v1687, 16
        %v2303 = vrot.slane %v2301, 3
        %v2304 = vshll.u32 %v1687, 16
        %v2306 = vrot.slane %v2304, 4
        %v2307 = vor.u32 %v2303, %v2306
        %v2308 = vsel %vm1839, %v2275, %v2307
        %v2309 = vshrl.u32 %v1501, 16
        %v2311 = vrot.slane %v2309, 3
        %v2312 = vshll.u32 %v1501, 16
        %v2314 = vrot.slane %v2312, 4
        %v2315 = vor.u32 %v2311, %v2314
        %v2316 = vsel %vm1839, %v2283, %v2315
        %v2317 = vshrl.u32 %v1186, 16
        %v2319 = vrot.slane %v2317, 3
        %v2320 = vshll.u32 %v1186, 16
        %v2322 = vrot.slane %v2320, 4
        %v2323 = vor.u32 %v2319, %v2322
        %v2324 = vsel %vm1839, %v2291, %v2323
        %v2325 = vshrl.u32 %v1591, 16
        %v2327 = vrot.slane %v2325, 3
        %v2328 = vshll.u32 %v1591, 16
        %v2330 = vrot.slane %v2328, 4
        %v2331 = vor.u32 %v2327, %v2330
        %v2332 = vsel %vm1839, %v2299, %v2331
        %v2333 = vshrl.u32 %v1690, 16
        %v2335 = vrot.slane %v2333, 3
        %v2336 = vshll.u32 %v1690, 16
        %v2338 = vrot.slane %v2336, 4
        %v2339 = vor.u32 %v2335, %v2338
        %v2340 = vsel %vm1839, %v2307, %v2339
        %v2341 = vshrl.u32 %v1504, 16
        %v2343 = vrot.slane %v2341, 3
        %v2344 = vshll.u32 %v1504, 16
        %v2346 = vrot.slane %v2344, 4
        %v2347 = vor.u32 %v2343, %v2346
        %v2348 = vsel %vm1839, %v2315, %v2347
        %v2349 = vshrl.u32 %v1188, 16
        %v2351 = vrot.slane %v2349, 3
        %v2352 = vshll.u32 %v1188, 16
        %v2354 = vrot.slane %v2352, 4
        %v2355 = vor.u32 %v2351, %v2354
        %v2356 = vsel %vm1839, %v2323, %v2355
        %v2357 = vshrl.u32 %v1594, 16
        %v2359 = vrot.slane %v2357, 3
        %v2360 = vshll.u32 %v1594, 16
        %v2362 = vrot.slane %v2360, 4
        %v2363 = vor.u32 %v2359, %v2362
        %v2364 = vsel %vm1839, %v2331, %v2363
        %v2365 = vshrl.u32 %v1693, 16
        %v2367 = vrot.slane %v2365, 3
        %v2368 = vshll.u32 %v1693, 16
        %v2370 = vrot.slane %v2368, 4
        %v2371 = vor.u32 %v2367, %v2370
        %v2372 = vsel %vm1839, %v2339, %v2371
        %v2373 = vshrl.u32 %v1507, 16
        %v2375 = vrot.slane %v2373, 3
        %v2376 = vshll.u32 %v1507, 16
        %v2378 = vrot.slane %v2376, 4
        %v2379 = vor.u32 %v2375, %v2378
        %v2380 = vsel %vm1839, %v2347, %v2379
        %v2381 = vshrl.u32 %v1190, 16
        %v2383 = vrot.slane %v2381, 3
        %v2384 = vshll.u32 %v1190, 16
        %v2386 = vrot.slane %v2384, 4
        %v2387 = vor.u32 %v2383, %v2386
        %v2388 = vsel %vm1839, %v2355, %v2387
        %v2389 = vshrl.u32 %v1597, 16
        %v2391 = vrot.slane %v2389, 3
        %v2392 = vshll.u32 %v1597, 16
        %v2394 = vrot.slane %v2392, 4
        %v2395 = vor.u32 %v2391, %v2394
        %v2396 = vsel %vm1839, %v2363, %v2395
        %v2397 = vshrl.u32 %v1696, 16
        %v2399 = vrot.slane %v2397, 3
        %v2400 = vshll.u32 %v1696, 16
        %v2402 = vrot.slane %v2400, 4
        %v2403 = vor.u32 %v2399, %v2402
        %v2404 = vsel %vm1839, %v2371, %v2403
        %v2405 = vshrl.u32 %v1510, 16
        %v2407 = vrot.slane %v2405, 3
        %v2408 = vshll.u32 %v1510, 16
        %v2410 = vrot.slane %v2408, 4
        %v2411 = vor.u32 %v2407, %v2410
        %v2412 = vsel %vm1839, %v2379, %v2411
        %v2413 = vshrl.u32 %v1192, 16
        %v2415 = vrot.slane %v2413, 3
        %v2416 = vshll.u32 %v1192, 16
        %v2418 = vrot.slane %v2416, 4
        %v2419 = vor.u32 %v2415, %v2418
        %v2420 = vsel %vm1839, %v2387, %v2419
        %v2421 = vshrl.u32 %v1600, 16
        %v2423 = vrot.slane %v2421, 3
        %v2424 = vshll.u32 %v1600, 16
        %v2426 = vrot.slane %v2424, 4
        %v2427 = vor.u32 %v2423, %v2426
        %v2428 = vsel %vm1839, %v2395, %v2427
        %v2429 = vshrl.u32 %v1699, 16
        %v2431 = vrot.slane %v2429, 3
        %v2432 = vshll.u32 %v1699, 16
        %v2434 = vrot.slane %v2432, 4
        %v2435 = vor.u32 %v2431, %v2434
        %v2436 = vsel %vm1839, %v2403, %v2435
        %v2437 = vshrl.u32 %v1513, 16
        %v2439 = vrot.slane %v2437, 3
        %v2440 = vshll.u32 %v1513, 16
        %v2442 = vrot.slane %v2440, 4
        %v2443 = vor.u32 %v2439, %v2442
        %v2444 = vsel %vm1839, %v2411, %v2443
        %v2445 = vshrl.u32 %v1194, 16
        %v2447 = vrot.slane %v2445, 3
        %v2448 = vshll.u32 %v1194, 16
        %v2450 = vrot.slane %v2448, 4
        %v2451 = vor.u32 %v2447, %v2450
        %v2452 = vsel %vm1839, %v2419, %v2451
        %v2453 = vshrl.u32 %v1603, 16
        %v2455 = vrot.slane %v2453, 3
        %v2456 = vshll.u32 %v1603, 16
        %v2458 = vrot.slane %v2456, 4
        %v2459 = vor.u32 %v2455, %v2458
        %v2460 = vsel %vm1839, %v2427, %v2459
        %v2461 = vshrl.u32 %v1702, 16
        %v2463 = vrot.slane %v2461, 3
        %v2464 = vshll.u32 %v1702, 16
        %v2466 = vrot.slane %v2464, 4
        %v2467 = vor.u32 %v2463, %v2466
        %v2468 = vsel %vm1839, %v2435, %v2467
        %v2469 = vshrl.u32 %v1516, 16
        %v2471 = vrot.slane %v2469, 3
        %v2472 = vshll.u32 %v1516, 16
        %v2474 = vrot.slane %v2472, 4
        %v2475 = vor.u32 %v2471, %v2474
        %v2476 = vsel %vm1839, %v2443, %v2475
        %v2477 = vshrl.u32 %v1196, 16
        %v2479 = vrot.slane %v2477, 3
        %v2480 = vshll.u32 %v1196, 16
        %v2482 = vrot.slane %v2480, 4
        %v2483 = vor.u32 %v2479, %v2482
        %v2484 = vsel %vm1839, %v2451, %v2483
        %v2485 = vshrl.u32 %v1606, 16
        %v2487 = vrot.slane %v2485, 3
        %v2488 = vshll.u32 %v1606, 16
        %v2490 = vrot.slane %v2488, 4
        %v2491 = vor.u32 %v2487, %v2490
        %v2492 = vsel %vm1839, %v2459, %v2491
        %v2493 = vshrl.u32 %v1705, 16
        %v2495 = vrot.slane %v2493, 3
        %v2496 = vshll.u32 %v1705, 16
        %v2498 = vrot.slane %v2496, 4
        %v2499 = vor.u32 %v2495, %v2498
        %v2500 = vsel %vm1839, %v2467, %v2499
        %v2501 = vshrl.u32 %v1519, 16
        %v2503 = vrot.slane %v2501, 3
        %v2504 = vshll.u32 %v1519, 16
        %v2506 = vrot.slane %v2504, 4
        %v2507 = vor.u32 %v2503, %v2506
        %v2508 = vsel %vm1839, %v2475, %v2507
        %v2509 = vshrl.u32 %v1198, 16
        %v2511 = vrot.slane %v2509, 3
        %v2512 = vshll.u32 %v1198, 16
        %v2514 = vrot.slane %v2512, 4
        %v2515 = vor.u32 %v2511, %v2514
        %v2516 = vsel %vm1839, %v2483, %v2515
        %v2517 = vshrl.u32 %v1609, 16
        %v2519 = vrot.slane %v2517, 3
        %v2520 = vshll.u32 %v1609, 16
        %v2522 = vrot.slane %v2520, 4
        %v2523 = vor.u32 %v2519, %v2522
        %v2524 = vsel %vm1839, %v2491, %v2523
        %v2525 = vshrl.u32 %v1708, 16
        %v2527 = vrot.slane %v2525, 3
        %v2528 = vshll.u32 %v1708, 16
        %v2530 = vrot.slane %v2528, 4
        %v2531 = vor.u32 %v2527, %v2530
        %v2532 = vsel %vm1839, %v2499, %v2531
        %v2533 = vshrl.u32 %v1522, 16
        %v2535 = vrot.slane %v2533, 3
        %v2536 = vshll.u32 %v1522, 16
        %v2538 = vrot.slane %v2536, 4
        %v2539 = vor.u32 %v2535, %v2538
        %v2540 = vsel %vm1839, %v2507, %v2539
        %v2541 = vshrl.u32 %v1200, 16
        %v2543 = vrot.slane %v2541, 3
        %v2544 = vshll.u32 %v1200, 16
        %v2546 = vrot.slane %v2544, 4
        %v2547 = vor.u32 %v2543, %v2546
        %v2548 = vsel %vm1839, %v2515, %v2547
        %v2549 = vshrl.u32 %v1612, 16
        %v2551 = vrot.slane %v2549, 3
        %v2552 = vshll.u32 %v1612, 16
        %v2554 = vrot.slane %v2552, 4
        %v2555 = vor.u32 %v2551, %v2554
        %v2556 = vsel %vm1839, %v2523, %v2555
        %v2557 = vshrl.u32 %v1711, 16
        %v2559 = vrot.slane %v2557, 3
        %v2560 = vshll.u32 %v1711, 16
        %v2562 = vrot.slane %v2560, 4
        %v2563 = vor.u32 %v2559, %v2562
        %v2564 = vsel %vm1839, %v2531, %v2563
        %v2565 = vshrl.u32 %v1525, 16
        %v2567 = vrot.slane %v2565, 3
        %v2568 = vshll.u32 %v1525, 16
        %v2570 = vrot.slane %v2568, 4
        %v2571 = vor.u32 %v2567, %v2570
        %v2572 = vsel %vm1839, %v2539, %v2571
        %v2573 = vshrl.u32 %v1202, 16
        %v2575 = vrot.slane %v2573, 3
        %v2576 = vshll.u32 %v1202, 16
        %v2578 = vrot.slane %v2576, 4
        %v2579 = vor.u32 %v2575, %v2578
        %v2580 = vsel %vm1839, %v2547, %v2579
        %v2581 = vshrl.u32 %v1615, 16
        %v2583 = vrot.slane %v2581, 3
        %v2584 = vshll.u32 %v1615, 16
        %v2586 = vrot.slane %v2584, 4
        %v2587 = vor.u32 %v2583, %v2586
        %v2588 = vsel %vm1839, %v2555, %v2587
        %v2589 = vshrl.u32 %v1714, 16
        %v2591 = vrot.slane %v2589, 3
        %v2592 = vshll.u32 %v1714, 16
        %v2594 = vrot.slane %v2592, 4
        %v2595 = vor.u32 %v2591, %v2594
        %v2596 = vsel %vm1839, %v2563, %v2595
        %v2597 = vshrl.u32 %v1528, 16
        %v2599 = vrot.slane %v2597, 3
        %v2600 = vshll.u32 %v1528, 16
        %v2602 = vrot.slane %v2600, 4
        %v2603 = vor.u32 %v2599, %v2602
        %v2604 = vsel %vm1839, %v2571, %v2603
        %v2605 = vshrl.u32 %v1204, 16
        %v2607 = vrot.slane %v2605, 3
        %v2608 = vshll.u32 %v1204, 16
        %v2610 = vrot.slane %v2608, 4
        %v2611 = vor.u32 %v2607, %v2610
        %v2612 = vsel %vm1839, %v2579, %v2611
        %v2613 = vshrl.u32 %v1618, 16
        %v2615 = vrot.slane %v2613, 3
        %v2616 = vshll.u32 %v1618, 16
        %v2618 = vrot.slane %v2616, 4
        %v2619 = vor.u32 %v2615, %v2618
        %v2620 = vsel %vm1839, %v2587, %v2619
        %v2621 = vshrl.u32 %v1717, 16
        %v2623 = vrot.slane %v2621, 3
        %v2624 = vshll.u32 %v1717, 16
        %v2626 = vrot.slane %v2624, 4
        %v2627 = vor.u32 %v2623, %v2626
        %v2628 = vsel %vm1839, %v2595, %v2627
        %v2629 = vshrl.u32 %v1531, 16
        %v2631 = vrot.slane %v2629, 3
        %v2632 = vshll.u32 %v1531, 16
        %v2634 = vrot.slane %v2632, 4
        %v2635 = vor.u32 %v2631, %v2634
        %v2636 = vsel %vm1839, %v2603, %v2635
        %v2637 = vshrl.u32 %v1206, 16
        %v2639 = vrot.slane %v2637, 3
        %v2640 = vshll.u32 %v1206, 16
        %v2642 = vrot.slane %v2640, 4
        %v2643 = vor.u32 %v2639, %v2642
        %v2644 = vsel %vm1839, %v2611, %v2643
        %v2645 = vshrl.u32 %v1621, 16
        %v2647 = vrot.slane %v2645, 3
        %v2648 = vshll.u32 %v1621, 16
        %v2650 = vrot.slane %v2648, 4
        %v2651 = vor.u32 %v2647, %v2650
        %v2652 = vsel %vm1839, %v2619, %v2651
        %v2653 = vshrl.u32 %v1720, 16
        %v2655 = vrot.slane %v2653, 3
        %v2656 = vshll.u32 %v1720, 16
        %v2658 = vrot.slane %v2656, 4
        %v2659 = vor.u32 %v2655, %v2658
        %v2660 = vsel %vm1839, %v2627, %v2659
        %v2661 = vshrl.u32 %v1534, 16
        %v2663 = vrot.slane %v2661, 3
        %v2664 = vshll.u32 %v1534, 16
        %v2666 = vrot.slane %v2664, 4
        %v2667 = vor.u32 %v2663, %v2666
        %v2668 = vsel %vm1839, %v2635, %v2667
        %v2669 = vshrl.u32 %v1208, 16
        %v2671 = vrot.slane %v2669, 3
        %v2672 = vshll.u32 %v1208, 16
        %v2674 = vrot.slane %v2672, 4
        %v2675 = vor.u32 %v2671, %v2674
        %v2676 = vsel %vm1839, %v2643, %v2675
        %v2677 = vshrl.u32 %v1624, 16
        %v2679 = vrot.slane %v2677, 3
        %v2680 = vshll.u32 %v1624, 16
        %v2682 = vrot.slane %v2680, 4
        %v2683 = vor.u32 %v2679, %v2682
        %v2684 = vsel %vm1839, %v2651, %v2683
        %v2685 = vshrl.u32 %v1723, 16
        %v2687 = vrot.slane %v2685, 3
        %v2688 = vshll.u32 %v1723, 16
        %v2690 = vrot.slane %v2688, 4
        %v2691 = vor.u32 %v2687, %v2690
        %v2692 = vsel %vm1839, %v2659, %v2691
        %v2693 = vshrl.u32 %v1537, 16
        %v2695 = vrot.slane %v2693, 3
        %v2696 = vshll.u32 %v1537, 16
        %v2698 = vrot.slane %v2696, 4
        %v2699 = vor.u32 %v2695, %v2698
        %v2700 = vsel %vm1839, %v2667, %v2699
        %v2701 = vshrl.u32 %v1210, 16
        %v2703 = vrot.slane %v2701, 3
        %v2704 = vshll.u32 %v1210, 16
        %v2706 = vrot.slane %v2704, 4
        %v2707 = vor.u32 %v2703, %v2706
        %v2708 = vsel %vm1839, %v2675, %v2707
        %v2709 = vshrl.u32 %v1627, 16
        %v2711 = vrot.slane %v2709, 3
        %v2712 = vshll.u32 %v1627, 16
        %v2714 = vrot.slane %v2712, 4
        %v2715 = vor.u32 %v2711, %v2714
        %v2716 = vsel %vm1839, %v2683, %v2715
        %v2717 = vshrl.u32 %v1726, 16
        %v2719 = vrot.slane %v2717, 3
        %v2720 = vshll.u32 %v1726, 16
        %v2722 = vrot.slane %v2720, 4
        %v2723 = vor.u32 %v2719, %v2722
        %v2724 = vsel %vm1839, %v2691, %v2723
        %v2725 = vshrl.u32 %v1540, 16
        %v2727 = vrot.slane %v2725, 3
        %v2728 = vshll.u32 %v1540, 16
        %v2730 = vrot.slane %v2728, 4
        %v2731 = vor.u32 %v2727, %v2730
        %v2732 = vsel %vm1839, %v2699, %v2731
        %v2733 = vshrl.u32 %v1212, 16
        %v2735 = vrot.slane %v2733, 3
        %v2736 = vshll.u32 %v1212, 16
        %v2738 = vrot.slane %v2736, 4
        %v2739 = vor.u32 %v2735, %v2738
        %v2740 = vsel %vm1839, %v2707, %v2739
        %v2741 = vshrl.u32 %v1630, 16
        %v2743 = vrot.slane %v2741, 3
        %v2744 = vshll.u32 %v1630, 16
        %v2746 = vrot.slane %v2744, 4
        %v2747 = vor.u32 %v2743, %v2746
        %v2748 = vsel %vm1839, %v2715, %v2747
        %v2749 = vshrl.u32 %v1729, 16
        %v2751 = vrot.slane %v2749, 3
        %v2752 = vshll.u32 %v1729, 16
        %v2754 = vrot.slane %v2752, 4
        %v2755 = vor.u32 %v2751, %v2754
        %v2756 = vsel %vm1839, %v2723, %v2755
        %v2757 = vshrl.u32 %v1543, 16
        %v2759 = vrot.slane %v2757, 3
        %v2760 = vshll.u32 %v1543, 16
        %v2762 = vrot.slane %v2760, 4
        %v2763 = vor.u32 %v2759, %v2762
        %v2764 = vsel %vm1839, %v2731, %v2763
        %v2765 = vshrl.u32 %v1214, 16
        %v2767 = vrot.slane %v2765, 3
        %v2768 = vshll.u32 %v1214, 16
        %v2770 = vrot.slane %v2768, 4
        %v2771 = vor.u32 %v2767, %v2770
        %v2772 = vsel %vm1839, %v2739, %v2771
        %v2773 = vshrl.u32 %v1633, 16
        %v2775 = vrot.slane %v2773, 3
        %v2776 = vshll.u32 %v1633, 16
        %v2778 = vrot.slane %v2776, 4
        %v2779 = vor.u32 %v2775, %v2778
        %v2780 = vsel %vm1839, %v2747, %v2779
        %v2781 = vshrl.u32 %v1732, 16
        %v2783 = vrot.slane %v2781, 3
        %v2784 = vshll.u32 %v1732, 16
        %v2786 = vrot.slane %v2784, 4
        %v2787 = vor.u32 %v2783, %v2786
        %v2788 = vsel %vm1839, %v2755, %v2787
        %v2789 = vshrl.u32 %v1750, 16
        %v2791 = vrot.slane %v2789, 3
        %v2792 = vshll.u32 %v1750, 16
        %v2794 = vrot.slane %v2792, 4
        %v2795 = vor.u32 %v2791, %v2794
        %v2796 = vsel %vm1839, %v2763, %v2795
        %v2798 = vshrl.u32 %v1321, 16
        %v2800 = vrot.slane %v2798, 3
        %v2801 = vshll.u32 %v1321, 16
        %v2803 = vrot.slane %v2801, 4
        %v2804 = vor.u32 %v2800, %v2803
        %v2805 = vsel %vm1839, %v2771, %v2804
        %v2806 = vshrl.u32 %v1636, 16
        %v2808 = vrot.slane %v2806, 3
        %v2809 = vshll.u32 %v1636, 16
        %v2811 = vrot.slane %v2809, 4
        %v2812 = vor.u32 %v2808, %v2811
        %v2813 = vsel %vm1839, %v2779, %v2812
        %v2814 = vshrl.u32 %v1735, 16
        %v2816 = vrot.slane %v2814, 3
        %v2817 = vshll.u32 %v1735, 16
        %v2819 = vrot.slane %v2817, 4
        %v2820 = vor.u32 %v2816, %v2819
        %v2821 = vsel %vm1839, %v2787, %v2820
        %v2822 = vshrl.u32 %v1753, 16
        %v2824 = vrot.slane %v2822, 3
        %v2825 = vshll.u32 %v1753, 16
        %v2827 = vrot.slane %v2825, 4
        %v2828 = vor.u32 %v2824, %v2827
        %v2829 = vsel %vm1839, %v2795, %v2828
        %v2831 = vshrl.u32 %v1323, 16
        %v2833 = vrot.slane %v2831, 3
        %v2834 = vshll.u32 %v1323, 16
        %v2836 = vrot.slane %v2834, 4
        %v2837 = vor.u32 %v2833, %v2836
        %v2838 = vsel %vm1839, %v2804, %v2837
        %v2839 = vshrl.u32 %v1639, 16
        %v2841 = vrot.slane %v2839, 3
        %v2842 = vshll.u32 %v1639, 16
        %v2844 = vrot.slane %v2842, 4
        %v2845 = vor.u32 %v2841, %v2844
        %v2846 = vsel %vm1839, %v2812, %v2845
        %v2847 = vshrl.u32 %v1738, 16
        %v2849 = vrot.slane %v2847, 3
        %v2850 = vshll.u32 %v1738, 16
        %v2852 = vrot.slane %v2850, 4
        %v2853 = vor.u32 %v2849, %v2852
        %v2854 = vsel %vm1839, %v2820, %v2853
        %v2855 = vshrl.u32 %v1756, 16
        %v2857 = vrot.slane %v2855, 3
        %v2858 = vshll.u32 %v1756, 16
        %v2860 = vrot.slane %v2858, 4
        %v2861 = vor.u32 %v2857, %v2860
        %v2862 = vsel %vm1839, %v2828, %v2861
        %v2864 = vshrl.u32 %v1442, 16
        %v2866 = vrot.slane %v2864, 3
        %v2867 = vshll.u32 %v1442, 16
        %v2869 = vrot.slane %v2867, 4
        %v2870 = vor.u32 %v2866, %v2869
        %v2871 = vsel %vm1839, %v2837, %v2870
        %v2872 = vshrl.u32 %v1642, 16
        %v2874 = vrot.slane %v2872, 3
        %v2875 = vshll.u32 %v1642, 16
        %v2877 = vrot.slane %v2875, 4
        %v2878 = vor.u32 %v2874, %v2877
        %v2879 = vsel %vm1839, %v2845, %v2878
        %v2880 = vshrl.u32 %v1741, 16
        %v2882 = vrot.slane %v2880, 3
        %v2883 = vshll.u32 %v1741, 16
        %v2885 = vrot.slane %v2883, 4
        %v2886 = vor.u32 %v2882, %v2885
        %v2887 = vsel %vm1839, %v2853, %v2886
        %v2888 = vshrl.u32 %v1759, 16
        %v2890 = vrot.slane %v2888, 3
        %v2891 = vshll.u32 %v1759, 16
        %v2893 = vrot.slane %v2891, 4
        %v2894 = vor.u32 %v2890, %v2893
        %v2895 = vsel %vm1839, %v2861, %v2894
        %v2897 = vshrl.u32 %v1444, 16
        %v2899 = vrot.slane %v2897, 3
        %v2900 = vshll.u32 %v1444, 16
        %v2902 = vrot.slane %v2900, 4
        %v2903 = vor.u32 %v2899, %v2902
        %v2904 = vsel %vm1839, %v2870, %v2903
        %v2905 = vshrl.u32 %v1546, 16
        %v2907 = vrot.slane %v2905, 3
        %v2908 = vshll.u32 %v1546, 16
        %v2910 = vrot.slane %v2908, 4
        %v2911 = vor.u32 %v2907, %v2910
        %v2912 = vsel %vm1839, %v2763, %v2911
        %v2913 = vshrl.u32 %v1645, 16
        %v2915 = vrot.slane %v2913, 3
        %v2916 = vshll.u32 %v1645, 16
        %v2918 = vrot.slane %v2916, 4
        %v2919 = vor.u32 %v2915, %v2918
        %v2920 = vsel %vm1839, %v2878, %v2919
        %v2921 = vshrl.u32 %v1744, 16
        %v2923 = vrot.slane %v2921, 3
        %v2924 = vshll.u32 %v1744, 16
        %v2926 = vrot.slane %v2924, 4
        %v2927 = vor.u32 %v2923, %v2926
        %v2928 = vsel %vm1839, %v2886, %v2927
        %v2929 = vshrl.u32 %v1762, 16
        %v2931 = vrot.slane %v2929, 3
        %v2932 = vshll.u32 %v1762, 16
        %v2934 = vrot.slane %v2932, 4
        %v2935 = vor.u32 %v2931, %v2934
        %v2936 = vsel %vm1839, %v2894, %v2935
        %v2938 = vshrl.u32 %v1446, 16
        %v2940 = vrot.slane %v2938, 3
        %v2941 = vshll.u32 %v1446, 16
        %v2943 = vrot.slane %v2941, 4
        %v2944 = vor.u32 %v2940, %v2943
        %v2945 = vsel %vm1839, %v2903, %v2944
        %v3120 = vunpack.c.l.b16 %v1763
        %v3121 = vunpack.c.l.b16 %v1764
        %v3122 = vunpack.c.l.b16 %v1765
        %v3123 = vunpack.c.l.b16 %v1766
        %v3124 = vunpack.c.l.b16 %v1767
        %v3125 = vunpack.c.l.b16 %v1768
        %v3126 = vunpack.c.l.b16 %v1769
        %v3127 = vunpack.c.l.b16 %v1770
        %v3128 = vunpack.c.l.b16 %v1771
        %v3129 = vunpack.c.l.b16 %v1772
        %v3130 = vunpack.c.l.b16 %v1773
        %v3131 = vunpack.c.l.b16 %v1774
        %v3132 = vunpack.c.l.b16 %v1775
        %v3133 = vunpack.c.l.b16 %v1776
        %v3134 = vunpack.c.l.b16 %v1777
        %v3135 = vunpack.c.l.b16 %v1778
        %v3136 = vunpack.c.l.b16 %v1779
        %v3137 = vunpack.c.l.b16 %v1780
        %v3138 = vunpack.c.l.b16 %v1781
        %v3139 = vunpack.c.l.b16 %v1782
        %v3140 = vunpack.c.l.b16 %v1783
        %v3141 = vunpack.c.l.b16 %v1784
        %v3142 = vunpack.c.l.b16 %v1785
        %v3143 = vunpack.c.l.b16 %v1786
        %v3144 = vunpack.c.l.b16 %v1787
        %v3145 = vunpack.c.l.b16 %v1788
        %v3146 = vunpack.c.l.b16 %v1789
        %v3147 = vunpack.c.l.b16 %v1790
        %v3148 = vunpack.c.l.b16 %v1791
        %v3149 = vunpack.c.l.b16 %v1792
        %v3150 = vunpack.c.l.b16 %v1793
        %v3151 = vunpack.c.l.b16 %v1794
        %v3152 = vunpack.c.l.b16 %v1795
        %v3153 = vunpack.c.l.b16 %v1796
        %v3154 = vunpack.c.l.b16 %v1797
        %v3155 = vunpack.c.l.b16 %v1798
        %v3156 = vunpack.c.l.b16 %v1799
        %v3157 = vunpack.c.l.b16 %v1800
        %v3158 = vunpack.c.l.b16 %v1801
        %v3159 = vunpack.c.l.b16 %v1802
        %v3160 = vunpack.c.l.b16 %v1803
        %v3161 = vunpack.c.l.b16 %v1804
        %v3162 = vunpack.c.l.b16 %v1805
        %v3163 = vunpack.c.l.b16 %v1806
        %v3164 = vunpack.c.l.b16 %v1807
        %v3165 = vunpack.c.l.b16 %v1808
        %v3166 = vunpack.c.l.b16 %v1809
        %v3167 = vunpack.c.l.b16 %v1810
        %v3168 = vunpack.c.l.b16 %v1811
        %v3169 = vunpack.c.l.b16 %v1812
        %v3170 = vunpack.c.l.b16 %v1813
        %v3171 = vunpack.c.l.b16 %v1814
        %v3172 = vunpack.c.l.b16 %v1815
        %v3173 = vunpack.c.l.b16 %v1816
        %v3174 = vunpack.c.l.b16 %v1817
        %v3175 = vunpack.c.l.b16 %v1818
        %v3176 = vunpack.c.l.b16 %v1819
        %v3177 = vunpack.c.l.b16 %v1820
        %v3178 = vunpack.c.l.b16 %v1821
        %v3179 = vunpack.c.l.b16 %v1822
        %v3180 = vunpack.c.l.b16 %v1823
        %v3181 = vunpack.c.l.b16 %v1824
        %v3182 = vunpack.c.l.b16 %v1825
        %v3183 = vunpack.c.l.b16 %v1826
        %v3184 = vunpack.c.l.b16 %v1827
        %v3185 = vunpack.c.l.b16 %v1828
        %v3186 = vunpack.c.l.b16 %v1829
        %v3187 = vunpack.c.l.b16 %v1830
        %v3188 = vunpack.c.l.b16 %v1831
        %v3189 = vunpack.c.l.b16 %v1832
        %v3190 = vunpack.c.l.b16 %v1833
        %v3191 = vunpack.c.l.b16 %v1834
        %v3192 = vpack.c.b16 %v3121, %v3120
        %v3193 = vpack.c.b16 %v3123, %v3122
        %v3194 = vpack.c.b16 %v3125, %v3124
        %v3195 = vpack.c.b16 %v3127, %v3126
        %v3196 = vpack.c.b16 %v3129, %v3128
        %v3197 = vpack.c.b16 %v3131, %v3130
        %v3198 = vpack.c.b16 %v3133, %v3132
        %v3199 = vpack.c.b16 %v3135, %v3134
        %v3200 = vpack.c.b16 %v3137, %v3136
        %v3201 = vpack.c.b16 %v3139, %v3138
        %v3202 = vpack.c.b16 %v3141, %v3140
        %v3203 = vpack.c.b16 %v3143, %v3142
        %v3204 = vpack.c.b16 %v3145, %v3144
        %v3205 = vpack.c.b16 %v3147, %v3146
        %v3206 = vpack.c.b16 %v3149, %v3148
        %v3207 = vpack.c.b16 %v3151, %v3150
        %v3208 = vpack.c.b16 %v3153, %v3152
        %v3209 = vpack.c.b16 %v3155, %v3154
        %v3210 = vpack.c.b16 %v3157, %v3156
        %v3211 = vpack.c.b16 %v3159, %v3158
        %v3212 = vpack.c.b16 %v3161, %v3160
        %v3213 = vpack.c.b16 %v3163, %v3162
        %v3214 = vpack.c.b16 %v3165, %v3164
        %v3215 = vpack.c.b16 %v3167, %v3166
        %v3216 = vpack.c.b16 %v3169, %v3168
        %v3217 = vpack.c.b16 %v3171, %v3170
        %v3218 = vpack.c.b16 %v3173, %v3172
        %v3219 = vpack.c.b16 %v3175, %v3174
        %v3220 = vpack.c.b16 %v3177, %v3176
        %v3221 = vpack.c.b16 %v3179, %v3178
        %v3222 = vpack.c.b16 %v3181, %v3180
        %v3223 = vpack.c.b16 %v3183, %v3182
        %v3224 = vpack.c.b16 %v3185, %v3184
        %v3225 = vpack.c.b16 %v3187, %v3186
        %v3226 = vpack.c.b16 %v3189, %v3188
        %v3227 = vpack.c.b16 %v3191, %v3190
        %v3265 = vsel %vm1447, %v1915, 0
        %v3268 = vsel %vm1447, %v1955, 0
        %v3271 = vsel %vm1447, %v1995, 0
        %v3274 = vsel %vm1447, %v2035, 0
        %v3277 = vsel %vm1447, %v2068, 0
        %v3280 = vsel %vm1447, %v2100, 0
        %v3283 = vsel %vm1447, %v2132, 0
        %v3286 = vsel %vm1447, %v2164, 0
        %v3289 = vsel %vm1447, %v2196, 0
        %v3292 = vsel %vm1447, %v2228, 0
        %v3295 = vsel %vm1447, %v2260, 0
        %v3298 = vsel %vm1447, %v2292, 0
        %v3301 = vsel %vm1447, %v2324, 0
        %v3304 = vsel %vm1447, %v2356, 0
        %v3307 = vsel %vm1447, %v2388, 0
        %v3310 = vsel %vm1447, %v2420, 0
        %v3313 = vsel %vm1447, %v2452, 0
        %v3316 = vsel %vm1447, %v2484, 0
        %v3319 = vsel %vm1447, %v2516, 0
        %v3322 = vsel %vm1447, %v2548, 0
        %v3325 = vsel %vm1447, %v2580, 0
        %v3328 = vsel %vm1447, %v2612, 0
        %v3331 = vsel %vm1447, %v2644, 0
        %v3334 = vsel %vm1447, %v2676, 0
        %v3337 = vsel %vm1447, %v2708, 0
        %v3340 = vsel %vm1447, %v2740, 0
        %v3343 = vsel %vm1447, %v2772, 0
        %v3346 = vsel %vm1447, %v2805, 0
        %v3349 = vsel %vm1447, %v2838, 0
        %v3352 = vsel %vm1447, %v2871, 0
        %v3355 = vsel %vm1447, %v2904, 0
        %v3358 = vsel %vm1447, %v2945, 0
        %3360 = vmatpush.bf16.msra.mxu0 %v3199
        %3361 = vmatpush.bf16.msra.mxu0 %v3198
        %3362 = vmatpush.bf16.msra.mxu0 %v3197
        %3363 = vmatpush.bf16.msra.mxu0 %v3196
        %3364 = vmatpush.bf16.msra.mxu0 %v3195
        %3365 = vmatpush.bf16.msra.mxu0 %v3194
        %3366 = vmatpush.bf16.msra.mxu0 %v3193
        %3367 = vmatpush.bf16.msra.mxu0 %v3192
        %3368 = vmatmul.bf16.gmra.mxu0 %v1854
        %v3369 = vpop.f32.mrf.mxu0
        %v3370 = vadd.f32 %v1837, %v3369
        %v3371 = vpop.f32.mrf.mxu0
        %v3372 = vadd.f32 %v1837, %v3371
        %3373 = vmatmul.bf16.gmra.mxu0 %v1923
        %v3374 = vpop.f32.mrf.mxu0
        %v3375 = vadd.f32 %v1837, %v3374
        %v3376 = vpop.f32.mrf.mxu0
        %v3377 = vadd.f32 %v1837, %v3376
        %3378 = vmatmul.bf16.gmra.mxu0 %v1963
        %v3379 = vpop.f32.mrf.mxu0
        %v3380 = vadd.f32 %v1837, %v3379
        %v3381 = vpop.f32.mrf.mxu0
        %v3382 = vadd.f32 %v1837, %v3381
        %3383 = vmatmul.bf16.gmra.mxu0 %v2003
        %v3384 = vpop.f32.mrf.mxu0
        %v3385 = vadd.f32 %v1837, %v3384
        %v3386 = vpop.f32.mrf.mxu0
        %v3387 = vadd.f32 %v1837, %v3386
        %3388 = vmatmul.bf16.gmra.mxu0 %v2036
        %v3389 = vpop.f32.mrf.mxu0
        %v3390 = vadd.f32 %v1837, %v3389
        %v3391 = vpop.f32.mrf.mxu0
        %v3392 = vadd.f32 %v1837, %v3391
        %3393 = vmatmul.bf16.gmra.mxu0 %v1947
        %v3394 = vpop.f32.mrf.mxu0
        %v3395 = vadd.f32 %v1837, %v3394
        %v3396 = vpop.f32.mrf.mxu0
        %v3397 = vadd.f32 %v1837, %v3396
        %3398 = vmatmul.bf16.gmra.mxu0 %v1987
        %v3399 = vpop.f32.mrf.mxu0
        %v3400 = vadd.f32 %v1837, %v3399
        %v3401 = vpop.f32.mrf.mxu0
        %v3402 = vadd.f32 %v1837, %v3401
        %3403 = vmatmul.bf16.gmra.mxu0 %v2027
        %v3404 = vpop.f32.mrf.mxu0
        %v3405 = vadd.f32 %v1837, %v3404
        %v3406 = vpop.f32.mrf.mxu0
        %v3407 = vadd.f32 %v1837, %v3406
        %3408 = vmatmul.bf16.gmra.mxu0 %v2060
        %v3409 = vpop.f32.mrf.mxu0
        %v3410 = vadd.f32 %v1837, %v3409
        %v3411 = vpop.f32.mrf.mxu0
        %v3412 = vadd.f32 %v1837, %v3411
        %3413 = vmatmul.bf16.gmra.mxu0 %v2092
        %v3414 = vpop.f32.mrf.mxu0
        %v3415 = vadd.f32 %v1837, %v3414
        %v3416 = vpop.f32.mrf.mxu0
        %v3417 = vadd.f32 %v1837, %v3416
        %3418 = vmatmul.bf16.gmra.mxu0 %v2124
        %v3419 = vpop.f32.mrf.mxu0
        %v3420 = vadd.f32 %v1837, %v3419
        %v3421 = vpop.f32.mrf.mxu0
        %v3422 = vadd.f32 %v1837, %v3421
        %3423 = vmatmul.bf16.gmra.mxu0 %v2156
        %v3424 = vpop.f32.mrf.mxu0
        %v3425 = vadd.f32 %v1837, %v3424
        %v3426 = vpop.f32.mrf.mxu0
        %v3427 = vadd.f32 %v1837, %v3426
        %3428 = vmatmul.bf16.gmra.mxu0 %v2188
        %v3429 = vpop.f32.mrf.mxu0
        %v3430 = vadd.f32 %v1837, %v3429
        %v3431 = vpop.f32.mrf.mxu0
        %v3432 = vadd.f32 %v1837, %v3431
        %3433 = vmatmul.bf16.gmra.mxu0 %v2220
        %v3434 = vpop.f32.mrf.mxu0
        %v3435 = vadd.f32 %v1837, %v3434
        %v3436 = vpop.f32.mrf.mxu0
        %v3437 = vadd.f32 %v1837, %v3436
        %3438 = vmatmul.bf16.gmra.mxu0 %v2252
        %v3439 = vpop.f32.mrf.mxu0
        %v3440 = vadd.f32 %v1837, %v3439
        %v3441 = vpop.f32.mrf.mxu0
        %v3442 = vadd.f32 %v1837, %v3441
        %3443 = vmatmul.bf16.gmra.mxu0 %v2284
        %v3444 = vpop.f32.mrf.mxu0
        %v3445 = vadd.f32 %v1837, %v3444
        %v3446 = vpop.f32.mrf.mxu0
        %v3447 = vadd.f32 %v1837, %v3446
        %3448 = vmatmul.bf16.gmra.mxu0 %v2316
        %v3449 = vpop.f32.mrf.mxu0
        %v3450 = vadd.f32 %v1837, %v3449
        %v3451 = vpop.f32.mrf.mxu0
        %v3452 = vadd.f32 %v1837, %v3451
        %3453 = vmatmul.bf16.gmra.mxu0 %v2348
        %v3454 = vpop.f32.mrf.mxu0
        %v3455 = vadd.f32 %v1837, %v3454
        %v3456 = vpop.f32.mrf.mxu0
        %v3457 = vadd.f32 %v1837, %v3456
        %3458 = vmatmul.bf16.gmra.mxu0 %v2380
        %v3459 = vpop.f32.mrf.mxu0
        %v3460 = vadd.f32 %v1837, %v3459
        %v3461 = vpop.f32.mrf.mxu0
        %v3462 = vadd.f32 %v1837, %v3461
        %3463 = vmatmul.bf16.gmra.mxu0 %v2412
        %v3464 = vpop.f32.mrf.mxu0
        %v3465 = vadd.f32 %v1837, %v3464
        %v3466 = vpop.f32.mrf.mxu0
        %v3467 = vadd.f32 %v1837, %v3466
        %3468 = vmatmul.bf16.gmra.mxu0 %v2444
        %v3469 = vpop.f32.mrf.mxu0
        %v3470 = vadd.f32 %v1837, %v3469
        %v3471 = vpop.f32.mrf.mxu0
        %v3472 = vadd.f32 %v1837, %v3471
        %3473 = vmatmul.bf16.gmra.mxu0 %v2476
        %v3474 = vpop.f32.mrf.mxu0
        %v3475 = vadd.f32 %v1837, %v3474
        %v3476 = vpop.f32.mrf.mxu0
        %v3477 = vadd.f32 %v1837, %v3476
        %3478 = vmatmul.bf16.gmra.mxu0 %v2508
        %v3479 = vpop.f32.mrf.mxu0
        %v3480 = vadd.f32 %v1837, %v3479
        %v3481 = vpop.f32.mrf.mxu0
        %v3482 = vadd.f32 %v1837, %v3481
        %3483 = vmatmul.bf16.gmra.mxu0 %v2540
        %v3484 = vpop.f32.mrf.mxu0
        %v3485 = vadd.f32 %v1837, %v3484
        %v3486 = vpop.f32.mrf.mxu0
        %v3487 = vadd.f32 %v1837, %v3486
        %3488 = vmatmul.bf16.gmra.mxu0 %v2572
        %v3489 = vpop.f32.mrf.mxu0
        %v3490 = vadd.f32 %v1837, %v3489
        %v3491 = vpop.f32.mrf.mxu0
        %v3492 = vadd.f32 %v1837, %v3491
        %3493 = vmatmul.bf16.gmra.mxu0 %v2604
        %v3494 = vpop.f32.mrf.mxu0
        %v3495 = vadd.f32 %v1837, %v3494
        %v3496 = vpop.f32.mrf.mxu0
        %v3497 = vadd.f32 %v1837, %v3496
        %3498 = vmatmul.bf16.gmra.mxu0 %v2636
        %v3499 = vpop.f32.mrf.mxu0
        %v3500 = vadd.f32 %v1837, %v3499
        %v3501 = vpop.f32.mrf.mxu0
        %v3502 = vadd.f32 %v1837, %v3501
        %3503 = vmatmul.bf16.gmra.mxu0 %v2668
        %v3504 = vpop.f32.mrf.mxu0
        %v3505 = vadd.f32 %v1837, %v3504
        %v3506 = vpop.f32.mrf.mxu0
        %v3507 = vadd.f32 %v1837, %v3506
        %3508 = vmatmul.bf16.gmra.mxu0 %v2700
        %v3509 = vpop.f32.mrf.mxu0
        %v3510 = vadd.f32 %v1837, %v3509
        %v3511 = vpop.f32.mrf.mxu0
        %v3512 = vadd.f32 %v1837, %v3511
        %3513 = vmatmul.bf16.gmra.mxu0 %v2732
        %v3514 = vpop.f32.mrf.mxu0
        %v3515 = vadd.f32 %v1837, %v3514
        %v3516 = vpop.f32.mrf.mxu0
        %v3517 = vadd.f32 %v1837, %v3516
        %3518 = vmatmul.bf16.gmra.mxu0 %v2764
        %v3519 = vpop.f32.mrf.mxu0
        %v3520 = vadd.f32 %v1837, %v3519
        %v3521 = vpop.f32.mrf.mxu0
        %v3522 = vadd.f32 %v1837, %v3521
        %3523 = vmatmul.bf16.gmra.mxu0 %v2912
        %v3524 = vpop.f32.mrf.mxu0
        %v3525 = vadd.f32 %v1837, %v3524
        %v3526 = vpop.f32.mrf.mxu0
        %v3527 = vadd.f32 %v1837, %v3526
        %3528 = vdwg.mxu0
        %3529 = vmatpush.bf16.msra.mxu0 %v3207
        %3530 = vmatpush.bf16.msra.mxu0 %v3206
        %3531 = vmatpush.bf16.msra.mxu0 %v3205
        %3532 = vmatpush.bf16.msra.mxu0 %v3204
        %3533 = vmatpush.bf16.msra.mxu0 %v3203
        %3534 = vmatpush.bf16.msra.mxu0 %v3202
        %3535 = vmatpush.bf16.msra.mxu0 %v3201
        %3536 = vmatpush.bf16.msra.mxu0 %v3200
        %3537 = vmatmul.bf16.gmra.mxu0 %v1869
        %v3538 = vpop.f32.mrf.mxu0
        %v3539 = vadd.f32 %v3370, %v3538
        %v3540 = vpop.f32.mrf.mxu0
        %v3541 = vadd.f32 %v3372, %v3540
        %3542 = vmatmul.bf16.gmra.mxu0 %v1931
        %v3543 = vpop.f32.mrf.mxu0
        %v3544 = vadd.f32 %v3375, %v3543
        %v3545 = vpop.f32.mrf.mxu0
        %v3546 = vadd.f32 %v3377, %v3545
        %3547 = vmatmul.bf16.gmra.mxu0 %v1971
        %v3548 = vpop.f32.mrf.mxu0
        %v3549 = vadd.f32 %v3380, %v3548
        %v3550 = vpop.f32.mrf.mxu0
        %v3551 = vadd.f32 %v3382, %v3550
        %3552 = vmatmul.bf16.gmra.mxu0 %v2011
        %v3553 = vpop.f32.mrf.mxu0
        %v3554 = vadd.f32 %v3385, %v3553
        %v3555 = vpop.f32.mrf.mxu0
        %v3556 = vadd.f32 %v3387, %v3555
        %3557 = vmatmul.bf16.gmra.mxu0 %v2044
        %v3558 = vpop.f32.mrf.mxu0
        %v3559 = vadd.f32 %v3390, %v3558
        %v3560 = vpop.f32.mrf.mxu0
        %v3561 = vadd.f32 %v3392, %v3560
        %3562 = vmatmul.bf16.gmra.mxu0 %v2076
        %v3563 = vpop.f32.mrf.mxu0
        %v3564 = vadd.f32 %v3395, %v3563
        %v3565 = vpop.f32.mrf.mxu0
        %v3566 = vadd.f32 %v3397, %v3565
        %3567 = vmatmul.bf16.gmra.mxu0 %v2108
        %v3568 = vpop.f32.mrf.mxu0
        %v3569 = vadd.f32 %v3400, %v3568
        %v3570 = vpop.f32.mrf.mxu0
        %v3571 = vadd.f32 %v3402, %v3570
        %3572 = vmatmul.bf16.gmra.mxu0 %v2140
        %v3573 = vpop.f32.mrf.mxu0
        %v3574 = vadd.f32 %v3405, %v3573
        %v3575 = vpop.f32.mrf.mxu0
        %v3576 = vadd.f32 %v3407, %v3575
        %3577 = vmatmul.bf16.gmra.mxu0 %v2172
        %v3578 = vpop.f32.mrf.mxu0
        %v3579 = vadd.f32 %v3410, %v3578
        %v3580 = vpop.f32.mrf.mxu0
        %v3581 = vadd.f32 %v3412, %v3580
        %3582 = vmatmul.bf16.gmra.mxu0 %v2204
        %v3583 = vpop.f32.mrf.mxu0
        %v3584 = vadd.f32 %v3415, %v3583
        %v3585 = vpop.f32.mrf.mxu0
        %v3586 = vadd.f32 %v3417, %v3585
        %3587 = vmatmul.bf16.gmra.mxu0 %v2236
        %v3588 = vpop.f32.mrf.mxu0
        %v3589 = vadd.f32 %v3420, %v3588
        %v3590 = vpop.f32.mrf.mxu0
        %v3591 = vadd.f32 %v3422, %v3590
        %3592 = vmatmul.bf16.gmra.mxu0 %v2268
        %v3593 = vpop.f32.mrf.mxu0
        %v3594 = vadd.f32 %v3425, %v3593
        %v3595 = vpop.f32.mrf.mxu0
        %v3596 = vadd.f32 %v3427, %v3595
        %3597 = vmatmul.bf16.gmra.mxu0 %v2300
        %v3598 = vpop.f32.mrf.mxu0
        %v3599 = vadd.f32 %v3430, %v3598
        %v3600 = vpop.f32.mrf.mxu0
        %v3601 = vadd.f32 %v3432, %v3600
        %3602 = vmatmul.bf16.gmra.mxu0 %v2332
        %v3603 = vpop.f32.mrf.mxu0
        %v3604 = vadd.f32 %v3435, %v3603
        %v3605 = vpop.f32.mrf.mxu0
        %v3606 = vadd.f32 %v3437, %v3605
        %3607 = vmatmul.bf16.gmra.mxu0 %v2364
        %v3608 = vpop.f32.mrf.mxu0
        %v3609 = vadd.f32 %v3440, %v3608
        %v3610 = vpop.f32.mrf.mxu0
        %v3611 = vadd.f32 %v3442, %v3610
        %3612 = vmatmul.bf16.gmra.mxu0 %v2396
        %v3613 = vpop.f32.mrf.mxu0
        %v3614 = vadd.f32 %v3445, %v3613
        %v3615 = vpop.f32.mrf.mxu0
        %v3616 = vadd.f32 %v3447, %v3615
        %3617 = vmatmul.bf16.gmra.mxu0 %v2428
        %v3618 = vpop.f32.mrf.mxu0
        %v3619 = vadd.f32 %v3450, %v3618
        %v3620 = vpop.f32.mrf.mxu0
        %v3621 = vadd.f32 %v3452, %v3620
        %3622 = vmatmul.bf16.gmra.mxu0 %v2460
        %v3623 = vpop.f32.mrf.mxu0
        %v3624 = vadd.f32 %v3455, %v3623
        %v3625 = vpop.f32.mrf.mxu0
        %v3626 = vadd.f32 %v3457, %v3625
        %3627 = vmatmul.bf16.gmra.mxu0 %v2492
        %v3628 = vpop.f32.mrf.mxu0
        %v3629 = vadd.f32 %v3460, %v3628
        %v3630 = vpop.f32.mrf.mxu0
        %v3631 = vadd.f32 %v3462, %v3630
        %3632 = vmatmul.bf16.gmra.mxu0 %v2524
        %v3633 = vpop.f32.mrf.mxu0
        %v3634 = vadd.f32 %v3465, %v3633
        %v3635 = vpop.f32.mrf.mxu0
        %v3636 = vadd.f32 %v3467, %v3635
        %3637 = vmatmul.bf16.gmra.mxu0 %v2556
        %v3638 = vpop.f32.mrf.mxu0
        %v3639 = vadd.f32 %v3470, %v3638
        %v3640 = vpop.f32.mrf.mxu0
        %v3641 = vadd.f32 %v3472, %v3640
        %3642 = vmatmul.bf16.gmra.mxu0 %v2588
        %v3643 = vpop.f32.mrf.mxu0
        %v3644 = vadd.f32 %v3475, %v3643
        %v3645 = vpop.f32.mrf.mxu0
        %v3646 = vadd.f32 %v3477, %v3645
        %3647 = vmatmul.bf16.gmra.mxu0 %v2620
        %v3648 = vpop.f32.mrf.mxu0
        %v3649 = vadd.f32 %v3480, %v3648
        %v3650 = vpop.f32.mrf.mxu0
        %v3651 = vadd.f32 %v3482, %v3650
        %3652 = vmatmul.bf16.gmra.mxu0 %v2652
        %v3653 = vpop.f32.mrf.mxu0
        %v3654 = vadd.f32 %v3485, %v3653
        %v3655 = vpop.f32.mrf.mxu0
        %v3656 = vadd.f32 %v3487, %v3655
        %3657 = vmatmul.bf16.gmra.mxu0 %v2684
        %v3658 = vpop.f32.mrf.mxu0
        %v3659 = vadd.f32 %v3490, %v3658
        %v3660 = vpop.f32.mrf.mxu0
        %v3661 = vadd.f32 %v3492, %v3660
        %3662 = vmatmul.bf16.gmra.mxu0 %v2716
        %v3663 = vpop.f32.mrf.mxu0
        %v3664 = vadd.f32 %v3495, %v3663
        %v3665 = vpop.f32.mrf.mxu0
        %v3666 = vadd.f32 %v3497, %v3665
        %3667 = vmatmul.bf16.gmra.mxu0 %v2748
        %v3668 = vpop.f32.mrf.mxu0
        %v3669 = vadd.f32 %v3500, %v3668
        %v3670 = vpop.f32.mrf.mxu0
        %v3671 = vadd.f32 %v3502, %v3670
        %3672 = vmatmul.bf16.gmra.mxu0 %v2780
        %v3673 = vpop.f32.mrf.mxu0
        %v3674 = vadd.f32 %v3505, %v3673
        %v3675 = vpop.f32.mrf.mxu0
        %v3676 = vadd.f32 %v3507, %v3675
        %3677 = vmatmul.bf16.gmra.mxu0 %v2813
        %v3678 = vpop.f32.mrf.mxu0
        %v3679 = vadd.f32 %v3510, %v3678
        %v3680 = vpop.f32.mrf.mxu0
        %v3681 = vadd.f32 %v3512, %v3680
        %3682 = vmatmul.bf16.gmra.mxu0 %v2846
        %v3683 = vpop.f32.mrf.mxu0
        %v3684 = vadd.f32 %v3515, %v3683
        %v3685 = vpop.f32.mrf.mxu0
        %v3686 = vadd.f32 %v3517, %v3685
        %3687 = vmatmul.bf16.gmra.mxu0 %v2879
        %v3688 = vpop.f32.mrf.mxu0
        %v3689 = vadd.f32 %v3520, %v3688
        %v3690 = vpop.f32.mrf.mxu0
        %v3691 = vadd.f32 %v3522, %v3690
        %3692 = vmatmul.bf16.gmra.mxu0 %v2920
        %v3693 = vpop.f32.mrf.mxu0
        %v3694 = vadd.f32 %v3525, %v3693
        %v3695 = vpop.f32.mrf.mxu0
        %v3696 = vadd.f32 %v3527, %v3695
        %3697 = vdwg.mxu0
        %3698 = vmatpush.bf16.msra.mxu0 %v3215
        %3699 = vmatpush.bf16.msra.mxu0 %v3214
        %3700 = vmatpush.bf16.msra.mxu0 %v3213
        %3701 = vmatpush.bf16.msra.mxu0 %v3212
        %3702 = vmatpush.bf16.msra.mxu0 %v3211
        %3703 = vmatpush.bf16.msra.mxu0 %v3210
        %3704 = vmatpush.bf16.msra.mxu0 %v3209
        %3705 = vmatpush.bf16.msra.mxu0 %v3208
        %3706 = vmatmul.bf16.gmra.mxu0 %v1884
        %v3707 = vpop.f32.mrf.mxu0
        %v3708 = vadd.f32 %v3539, %v3707
        %v3709 = vpop.f32.mrf.mxu0
        %v3710 = vadd.f32 %v3541, %v3709
        %3711 = vmatmul.bf16.gmra.mxu0 %v1939
        %v3712 = vpop.f32.mrf.mxu0
        %v3713 = vadd.f32 %v3544, %v3712
        %v3714 = vpop.f32.mrf.mxu0
        %v3715 = vadd.f32 %v3546, %v3714
        %3716 = vmatmul.bf16.gmra.mxu0 %v1979
        %v3717 = vpop.f32.mrf.mxu0
        %v3718 = vadd.f32 %v3549, %v3717
        %v3719 = vpop.f32.mrf.mxu0
        %v3720 = vadd.f32 %v3551, %v3719
        %3721 = vmatmul.bf16.gmra.mxu0 %v2019
        %v3722 = vpop.f32.mrf.mxu0
        %v3723 = vadd.f32 %v3554, %v3722
        %v3724 = vpop.f32.mrf.mxu0
        %v3725 = vadd.f32 %v3556, %v3724
        %3726 = vmatmul.bf16.gmra.mxu0 %v2052
        %v3727 = vpop.f32.mrf.mxu0
        %v3728 = vadd.f32 %v3559, %v3727
        %v3729 = vpop.f32.mrf.mxu0
        %v3730 = vadd.f32 %v3561, %v3729
        %3731 = vmatmul.bf16.gmra.mxu0 %v2084
        %v3732 = vpop.f32.mrf.mxu0
        %v3733 = vadd.f32 %v3564, %v3732
        %v3734 = vpop.f32.mrf.mxu0
        %v3735 = vadd.f32 %v3566, %v3734
        %3736 = vmatmul.bf16.gmra.mxu0 %v2116
        %v3737 = vpop.f32.mrf.mxu0
        %v3738 = vadd.f32 %v3569, %v3737
        %v3739 = vpop.f32.mrf.mxu0
        %v3740 = vadd.f32 %v3571, %v3739
        %3741 = vmatmul.bf16.gmra.mxu0 %v2148
        %v3742 = vpop.f32.mrf.mxu0
        %v3743 = vadd.f32 %v3574, %v3742
        %v3744 = vpop.f32.mrf.mxu0
        %v3745 = vadd.f32 %v3576, %v3744
        %3746 = vmatmul.bf16.gmra.mxu0 %v2180
        %v3747 = vpop.f32.mrf.mxu0
        %v3748 = vadd.f32 %v3579, %v3747
        %v3749 = vpop.f32.mrf.mxu0
        %v3750 = vadd.f32 %v3581, %v3749
        %3751 = vmatmul.bf16.gmra.mxu0 %v2212
        %v3752 = vpop.f32.mrf.mxu0
        %v3753 = vadd.f32 %v3584, %v3752
        %v3754 = vpop.f32.mrf.mxu0
        %v3755 = vadd.f32 %v3586, %v3754
        %3756 = vmatmul.bf16.gmra.mxu0 %v2244
        %v3757 = vpop.f32.mrf.mxu0
        %v3758 = vadd.f32 %v3589, %v3757
        %v3759 = vpop.f32.mrf.mxu0
        %v3760 = vadd.f32 %v3591, %v3759
        %3761 = vmatmul.bf16.gmra.mxu0 %v2276
        %v3762 = vpop.f32.mrf.mxu0
        %v3763 = vadd.f32 %v3594, %v3762
        %v3764 = vpop.f32.mrf.mxu0
        %v3765 = vadd.f32 %v3596, %v3764
        %3766 = vmatmul.bf16.gmra.mxu0 %v2308
        %v3767 = vpop.f32.mrf.mxu0
        %v3768 = vadd.f32 %v3599, %v3767
        %v3769 = vpop.f32.mrf.mxu0
        %v3770 = vadd.f32 %v3601, %v3769
        %3771 = vmatmul.bf16.gmra.mxu0 %v2340
        %v3772 = vpop.f32.mrf.mxu0
        %v3773 = vadd.f32 %v3604, %v3772
        %v3774 = vpop.f32.mrf.mxu0
        %v3775 = vadd.f32 %v3606, %v3774
        %3776 = vmatmul.bf16.gmra.mxu0 %v2372
        %v3777 = vpop.f32.mrf.mxu0
        %v3778 = vadd.f32 %v3609, %v3777
        %v3779 = vpop.f32.mrf.mxu0
        %v3780 = vadd.f32 %v3611, %v3779
        %3781 = vmatmul.bf16.gmra.mxu0 %v2404
        %v3782 = vpop.f32.mrf.mxu0
        %v3783 = vadd.f32 %v3614, %v3782
        %v3784 = vpop.f32.mrf.mxu0
        %v3785 = vadd.f32 %v3616, %v3784
        %3786 = vmatmul.bf16.gmra.mxu0 %v2436
        %v3787 = vpop.f32.mrf.mxu0
        %v3788 = vadd.f32 %v3619, %v3787
        %v3789 = vpop.f32.mrf.mxu0
        %v3790 = vadd.f32 %v3621, %v3789
        %3791 = vmatmul.bf16.gmra.mxu0 %v2468
        %v3792 = vpop.f32.mrf.mxu0
        %v3793 = vadd.f32 %v3624, %v3792
        %v3794 = vpop.f32.mrf.mxu0
        %v3795 = vadd.f32 %v3626, %v3794
        %3796 = vmatmul.bf16.gmra.mxu0 %v2500
        %v3797 = vpop.f32.mrf.mxu0
        %v3798 = vadd.f32 %v3629, %v3797
        %v3799 = vpop.f32.mrf.mxu0
        %v3800 = vadd.f32 %v3631, %v3799
        %3801 = vmatmul.bf16.gmra.mxu0 %v2532
        %v3802 = vpop.f32.mrf.mxu0
        %v3803 = vadd.f32 %v3634, %v3802
        %v3804 = vpop.f32.mrf.mxu0
        %v3805 = vadd.f32 %v3636, %v3804
        %3806 = vmatmul.bf16.gmra.mxu0 %v2564
        %v3807 = vpop.f32.mrf.mxu0
        %v3808 = vadd.f32 %v3639, %v3807
        %v3809 = vpop.f32.mrf.mxu0
        %v3810 = vadd.f32 %v3641, %v3809
        %3811 = vmatmul.bf16.gmra.mxu0 %v2596
        %v3812 = vpop.f32.mrf.mxu0
        %v3813 = vadd.f32 %v3644, %v3812
        %v3814 = vpop.f32.mrf.mxu0
        %v3815 = vadd.f32 %v3646, %v3814
        %3816 = vmatmul.bf16.gmra.mxu0 %v2628
        %v3817 = vpop.f32.mrf.mxu0
        %v3818 = vadd.f32 %v3649, %v3817
        %v3819 = vpop.f32.mrf.mxu0
        %v3820 = vadd.f32 %v3651, %v3819
        %3821 = vmatmul.bf16.gmra.mxu0 %v2660
        %v3822 = vpop.f32.mrf.mxu0
        %v3823 = vadd.f32 %v3654, %v3822
        %v3824 = vpop.f32.mrf.mxu0
        %v3825 = vadd.f32 %v3656, %v3824
        %3826 = vmatmul.bf16.gmra.mxu0 %v2692
        %v3827 = vpop.f32.mrf.mxu0
        %v3828 = vadd.f32 %v3659, %v3827
        %v3829 = vpop.f32.mrf.mxu0
        %v3830 = vadd.f32 %v3661, %v3829
        %3831 = vmatmul.bf16.gmra.mxu0 %v2724
        %v3832 = vpop.f32.mrf.mxu0
        %v3833 = vadd.f32 %v3664, %v3832
        %v3834 = vpop.f32.mrf.mxu0
        %v3835 = vadd.f32 %v3666, %v3834
        %3836 = vmatmul.bf16.gmra.mxu0 %v2756
        %v3837 = vpop.f32.mrf.mxu0
        %v3838 = vadd.f32 %v3669, %v3837
        %v3839 = vpop.f32.mrf.mxu0
        %v3840 = vadd.f32 %v3671, %v3839
        %3841 = vmatmul.bf16.gmra.mxu0 %v2788
        %v3842 = vpop.f32.mrf.mxu0
        %v3843 = vadd.f32 %v3674, %v3842
        %v3844 = vpop.f32.mrf.mxu0
        %v3845 = vadd.f32 %v3676, %v3844
        %3846 = vmatmul.bf16.gmra.mxu0 %v2821
        %v3847 = vpop.f32.mrf.mxu0
        %v3848 = vadd.f32 %v3679, %v3847
        %v3849 = vpop.f32.mrf.mxu0
        %v3850 = vadd.f32 %v3681, %v3849
        %3851 = vmatmul.bf16.gmra.mxu0 %v2854
        %v3852 = vpop.f32.mrf.mxu0
        %v3853 = vadd.f32 %v3684, %v3852
        %v3854 = vpop.f32.mrf.mxu0
        %v3855 = vadd.f32 %v3686, %v3854
        %3856 = vmatmul.bf16.gmra.mxu0 %v2887
        %v3857 = vpop.f32.mrf.mxu0
        %v3858 = vadd.f32 %v3689, %v3857
        %v3859 = vpop.f32.mrf.mxu0
        %v3860 = vadd.f32 %v3691, %v3859
        %3861 = vmatmul.bf16.gmra.mxu0 %v2928
        %v3862 = vpop.f32.mrf.mxu0
        %v3863 = vadd.f32 %v3694, %v3862
        %v3864 = vpop.f32.mrf.mxu0
        %v3865 = vadd.f32 %v3696, %v3864
        %3866 = vdwg.mxu0
        %3867 = vmatpush.bf16.msra.mxu0 %v3223
        %3868 = vmatpush.bf16.msra.mxu0 %v3222
        %3869 = vmatpush.bf16.msra.mxu0 %v3221
        %3870 = vmatpush.bf16.msra.mxu0 %v3220
        %3871 = vmatpush.bf16.msra.mxu0 %v3219
        %3872 = vmatpush.bf16.msra.mxu0 %v3218
        %3873 = vmatpush.bf16.msra.mxu0 %v3217
        %3874 = vmatpush.bf16.msra.mxu0 %v3216
        %3875 = vmatmul.bf16.gmra.mxu0 %v1899
        %v3876 = vpop.f32.mrf.mxu0
        %v3877 = vadd.f32 %v3708, %v3876
        %v3878 = vpop.f32.mrf.mxu0
        %v3879 = vadd.f32 %v3710, %v3878
        %3880 = vmatmul.bf16.gmra.mxu0 %v1947
        %v3881 = vpop.f32.mrf.mxu0
        %v3882 = vadd.f32 %v3713, %v3881
        %v3883 = vpop.f32.mrf.mxu0
        %v3884 = vadd.f32 %v3715, %v3883
        %3885 = vmatmul.bf16.gmra.mxu0 %v1987
        %v3886 = vpop.f32.mrf.mxu0
        %v3887 = vadd.f32 %v3718, %v3886
        %v3888 = vpop.f32.mrf.mxu0
        %v3889 = vadd.f32 %v3720, %v3888
        %3890 = vmatmul.bf16.gmra.mxu0 %v2027
        %v3891 = vpop.f32.mrf.mxu0
        %v3892 = vadd.f32 %v3723, %v3891
        %v3893 = vpop.f32.mrf.mxu0
        %v3894 = vadd.f32 %v3725, %v3893
        %3895 = vmatmul.bf16.gmra.mxu0 %v2060
        %v3896 = vpop.f32.mrf.mxu0
        %v3897 = vadd.f32 %v3728, %v3896
        %v3898 = vpop.f32.mrf.mxu0
        %v3899 = vadd.f32 %v3730, %v3898
        %3900 = vmatmul.bf16.gmra.mxu0 %v2092
        %v3901 = vpop.f32.mrf.mxu0
        %v3902 = vadd.f32 %v3733, %v3901
        %v3903 = vpop.f32.mrf.mxu0
        %v3904 = vadd.f32 %v3735, %v3903
        %3905 = vmatmul.bf16.gmra.mxu0 %v2124
        %v3906 = vpop.f32.mrf.mxu0
        %v3907 = vadd.f32 %v3738, %v3906
        %v3908 = vpop.f32.mrf.mxu0
        %v3909 = vadd.f32 %v3740, %v3908
        %3910 = vmatmul.bf16.gmra.mxu0 %v2156
        %v3911 = vpop.f32.mrf.mxu0
        %v3912 = vadd.f32 %v3743, %v3911
        %v3913 = vpop.f32.mrf.mxu0
        %v3914 = vadd.f32 %v3745, %v3913
        %3915 = vmatmul.bf16.gmra.mxu0 %v2188
        %v3916 = vpop.f32.mrf.mxu0
        %v3917 = vadd.f32 %v3748, %v3916
        %v3918 = vpop.f32.mrf.mxu0
        %v3919 = vadd.f32 %v3750, %v3918
        %3920 = vmatmul.bf16.gmra.mxu0 %v2220
        %v3921 = vpop.f32.mrf.mxu0
        %v3922 = vadd.f32 %v3753, %v3921
        %v3923 = vpop.f32.mrf.mxu0
        %v3924 = vadd.f32 %v3755, %v3923
        %3925 = vmatmul.bf16.gmra.mxu0 %v2252
        %v3926 = vpop.f32.mrf.mxu0
        %v3927 = vadd.f32 %v3758, %v3926
        %v3928 = vpop.f32.mrf.mxu0
        %v3929 = vadd.f32 %v3760, %v3928
        %3930 = vmatmul.bf16.gmra.mxu0 %v2284
        %v3931 = vpop.f32.mrf.mxu0
        %v3932 = vadd.f32 %v3763, %v3931
        %v3933 = vpop.f32.mrf.mxu0
        %v3934 = vadd.f32 %v3765, %v3933
        %3935 = vmatmul.bf16.gmra.mxu0 %v2316
        %v3936 = vpop.f32.mrf.mxu0
        %v3937 = vadd.f32 %v3768, %v3936
        %v3938 = vpop.f32.mrf.mxu0
        %v3939 = vadd.f32 %v3770, %v3938
        %3940 = vmatmul.bf16.gmra.mxu0 %v2348
        %v3941 = vpop.f32.mrf.mxu0
        %v3942 = vadd.f32 %v3773, %v3941
        %v3943 = vpop.f32.mrf.mxu0
        %v3944 = vadd.f32 %v3775, %v3943
        %3945 = vmatmul.bf16.gmra.mxu0 %v2380
        %v3946 = vpop.f32.mrf.mxu0
        %v3947 = vadd.f32 %v3778, %v3946
        %v3948 = vpop.f32.mrf.mxu0
        %v3949 = vadd.f32 %v3780, %v3948
        %3950 = vmatmul.bf16.gmra.mxu0 %v2412
        %v3951 = vpop.f32.mrf.mxu0
        %v3952 = vadd.f32 %v3783, %v3951
        %v3953 = vpop.f32.mrf.mxu0
        %v3954 = vadd.f32 %v3785, %v3953
        %3955 = vmatmul.bf16.gmra.mxu0 %v2444
        %v3956 = vpop.f32.mrf.mxu0
        %v3957 = vadd.f32 %v3788, %v3956
        %v3958 = vpop.f32.mrf.mxu0
        %v3959 = vadd.f32 %v3790, %v3958
        %3960 = vmatmul.bf16.gmra.mxu0 %v2476
        %v3961 = vpop.f32.mrf.mxu0
        %v3962 = vadd.f32 %v3793, %v3961
        %v3963 = vpop.f32.mrf.mxu0
        %v3964 = vadd.f32 %v3795, %v3963
        %3965 = vmatmul.bf16.gmra.mxu0 %v2508
        %v3966 = vpop.f32.mrf.mxu0
        %v3967 = vadd.f32 %v3798, %v3966
        %v3968 = vpop.f32.mrf.mxu0
        %v3969 = vadd.f32 %v3800, %v3968
        %3970 = vmatmul.bf16.gmra.mxu0 %v2540
        %v3971 = vpop.f32.mrf.mxu0
        %v3972 = vadd.f32 %v3803, %v3971
        %v3973 = vpop.f32.mrf.mxu0
        %v3974 = vadd.f32 %v3805, %v3973
        %3975 = vmatmul.bf16.gmra.mxu0 %v2572
        %v3976 = vpop.f32.mrf.mxu0
        %v3977 = vadd.f32 %v3808, %v3976
        %v3978 = vpop.f32.mrf.mxu0
        %v3979 = vadd.f32 %v3810, %v3978
        %3980 = vmatmul.bf16.gmra.mxu0 %v2604
        %v3981 = vpop.f32.mrf.mxu0
        %v3982 = vadd.f32 %v3813, %v3981
        %v3983 = vpop.f32.mrf.mxu0
        %v3984 = vadd.f32 %v3815, %v3983
        %3985 = vmatmul.bf16.gmra.mxu0 %v2636
        %v3986 = vpop.f32.mrf.mxu0
        %v3987 = vadd.f32 %v3818, %v3986
        %v3988 = vpop.f32.mrf.mxu0
        %v3989 = vadd.f32 %v3820, %v3988
        %3990 = vmatmul.bf16.gmra.mxu0 %v2668
        %v3991 = vpop.f32.mrf.mxu0
        %v3992 = vadd.f32 %v3823, %v3991
        %v3993 = vpop.f32.mrf.mxu0
        %v3994 = vadd.f32 %v3825, %v3993
        %3995 = vmatmul.bf16.gmra.mxu0 %v2700
        %v3996 = vpop.f32.mrf.mxu0
        %v3997 = vadd.f32 %v3828, %v3996
        %v3998 = vpop.f32.mrf.mxu0
        %v3999 = vadd.f32 %v3830, %v3998
        %4000 = vmatmul.bf16.gmra.mxu0 %v2732
        %v4001 = vpop.f32.mrf.mxu0
        %v4002 = vadd.f32 %v3833, %v4001
        %v4003 = vpop.f32.mrf.mxu0
        %v4004 = vadd.f32 %v3835, %v4003
        %4005 = vmatmul.bf16.gmra.mxu0 %v2764
        %v4006 = vpop.f32.mrf.mxu0
        %v4007 = vadd.f32 %v3838, %v4006
        %v4008 = vpop.f32.mrf.mxu0
        %v4009 = vadd.f32 %v3840, %v4008
        %4010 = vmatmul.bf16.gmra.mxu0 %v2796
        %v4011 = vpop.f32.mrf.mxu0
        %v4012 = vadd.f32 %v3843, %v4011
        %v4013 = vpop.f32.mrf.mxu0
        %v4014 = vadd.f32 %v3845, %v4013
        %4015 = vmatmul.bf16.gmra.mxu0 %v2829
        %v4016 = vpop.f32.mrf.mxu0
        %v4017 = vadd.f32 %v3848, %v4016
        %v4018 = vpop.f32.mrf.mxu0
        %v4019 = vadd.f32 %v3850, %v4018
        %4020 = vmatmul.bf16.gmra.mxu0 %v2862
        %v4021 = vpop.f32.mrf.mxu0
        %v4022 = vadd.f32 %v3853, %v4021
        %v4023 = vpop.f32.mrf.mxu0
        %v4024 = vadd.f32 %v3855, %v4023
        %4025 = vmatmul.bf16.gmra.mxu0 %v2895
        %v4026 = vpop.f32.mrf.mxu0
        %v4027 = vadd.f32 %v3858, %v4026
        %v4028 = vpop.f32.mrf.mxu0
        %v4029 = vadd.f32 %v3860, %v4028
        %4030 = vmatmul.bf16.gmra.mxu0 %v2936
        %v4031 = vpop.f32.mrf.mxu0
        %v4032 = vadd.f32 %v3863, %v4031
        %v4033 = vpop.f32.mrf.mxu0
        %v4034 = vadd.f32 %v3865, %v4033
        %4035 = vdwg.mxu0
        %4036 = vmatpush.bf16.msra.mxu0 0
        %4037 = vmatpush.bf16.msra.mxu0 0
        %4038 = vmatpush.bf16.msra.mxu0 0
        %4039 = vmatpush.bf16.msra.mxu0 0
        %4040 = vmatpush.bf16.msra.mxu0 %v3227
        %4041 = vmatpush.bf16.msra.mxu0 %v3226
        %4042 = vmatpush.bf16.msra.mxu0 %v3225
        %4043 = vmatpush.bf16.msra.mxu0 %v3224
        %4044 = vmatmul.bf16.gmra.mxu0 %v3265
        %v4045 = vpop.f32.mrf.mxu0
        %v4046 = vadd.f32 %v3877, %v4045
        %v4047 = vpop.f32.mrf.mxu0
        %v4048 = vadd.f32 %v3879, %v4047
        %4049 = vmatmul.bf16.gmra.mxu0 %v3268
        %v4050 = vpop.f32.mrf.mxu0
        %v4051 = vadd.f32 %v3882, %v4050
        %v4052 = vpop.f32.mrf.mxu0
        %v4053 = vadd.f32 %v3884, %v4052
        %4054 = vmatmul.bf16.gmra.mxu0 %v3271
        %v4055 = vpop.f32.mrf.mxu0
        %v4056 = vadd.f32 %v3887, %v4055
        %v4057 = vpop.f32.mrf.mxu0
        %v4058 = vadd.f32 %v3889, %v4057
        %4059 = vmatmul.bf16.gmra.mxu0 %v3274
        %v4060 = vpop.f32.mrf.mxu0
        %v4061 = vadd.f32 %v3892, %v4060
        %v4062 = vpop.f32.mrf.mxu0
        %v4063 = vadd.f32 %v3894, %v4062
        %4064 = vmatmul.bf16.gmra.mxu0 %v3277
        %v4065 = vpop.f32.mrf.mxu0
        %v4066 = vadd.f32 %v3897, %v4065
        %v4067 = vpop.f32.mrf.mxu0
        %v4068 = vadd.f32 %v3899, %v4067
        %4069 = vmatmul.bf16.gmra.mxu0 %v3280
        %v4070 = vpop.f32.mrf.mxu0
        %v4071 = vadd.f32 %v3902, %v4070
        %v4072 = vpop.f32.mrf.mxu0
        %v4073 = vadd.f32 %v3904, %v4072
        %4074 = vmatmul.bf16.gmra.mxu0 %v3283
        %v4075 = vpop.f32.mrf.mxu0
        %v4076 = vadd.f32 %v3907, %v4075
        %v4077 = vpop.f32.mrf.mxu0
        %v4078 = vadd.f32 %v3909, %v4077
        %4079 = vmatmul.bf16.gmra.mxu0 %v3286
        %v4080 = vpop.f32.mrf.mxu0
        %v4081 = vadd.f32 %v3912, %v4080
        %v4082 = vpop.f32.mrf.mxu0
        %v4083 = vadd.f32 %v3914, %v4082
        %4084 = vmatmul.bf16.gmra.mxu0 %v3289
        %v4085 = vpop.f32.mrf.mxu0
        %v4086 = vadd.f32 %v3917, %v4085
        %v4087 = vpop.f32.mrf.mxu0
        %v4088 = vadd.f32 %v3919, %v4087
        %4089 = vmatmul.bf16.gmra.mxu0 %v3292
        %v4090 = vpop.f32.mrf.mxu0
        %v4091 = vadd.f32 %v3922, %v4090
        %v4092 = vpop.f32.mrf.mxu0
        %v4093 = vadd.f32 %v3924, %v4092
        %4094 = vmatmul.bf16.gmra.mxu0 %v3295
        %v4095 = vpop.f32.mrf.mxu0
        %v4096 = vadd.f32 %v3927, %v4095
        %v4097 = vpop.f32.mrf.mxu0
        %v4098 = vadd.f32 %v3929, %v4097
        %4099 = vmatmul.bf16.gmra.mxu0 %v3298
        %v4100 = vpop.f32.mrf.mxu0
        %v4101 = vadd.f32 %v3932, %v4100
        %v4102 = vpop.f32.mrf.mxu0
        %v4103 = vadd.f32 %v3934, %v4102
        %4104 = vmatmul.bf16.gmra.mxu0 %v3301
        %v4105 = vpop.f32.mrf.mxu0
        %v4106 = vadd.f32 %v3937, %v4105
        %v4107 = vpop.f32.mrf.mxu0
        %v4108 = vadd.f32 %v3939, %v4107
        %4109 = vmatmul.bf16.gmra.mxu0 %v3304
        %v4110 = vpop.f32.mrf.mxu0
        %v4111 = vadd.f32 %v3942, %v4110
        %v4112 = vpop.f32.mrf.mxu0
        %v4113 = vadd.f32 %v3944, %v4112
        %4114 = vmatmul.bf16.gmra.mxu0 %v3307
        %v4115 = vpop.f32.mrf.mxu0
        %v4116 = vadd.f32 %v3947, %v4115
        %v4117 = vpop.f32.mrf.mxu0
        %v4118 = vadd.f32 %v3949, %v4117
        %4119 = vmatmul.bf16.gmra.mxu0 %v3310
        %v4120 = vpop.f32.mrf.mxu0
        %v4121 = vadd.f32 %v3952, %v4120
        %v4122 = vpop.f32.mrf.mxu0
        %v4123 = vadd.f32 %v3954, %v4122
        %4124 = vmatmul.bf16.gmra.mxu0 %v3313
        %v4125 = vpop.f32.mrf.mxu0
        %v4126 = vadd.f32 %v3957, %v4125
        %v4127 = vpop.f32.mrf.mxu0
        %v4128 = vadd.f32 %v3959, %v4127
        %4129 = vmatmul.bf16.gmra.mxu0 %v3316
        %v4130 = vpop.f32.mrf.mxu0
        %v4131 = vadd.f32 %v3962, %v4130
        %v4132 = vpop.f32.mrf.mxu0
        %v4133 = vadd.f32 %v3964, %v4132
        %4134 = vmatmul.bf16.gmra.mxu0 %v3319
        %v4135 = vpop.f32.mrf.mxu0
        %v4136 = vadd.f32 %v3967, %v4135
        %v4137 = vpop.f32.mrf.mxu0
        %v4138 = vadd.f32 %v3969, %v4137
        %4139 = vmatmul.bf16.gmra.mxu0 %v3322
        %v4140 = vpop.f32.mrf.mxu0
        %v4141 = vadd.f32 %v3972, %v4140
        %v4142 = vpop.f32.mrf.mxu0
        %v4143 = vadd.f32 %v3974, %v4142
        %4144 = vmatmul.bf16.gmra.mxu0 %v3325
        %v4145 = vpop.f32.mrf.mxu0
        %v4146 = vadd.f32 %v3977, %v4145
        %v4147 = vpop.f32.mrf.mxu0
        %v4148 = vadd.f32 %v3979, %v4147
        %4149 = vmatmul.bf16.gmra.mxu0 %v3328
        %v4150 = vpop.f32.mrf.mxu0
        %v4151 = vadd.f32 %v3982, %v4150
        %v4152 = vpop.f32.mrf.mxu0
        %v4153 = vadd.f32 %v3984, %v4152
        %4154 = vmatmul.bf16.gmra.mxu0 %v3331
        %v4155 = vpop.f32.mrf.mxu0
        %v4156 = vadd.f32 %v3987, %v4155
        %v4157 = vpop.f32.mrf.mxu0
        %v4158 = vadd.f32 %v3989, %v4157
        %4159 = vmatmul.bf16.gmra.mxu0 %v3334
        %v4160 = vpop.f32.mrf.mxu0
        %v4161 = vadd.f32 %v3992, %v4160
        %v4162 = vpop.f32.mrf.mxu0
        %v4163 = vadd.f32 %v3994, %v4162
        %4164 = vmatmul.bf16.gmra.mxu0 %v3337
        %v4165 = vpop.f32.mrf.mxu0
        %v4166 = vadd.f32 %v3997, %v4165
        %v4167 = vpop.f32.mrf.mxu0
        %v4168 = vadd.f32 %v3999, %v4167
        %4169 = vmatmul.bf16.gmra.mxu0 %v3340
        %v4170 = vpop.f32.mrf.mxu0
        %v4171 = vadd.f32 %v4002, %v4170
        %v4172 = vpop.f32.mrf.mxu0
        %v4173 = vadd.f32 %v4004, %v4172
        %4174 = vmatmul.bf16.gmra.mxu0 %v3343
        %v4175 = vpop.f32.mrf.mxu0
        %v4176 = vadd.f32 %v4007, %v4175
        %v4177 = vpop.f32.mrf.mxu0
        %v4178 = vadd.f32 %v4009, %v4177
        %4179 = vmatmul.bf16.gmra.mxu0 %v3346
        %v4180 = vpop.f32.mrf.mxu0
        %v4181 = vadd.f32 %v4012, %v4180
        %v4182 = vpop.f32.mrf.mxu0
        %v4183 = vadd.f32 %v4014, %v4182
        %4184 = vmatmul.bf16.gmra.mxu0 %v3349
        %v4185 = vpop.f32.mrf.mxu0
        %v4186 = vadd.f32 %v4017, %v4185
        %v4187 = vpop.f32.mrf.mxu0
        %v4188 = vadd.f32 %v4019, %v4187
        %4189 = vmatmul.bf16.gmra.mxu0 %v3352
        %v4190 = vpop.f32.mrf.mxu0
        %v4191 = vadd.f32 %v4022, %v4190
        %v4192 = vpop.f32.mrf.mxu0
        %v4193 = vadd.f32 %v4024, %v4192
        %4194 = vmatmul.bf16.gmra.mxu0 %v3355
        %v4195 = vpop.f32.mrf.mxu0
        %v4196 = vadd.f32 %v4027, %v4195
        %v4197 = vpop.f32.mrf.mxu0
        %v4198 = vadd.f32 %v4029, %v4197
        %4199 = vmatmul.bf16.gmra.mxu0 %v3358
        %v4200 = vpop.f32.mrf.mxu0
        %v4201 = vadd.f32 %v4032, %v4200
        %v4202 = vpop.f32.mrf.mxu0
        %v4203 = vadd.f32 %v4034, %v4202
        %4204 = vdwg.mxu0
        %v4205 = vmax.f32 %v4046, 0.0
        %v4206 = vmax.f32 %v4048, 0.0
        %v4207 = vmax.f32 %v4051, 0.0
        %v4208 = vmax.f32 %v4053, 0.0
        %v4209 = vmax.f32 %v4056, 0.0
        %v4210 = vmax.f32 %v4058, 0.0
        %v4211 = vmax.f32 %v4061, 0.0
        %v4212 = vmax.f32 %v4063, 0.0
        %v4213 = vmax.f32 %v4066, 0.0
        %v4214 = vmax.f32 %v4068, 0.0
        %v4215 = vmax.f32 %v4071, 0.0
        %v4216 = vmax.f32 %v4073, 0.0
        %v4217 = vmax.f32 %v4076, 0.0
        %v4218 = vmax.f32 %v4078, 0.0
        %v4219 = vmax.f32 %v4081, 0.0
        %v4220 = vmax.f32 %v4083, 0.0
        %v4221 = vmax.f32 %v4086, 0.0
        %v4222 = vmax.f32 %v4088, 0.0
        %v4223 = vmax.f32 %v4091, 0.0
        %v4224 = vmax.f32 %v4093, 0.0
        %v4225 = vmax.f32 %v4096, 0.0
        %v4226 = vmax.f32 %v4098, 0.0
        %v4227 = vmax.f32 %v4101, 0.0
        %v4228 = vmax.f32 %v4103, 0.0
        %v4229 = vmax.f32 %v4106, 0.0
        %v4230 = vmax.f32 %v4108, 0.0
        %v4231 = vmax.f32 %v4111, 0.0
        %v4232 = vmax.f32 %v4113, 0.0
        %v4233 = vmax.f32 %v4116, 0.0
        %v4234 = vmax.f32 %v4118, 0.0
        %v4235 = vmax.f32 %v4121, 0.0
        %v4236 = vmax.f32 %v4123, 0.0
        %v4237 = vmax.f32 %v4126, 0.0
        %v4238 = vmax.f32 %v4128, 0.0
        %v4239 = vmax.f32 %v4131, 0.0
        %v4240 = vmax.f32 %v4133, 0.0
        %v4241 = vmax.f32 %v4136, 0.0
        %v4242 = vmax.f32 %v4138, 0.0
        %v4243 = vmax.f32 %v4141, 0.0
        %v4244 = vmax.f32 %v4143, 0.0
        %v4245 = vmax.f32 %v4146, 0.0
        %v4246 = vmax.f32 %v4148, 0.0
        %v4247 = vmax.f32 %v4151, 0.0
        %v4248 = vmax.f32 %v4153, 0.0
        %v4249 = vmax.f32 %v4156, 0.0
        %v4250 = vmax.f32 %v4158, 0.0
        %v4251 = vmax.f32 %v4161, 0.0
        %v4252 = vmax.f32 %v4163, 0.0
        %v4253 = vmax.f32 %v4166, 0.0
        %v4254 = vmax.f32 %v4168, 0.0
        %v4255 = vmax.f32 %v4171, 0.0
        %v4256 = vmax.f32 %v4173, 0.0
        %v4257 = vmax.f32 %v4176, 0.0
        %v4258 = vmax.f32 %v4178, 0.0
        %v4259 = vmax.f32 %v4181, 0.0
        %v4260 = vmax.f32 %v4183, 0.0
        %v4261 = vmax.f32 %v4186, 0.0
        %v4262 = vmax.f32 %v4188, 0.0
        %v4263 = vmax.f32 %v4191, 0.0
        %v4264 = vmax.f32 %v4193, 0.0
        %v4265 = vmax.f32 %v4196, 0.0
        %v4266 = vmax.f32 %v4198, 0.0
        %v4267 = vmax.f32 %v4201, 0.0
        %v4268 = vmax.f32 %v4203, 0.0
        %v4269 = vsel %vm254, 1, 0
        %v4270 = vsel %vm255, 1, 0
        %v4271 = vsel %vm256, 1, 0
        %v4272 = vsel %vm257, 1, 0
        %vm4273 = vcmp.eq.s32.totalorder %v4269, 1
        %vm4274 = vcmp.eq.s32.totalorder %v4270, 1
        %vm4275 = vcmp.eq.s32.totalorder %v4271, 1
        %vm4276 = vcmp.eq.s32.totalorder %v4272, 1
        %v4277 = vsel %vm4273, %v4205, 0.0
        %v4278 = vsel %vm4274, %v4206, 0.0
        %v4279 = vsel %vm4275, %v4207, 0.0
        %v4280 = vsel %vm4276, %v4208, 0.0
        %v4281 = vsel %vm4273, %v4209, 0.0
        %v4282 = vsel %vm4274, %v4210, 0.0
        %v4283 = vsel %vm4275, %v4211, 0.0
        %v4284 = vsel %vm4276, %v4212, 0.0
        %v4285 = vsel %vm4273, %v4213, 0.0
        %v4286 = vsel %vm4274, %v4214, 0.0
        %v4287 = vsel %vm4275, %v4215, 0.0
        %v4288 = vsel %vm4276, %v4216, 0.0
        %v4289 = vsel %vm4273, %v4217, 0.0
        %v4290 = vsel %vm4274, %v4218, 0.0
        %v4291 = vsel %vm4275, %v4219, 0.0
        %v4292 = vsel %vm4276, %v4220, 0.0
        %v4293 = vsel %vm4273, %v4221, 0.0
        %v4294 = vsel %vm4274, %v4222, 0.0
        %v4295 = vsel %vm4275, %v4223, 0.0
        %v4296 = vsel %vm4276, %v4224, 0.0
        %v4297 = vsel %vm4273, %v4225, 0.0
        %v4298 = vsel %vm4274, %v4226, 0.0
        %v4299 = vsel %vm4275, %v4227, 0.0
        %v4300 = vsel %vm4276, %v4228, 0.0
        %v4301 = vsel %vm4273, %v4229, 0.0
        %v4302 = vsel %vm4274, %v4230, 0.0
        %v4303 = vsel %vm4275, %v4231, 0.0
        %v4304 = vsel %vm4276, %v4232, 0.0
        %v4305 = vsel %vm4273, %v4233, 0.0
        %v4306 = vsel %vm4274, %v4234, 0.0
        %v4307 = vsel %vm4275, %v4235, 0.0
        %v4308 = vsel %vm4276, %v4236, 0.0
        %v4309 = vsel %vm4273, %v4237, 0.0
        %v4310 = vsel %vm4274, %v4238, 0.0
        %v4311 = vsel %vm4275, %v4239, 0.0
        %v4312 = vsel %vm4276, %v4240, 0.0
        %v4313 = vsel %vm4273, %v4241, 0.0
        %v4314 = vsel %vm4274, %v4242, 0.0
        %v4315 = vsel %vm4275, %v4243, 0.0
        %v4316 = vsel %vm4276, %v4244, 0.0
        %v4317 = vsel %vm4273, %v4245, 0.0
        %v4318 = vsel %vm4274, %v4246, 0.0
        %v4319 = vsel %vm4275, %v4247, 0.0
        %v4320 = vsel %vm4276, %v4248, 0.0
        %v4321 = vsel %vm4273, %v4249, 0.0
        %v4322 = vsel %vm4274, %v4250, 0.0
        %v4323 = vsel %vm4275, %v4251, 0.0
        %v4324 = vsel %vm4276, %v4252, 0.0
        %v4325 = vsel %vm4273, %v4253, 0.0
        %v4326 = vsel %vm4274, %v4254, 0.0
        %v4327 = vsel %vm4275, %v4255, 0.0
        %v4328 = vsel %vm4276, %v4256, 0.0
        %v4329 = vsel %vm4273, %v4257, 0.0
        %v4330 = vsel %vm4274, %v4258, 0.0
        %v4331 = vsel %vm4275, %v4259, 0.0
        %v4332 = vsel %vm4276, %v4260, 0.0
        %v4333 = vsel %vm4273, %v4261, 0.0
        %v4334 = vsel %vm4274, %v4262, 0.0
        %v4335 = vsel %vm4275, %v4263, 0.0
        %v4336 = vsel %vm4276, %v4264, 0.0
        %v4337 = vsel %vm4273, %v4265, 0.0
        %v4338 = vsel %vm4274, %v4266, 0.0
        %v4339 = vsel %vm4275, %v4267, 0.0
        %v4340 = vsel %vm4276, %v4268, 0.0
        %v4341 = vpack.c.bf16 %v4277, %v4277
        %v4342 = vpack.c.bf16 %v4278, %v4278
        %v4343 = vpack.c.bf16 %v4279, %v4279
        %v4344 = vpack.c.bf16 %v4280, %v4280
        %v4345 = vpack.c.bf16 %v4281, %v4281
        %v4346 = vpack.c.bf16 %v4282, %v4282
        %v4347 = vpack.c.bf16 %v4283, %v4283
        %v4348 = vpack.c.bf16 %v4284, %v4284
        %v4349 = vpack.c.bf16 %v4285, %v4285
        %v4350 = vpack.c.bf16 %v4286, %v4286
        %v4351 = vpack.c.bf16 %v4287, %v4287
        %v4352 = vpack.c.bf16 %v4288, %v4288
        %v4353 = vpack.c.bf16 %v4289, %v4289
        %v4354 = vpack.c.bf16 %v4290, %v4290
        %v4355 = vpack.c.bf16 %v4291, %v4291
        %v4356 = vpack.c.bf16 %v4292, %v4292
        %v4357 = vpack.c.bf16 %v4293, %v4293
        %v4358 = vpack.c.bf16 %v4294, %v4294
        %v4359 = vpack.c.bf16 %v4295, %v4295
        %v4360 = vpack.c.bf16 %v4296, %v4296
        %v4361 = vpack.c.bf16 %v4297, %v4297
        %v4362 = vpack.c.bf16 %v4298, %v4298
        %v4363 = vpack.c.bf16 %v4299, %v4299
        %v4364 = vpack.c.bf16 %v4300, %v4300
        %v4365 = vpack.c.bf16 %v4301, %v4301
        %v4366 = vpack.c.bf16 %v4302, %v4302
        %v4367 = vpack.c.bf16 %v4303, %v4303
        %v4368 = vpack.c.bf16 %v4304, %v4304
        %v4369 = vpack.c.bf16 %v4305, %v4305
        %v4370 = vpack.c.bf16 %v4306, %v4306
        %v4371 = vpack.c.bf16 %v4307, %v4307
        %v4372 = vpack.c.bf16 %v4308, %v4308
        %v4373 = vpack.c.bf16 %v4309, %v4309
        %v4374 = vpack.c.bf16 %v4310, %v4310
        %v4375 = vpack.c.bf16 %v4311, %v4311
        %v4376 = vpack.c.bf16 %v4312, %v4312
        %v4377 = vpack.c.bf16 %v4313, %v4313
        %v4378 = vpack.c.bf16 %v4314, %v4314
        %v4379 = vpack.c.bf16 %v4315, %v4315
        %v4380 = vpack.c.bf16 %v4316, %v4316
        %v4381 = vpack.c.bf16 %v4317, %v4317
        %v4382 = vpack.c.bf16 %v4318, %v4318
        %v4383 = vpack.c.bf16 %v4319, %v4319
        %v4384 = vpack.c.bf16 %v4320, %v4320
        %v4385 = vpack.c.bf16 %v4321, %v4321
        %v4386 = vpack.c.bf16 %v4322, %v4322
        %v4387 = vpack.c.bf16 %v4323, %v4323
        %v4388 = vpack.c.bf16 %v4324, %v4324
        %v4389 = vpack.c.bf16 %v4325, %v4325
        %v4390 = vpack.c.bf16 %v4326, %v4326
        %v4391 = vpack.c.bf16 %v4327, %v4327
        %v4392 = vpack.c.bf16 %v4328, %v4328
        %v4393 = vpack.c.bf16 %v4329, %v4329
        %v4394 = vpack.c.bf16 %v4330, %v4330
        %v4395 = vpack.c.bf16 %v4331, %v4331
        %v4396 = vpack.c.bf16 %v4332, %v4332
        %v4397 = vpack.c.bf16 %v4333, %v4333
        %v4398 = vpack.c.bf16 %v4334, %v4334
        %v4399 = vpack.c.bf16 %v4335, %v4335
        %v4400 = vpack.c.bf16 %v4336, %v4336
        %v4401 = vpack.c.bf16 %v4337, %v4337
        %v4402 = vpack.c.bf16 %v4338, %v4338
        %v4403 = vpack.c.bf16 %v4339, %v4339
        %v4404 = vpack.c.bf16 %v4340, %v4340
        %4405 = vst.msk [vmem:[#allocation3 + $0x18] sm:$0xf] %vm224, %v4341
        %4406 = vst.msk [vmem:[#allocation3 + $0x1c] sm:$0xf] %vm224, %v4342
        %4407 = vst.msk [vmem:[#allocation3 + $0x20] sm:$0xf] %vm224, %v4343
        %4408 = vst.msk [vmem:[#allocation3 + $0x24] sm:$0xf] %vm224, %v4344
        %4409 = vst.msk [vmem:[#allocation3 + $0x28] sm:$0xf] %vm224, %v4345
        %4410 = vst.msk [vmem:[#allocation3 + $0x2c] sm:$0xf] %vm224, %v4346
        %4411 = vst.msk [vmem:[#allocation3 + $0x30] sm:$0xf] %vm224, %v4347
        %4412 = vst.msk [vmem:[#allocation3 + $0x34] sm:$0xf] %vm224, %v4348
        %4413 = vst.msk [vmem:[#allocation3 + $0x38] sm:$0xf] %vm224, %v4349
        %4414 = vst.msk [vmem:[#allocation3 + $0x3c] sm:$0xf] %vm224, %v4350
        %4415 = vst.msk [vmem:[#allocation3 + $0x40] sm:$0xf] %vm224, %v4351
        %4416 = vst.msk [vmem:[#allocation3 + $0x44] sm:$0xf] %vm224, %v4352
        %4417 = vst.msk [vmem:[#allocation3 + $0x48] sm:$0xf] %vm224, %v4353
        %4418 = vst.msk [vmem:[#allocation3 + $0x4c] sm:$0xf] %vm224, %v4354
        %4419 = vst.msk [vmem:[#allocation3 + $0x50] sm:$0xf] %vm224, %v4355
        %4420 = vst.msk [vmem:[#allocation3 + $0x54] sm:$0xf] %vm224, %v4356
        %4421 = vst.msk [vmem:[#allocation3 + $0x58] sm:$0xf] %vm224, %v4357
        %4422 = vst.msk [vmem:[#allocation3 + $0x5c] sm:$0xf] %vm224, %v4358
        %4423 = vst.msk [vmem:[#allocation3 + $0x60] sm:$0xf] %vm224, %v4359
        %4424 = vst.msk [vmem:[#allocation3 + $0x64] sm:$0xf] %vm224, %v4360
        %4425 = vst.msk [vmem:[#allocation3 + $0x68] sm:$0xf] %vm224, %v4361
        %4426 = vst.msk [vmem:[#allocation3 + $0x6c] sm:$0xf] %vm224, %v4362
        %4427 = vst.msk [vmem:[#allocation3 + $0x70] sm:$0xf] %vm224, %v4363
        %4428 = vst.msk [vmem:[#allocation3 + $0x74] sm:$0xf] %vm224, %v4364
        %4429 = vst.msk [vmem:[#allocation3 + $0x78] sm:$0xf] %vm224, %v4365
        %4430 = vst.msk [vmem:[#allocation3 + $0x7c] sm:$0xf] %vm224, %v4366
        %4431 = vst.msk [vmem:[#allocation3 + $0x80] sm:$0xf] %vm224, %v4367
        %4432 = vst.msk [vmem:[#allocation3 + $0x84] sm:$0xf] %vm224, %v4368
        %4433 = vst.msk [vmem:[#allocation3 + $0x88] sm:$0xf] %vm224, %v4369
        %4434 = vst.msk [vmem:[#allocation3 + $0x8c] sm:$0xf] %vm224, %v4370
        %4435 = vst.msk [vmem:[#allocation3 + $0x90] sm:$0xf] %vm224, %v4371
        %4436 = vst.msk [vmem:[#allocation3 + $0x94] sm:$0xf] %vm224, %v4372
        %4437 = vst.msk [vmem:[#allocation3 + $0x98] sm:$0xf] %vm224, %v4373
        %4438 = vst.msk [vmem:[#allocation3 + $0x9c] sm:$0xf] %vm224, %v4374
        %4439 = vst.msk [vmem:[#allocation3 + $0xa0] sm:$0xf] %vm224, %v4375
        %4440 = vst.msk [vmem:[#allocation3 + $0xa4] sm:$0xf] %vm224, %v4376
        %4441 = vst.msk [vmem:[#allocation3 + $0xa8] sm:$0xf] %vm224, %v4377
        %4442 = vst.msk [vmem:[#allocation3 + $0xac] sm:$0xf] %vm224, %v4378
        %4443 = vst.msk [vmem:[#allocation3 + $0xb0] sm:$0xf] %vm224, %v4379
        %4444 = vst.msk [vmem:[#allocation3 + $0xb4] sm:$0xf] %vm224, %v4380
        %4445 = vst.msk [vmem:[#allocation3 + $0xb8] sm:$0xf] %vm224, %v4381
        %4446 = vst.msk [vmem:[#allocation3 + $0xbc] sm:$0xf] %vm224, %v4382
        %4447 = vst.msk [vmem:[#allocation3 + $0xc0] sm:$0xf] %vm224, %v4383
        %4448 = vst.msk [vmem:[#allocation3 + $0xc4] sm:$0xf] %vm224, %v4384
        %4449 = vst.msk [vmem:[#allocation3 + $0xc8] sm:$0xf] %vm224, %v4385
        %4450 = vst.msk [vmem:[#allocation3 + $0xcc] sm:$0xf] %vm224, %v4386
        %4451 = vst.msk [vmem:[#allocation3 + $0xd0] sm:$0xf] %vm224, %v4387
        %4452 = vst.msk [vmem:[#allocation3 + $0xd4] sm:$0xf] %vm224, %v4388
        %4453 = vst.msk [vmem:[#allocation3 + $0xd8] sm:$0xf] %vm224, %v4389
        %4454 = vst.msk [vmem:[#allocation3 + $0xdc] sm:$0xf] %vm224, %v4390
        %4455 = vst.msk [vmem:[#allocation3 + $0xe0] sm:$0xf] %vm224, %v4391
        %4456 = vst.msk [vmem:[#allocation3 + $0xe4] sm:$0xf] %vm224, %v4392
        %4457 = vst.msk [vmem:[#allocation3 + $0xe8] sm:$0xf] %vm224, %v4393
        %4458 = vst.msk [vmem:[#allocation3 + $0xec] sm:$0xf] %vm224, %v4394
        %4459 = vst.msk [vmem:[#allocation3 + $0xf0] sm:$0xf] %vm224, %v4395
        %4460 = vst.msk [vmem:[#allocation3 + $0xf4] sm:$0xf] %vm224, %v4396
        %4461 = vst.msk [vmem:[#allocation3 + $0xf8] sm:$0xf] %vm224, %v4397
        %4462 = vst.msk [vmem:[#allocation3 + $0xfc] sm:$0xf] %vm224, %v4398
        %4463 = vst.msk [vmem:[#allocation3 + $0x100] sm:$0xf] %vm224, %v4399
        %4464 = vst.msk [vmem:[#allocation3 + $0x104] sm:$0xf] %vm224, %v4400
        %4465 = vst.msk [vmem:[#allocation3 + $0x108] sm:$0xf] %vm224, %v4401
        %4466 = vst.msk [vmem:[#allocation3 + $0x10c] sm:$0xf] %vm224, %v4402
        %4467 = vst.msk [vmem:[#allocation3 + $0x110] sm:$0xf] %vm224, %v4403
        %4468 = vst.msk [vmem:[#allocation3 + $0x114] sm:$0xf] %vm224, %v4404
        %v4469 = vld [vmem:[#allocation3 + $0x4] sm:$0x8]
        %v4470 = vld [vmem:[#allocation3 + $0x8] sm:$0xf]
        %v4471 = vld [vmem:[#allocation3 + $0xc] sm:$0xf]
        %v4472 = vld [vmem:[#allocation3 + $0x10] sm:$0xf]
        %v4473 = vld [vmem:[#allocation3 + $0x14] sm:$0xf]
        %v4474 = vld [vmem:[#allocation3 + $0x18] sm:$0xf]
        %v4475 = vld [vmem:[#allocation3 + $0x1c] sm:$0xf]
        %v4476 = vld [vmem:[#allocation3 + $0x20] sm:$0xf]
        %v4477 = vld [vmem:[#allocation3 + $0x24] sm:$0xf]
        %v4478 = vld [vmem:[#allocation3 + $0x28] sm:$0xf]
        %v4479 = vld [vmem:[#allocation3 + $0x2c] sm:$0xf]
        %v4480 = vld [vmem:[#allocation3 + $0x30] sm:$0xf]
        %v4481 = vld [vmem:[#allocation3 + $0x34] sm:$0xf]
        %v4482 = vld [vmem:[#allocation3 + $0x38] sm:$0xf]
        %v4483 = vld [vmem:[#allocation3 + $0x3c] sm:$0xf]
        %v4484 = vld [vmem:[#allocation3 + $0x40] sm:$0xf]
        %v4485 = vld [vmem:[#allocation3 + $0x44] sm:$0xf]
        %v4486 = vld [vmem:[#allocation3 + $0x48] sm:$0xf]
        %v4487 = vld [vmem:[#allocation3 + $0x4c] sm:$0xf]
        %v4488 = vld [vmem:[#allocation3 + $0x50] sm:$0xf]
        %v4489 = vld [vmem:[#allocation3 + $0x54] sm:$0xf]
        %v4490 = vld [vmem:[#allocation3 + $0x58] sm:$0xf]
        %v4491 = vld [vmem:[#allocation3 + $0x5c] sm:$0xf]
        %v4492 = vld [vmem:[#allocation3 + $0x60] sm:$0xf]
        %v4493 = vld [vmem:[#allocation3 + $0x64] sm:$0xf]
        %v4494 = vld [vmem:[#allocation3 + $0x68] sm:$0xf]
        %v4495 = vld [vmem:[#allocation3 + $0x6c] sm:$0xf]
        %v4496 = vld [vmem:[#allocation3 + $0x70] sm:$0xf]
        %v4497 = vld [vmem:[#allocation3 + $0x74] sm:$0xf]
        %v4498 = vld [vmem:[#allocation3 + $0x78] sm:$0xf]
        %v4499 = vld [vmem:[#allocation3 + $0x7c] sm:$0xf]
        %v4500 = vld [vmem:[#allocation3 + $0x80] sm:$0xf]
        %v4501 = vld [vmem:[#allocation3 + $0x84] sm:$0xf]
        %v4502 = vld [vmem:[#allocation3 + $0x88] sm:$0xf]
        %v4503 = vld [vmem:[#allocation3 + $0x8c] sm:$0xf]
        %v4504 = vld [vmem:[#allocation3 + $0x90] sm:$0xf]
        %v4505 = vld [vmem:[#allocation3 + $0x94] sm:$0xf]
        %v4506 = vld [vmem:[#allocation3 + $0x98] sm:$0xf]
        %v4507 = vld [vmem:[#allocation3 + $0x9c] sm:$0xf]
        %v4508 = vld [vmem:[#allocation3 + $0xa0] sm:$0xf]
        %v4509 = vld [vmem:[#allocation3 + $0xa4] sm:$0xf]
        %v4510 = vld [vmem:[#allocation3 + $0xa8] sm:$0xf]
        %v4511 = vld [vmem:[#allocation3 + $0xac] sm:$0xf]
        %v4512 = vld [vmem:[#allocation3 + $0xb0] sm:$0xf]
        %v4513 = vld [vmem:[#allocation3 + $0xb4] sm:$0xf]
        %v4514 = vld [vmem:[#allocation3 + $0xb8] sm:$0xf]
        %v4515 = vld [vmem:[#allocation3 + $0xbc] sm:$0xf]
        %v4516 = vld [vmem:[#allocation3 + $0xc0] sm:$0xf]
        %v4517 = vld [vmem:[#allocation3 + $0xc4] sm:$0xf]
        %v4518 = vld [vmem:[#allocation3 + $0xc8] sm:$0xf]
        %v4519 = vld [vmem:[#allocation3 + $0xcc] sm:$0xf]
        %v4520 = vld [vmem:[#allocation3 + $0xd0] sm:$0xf]
        %v4521 = vld [vmem:[#allocation3 + $0xd4] sm:$0xf]
        %v4522 = vld [vmem:[#allocation3 + $0xd8] sm:$0xf]
        %v4523 = vld [vmem:[#allocation3 + $0xdc] sm:$0xf]
        %v4524 = vld [vmem:[#allocation3 + $0xe0] sm:$0xf]
        %v4525 = vld [vmem:[#allocation3 + $0xe4] sm:$0xf]
        %v4526 = vld [vmem:[#allocation3 + $0xe8] sm:$0xf]
        %v4527 = vld [vmem:[#allocation3 + $0xec] sm:$0xf]
        %v4528 = vld [vmem:[#allocation3 + $0xf0] sm:$0xf]
        %v4529 = vld [vmem:[#allocation3 + $0xf4] sm:$0xf]
        %v4530 = vld [vmem:[#allocation3 + $0xf8] sm:$0xf]
        %v4531 = vld [vmem:[#allocation3 + $0xfc] sm:$0xf]
        %v4532 = vld [vmem:[#allocation3 + $0x100] sm:$0xf]
        %v4533 = vld [vmem:[#allocation3 + $0x104] sm:$0xf]
        %v4534 = vld [vmem:[#allocation3 + $0x108] sm:$0x1]
        %v4535 = vld [vmem:[#allocation3 + $0x14] sm:$0x8]
        %v4536 = vld [vmem:[#allocation3 + $0x108] sm:$0xf]
        %v4537 = vld [vmem:[#allocation3 + $0x10c] sm:$0xf]
        %v4538 = vld [vmem:[#allocation3 + $0x110] sm:$0xf]
        %v4539 = vld [vmem:[#allocation3 + $0x114] sm:$0xf]
        %v4540 = vld [vmem:[#allocation3 + $0x118] sm:$0x1]
        %v4541 = vld [vmem:[#allocation3 + $0x24] sm:$0x8]
        %v4542 = vld [vmem:[#allocation3 + $0x118] sm:$0xf]
        %v4543 = vld [vmem:[#allocation3 + $0x11c] sm:$0xf]
        %v4544 = vld [vmem:[#allocation3 + $0x120] sm:$0xf]
        %v4545 = vld [vmem:[#allocation3 + $0x124] sm:$0xf]
        %v4546 = vld [vmem:[#allocation3 + $0x128] sm:$0x1]
        %v4612 = vunpack.c.l.b16 %v4469
        %v4613 = vunpack.c.l.b16 %v4470
        %v4614 = vunpack.c.l.b16 %v4471
        %v4615 = vunpack.c.l.b16 %v4472
        %v4616 = vunpack.c.l.b16 %v4473
        %v4617 = vunpack.c.l.b16 %v4474
        %v4618 = vunpack.c.l.b16 %v4475
        %v4619 = vunpack.c.l.b16 %v4476
        %v4620 = vunpack.c.l.b16 %v4477
        %v4621 = vunpack.c.l.b16 %v4478
        %v4622 = vunpack.c.l.b16 %v4479
        %v4623 = vunpack.c.l.b16 %v4480
        %v4624 = vunpack.c.l.b16 %v4481
        %v4625 = vunpack.c.l.b16 %v4482
        %v4626 = vunpack.c.l.b16 %v4483
        %v4627 = vunpack.c.l.b16 %v4484
        %v4628 = vunpack.c.l.b16 %v4485
        %v4629 = vunpack.c.l.b16 %v4486
        %v4630 = vunpack.c.l.b16 %v4487
        %v4631 = vunpack.c.l.b16 %v4488
        %v4632 = vunpack.c.l.b16 %v4489
        %v4633 = vunpack.c.l.b16 %v4490
        %v4634 = vunpack.c.l.b16 %v4491
        %v4635 = vunpack.c.l.b16 %v4492
        %v4636 = vunpack.c.l.b16 %v4493
        %v4637 = vunpack.c.l.b16 %v4494
        %v4638 = vunpack.c.l.b16 %v4495
        %v4639 = vunpack.c.l.b16 %v4496
        %v4640 = vunpack.c.l.b16 %v4497
        %v4641 = vunpack.c.l.b16 %v4498
        %v4642 = vunpack.c.l.b16 %v4499
        %v4643 = vunpack.c.l.b16 %v4500
        %v4644 = vunpack.c.l.b16 %v4501
        %v4645 = vunpack.c.l.b16 %v4502
        %v4646 = vunpack.c.l.b16 %v4503
        %v4647 = vunpack.c.l.b16 %v4504
        %v4648 = vunpack.c.l.b16 %v4505
        %v4649 = vunpack.c.l.b16 %v4506
        %v4650 = vunpack.c.l.b16 %v4507
        %v4651 = vunpack.c.l.b16 %v4508
        %v4652 = vunpack.c.l.b16 %v4509
        %v4653 = vunpack.c.l.b16 %v4510
        %v4654 = vunpack.c.l.b16 %v4511
        %v4655 = vunpack.c.l.b16 %v4512
        %v4656 = vunpack.c.l.b16 %v4513
        %v4657 = vunpack.c.l.b16 %v4514
        %v4658 = vunpack.c.l.b16 %v4515
        %v4659 = vunpack.c.l.b16 %v4516
        %v4660 = vunpack.c.l.b16 %v4517
        %v4661 = vunpack.c.l.b16 %v4518
        %v4662 = vunpack.c.l.b16 %v4519
        %v4663 = vunpack.c.l.b16 %v4520
        %v4664 = vunpack.c.l.b16 %v4521
        %v4665 = vunpack.c.l.b16 %v4522
        %v4666 = vunpack.c.l.b16 %v4523
        %v4667 = vunpack.c.l.b16 %v4524
        %v4668 = vunpack.c.l.b16 %v4525
        %v4669 = vunpack.c.l.b16 %v4526
        %v4670 = vunpack.c.l.b16 %v4527
        %v4671 = vunpack.c.l.b16 %v4528
        %v4672 = vunpack.c.l.b16 %v4529
        %v4673 = vunpack.c.l.b16 %v4530
        %v4674 = vunpack.c.l.b16 %v4531
        %v4675 = vunpack.c.l.b16 %v4532
        %v4676 = vunpack.c.l.b16 %v4533
        %v4677 = vpack.c.b16 %v4613, %v4612
        %v4678 = vpack.c.b16 %v4615, %v4614
        %v4679 = vpack.c.b16 %v4617, %v4616
        %v4680 = vpack.c.b16 %v4619, %v4618
        %v4681 = vpack.c.b16 %v4621, %v4620
        %v4682 = vpack.c.b16 %v4623, %v4622
        %v4683 = vpack.c.b16 %v4625, %v4624
        %v4684 = vpack.c.b16 %v4627, %v4626
        %v4685 = vpack.c.b16 %v4629, %v4628
        %v4686 = vpack.c.b16 %v4631, %v4630
        %v4687 = vpack.c.b16 %v4633, %v4632
        %v4688 = vpack.c.b16 %v4635, %v4634
        %v4689 = vpack.c.b16 %v4637, %v4636
        %v4690 = vpack.c.b16 %v4639, %v4638
        %v4691 = vpack.c.b16 %v4641, %v4640
        %v4692 = vpack.c.b16 %v4643, %v4642
        %v4693 = vpack.c.b16 %v4645, %v4644
        %v4694 = vpack.c.b16 %v4647, %v4646
        %v4695 = vpack.c.b16 %v4649, %v4648
        %v4696 = vpack.c.b16 %v4651, %v4650
        %v4697 = vpack.c.b16 %v4653, %v4652
        %v4698 = vpack.c.b16 %v4655, %v4654
        %v4699 = vpack.c.b16 %v4657, %v4656
        %v4700 = vpack.c.b16 %v4659, %v4658
        %v4701 = vpack.c.b16 %v4661, %v4660
        %v4702 = vpack.c.b16 %v4663, %v4662
        %v4703 = vpack.c.b16 %v4665, %v4664
        %v4704 = vpack.c.b16 %v4667, %v4666
        %v4705 = vpack.c.b16 %v4669, %v4668
        %v4706 = vpack.c.b16 %v4671, %v4670
        %v4707 = vpack.c.b16 %v4673, %v4672
        %v4708 = vpack.c.b16 %v4675, %v4674
        %v4709 = vpack.c.b16 %v4676, %v4676
        %v4710 = vpack.c.b16 %v4614, %v4613
        %v4711 = vpack.c.b16 %v4616, %v4615
        %v4712 = vpack.c.b16 %v4618, %v4617
        %v4713 = vpack.c.b16 %v4620, %v4619
        %v4714 = vpack.c.b16 %v4622, %v4621
        %v4715 = vpack.c.b16 %v4624, %v4623
        %v4716 = vpack.c.b16 %v4626, %v4625
        %v4717 = vpack.c.b16 %v4628, %v4627
        %v4718 = vpack.c.b16 %v4630, %v4629
        %v4719 = vpack.c.b16 %v4632, %v4631
        %v4720 = vpack.c.b16 %v4634, %v4633
        %v4721 = vpack.c.b16 %v4636, %v4635
        %v4722 = vpack.c.b16 %v4638, %v4637
        %v4723 = vpack.c.b16 %v4640, %v4639
        %v4724 = vpack.c.b16 %v4642, %v4641
        %v4725 = vpack.c.b16 %v4644, %v4643
        %v4726 = vpack.c.b16 %v4646, %v4645
        %v4727 = vpack.c.b16 %v4648, %v4647
        %v4728 = vpack.c.b16 %v4650, %v4649
        %v4729 = vpack.c.b16 %v4652, %v4651
        %v4730 = vpack.c.b16 %v4654, %v4653
        %v4731 = vpack.c.b16 %v4656, %v4655
        %v4732 = vpack.c.b16 %v4658, %v4657
        %v4733 = vpack.c.b16 %v4660, %v4659
        %v4734 = vpack.c.b16 %v4662, %v4661
        %v4735 = vpack.c.b16 %v4664, %v4663
        %v4736 = vpack.c.b16 %v4666, %v4665
        %v4737 = vpack.c.b16 %v4668, %v4667
        %v4738 = vpack.c.b16 %v4670, %v4669
        %v4739 = vpack.c.b16 %v4672, %v4671
        %v4740 = vpack.c.b16 %v4674, %v4673
        %v4741 = vpack.c.b16 %v4676, %v4675
        %v4743 = vshrl.u32 %v4710, 16
        %v4745 = vrot.slane %v4743, 4
        %v4746 = vshll.u32 %v4710, 16
        %v4748 = vrot.slane %v4746, 5
        %v4749 = vor.u32 %v4745, %v4748
        %v4751 = vshrl.u32 %v4711, 16
        %v4753 = vrot.slane %v4751, 4
        %v4754 = vshll.u32 %v4711, 16
        %v4756 = vrot.slane %v4754, 5
        %v4757 = vor.u32 %v4753, %v4756
        %v4758 = vsel %vm794, %v4749, %v4757
        %v4760 = vshrl.u32 %v4712, 16
        %v4762 = vrot.slane %v4760, 4
        %v4763 = vshll.u32 %v4712, 16
        %v4765 = vrot.slane %v4763, 5
        %v4766 = vor.u32 %v4762, %v4765
        %v4767 = vsel %vm794, %v4757, %v4766
        %v4769 = vshrl.u32 %v4713, 16
        %v4771 = vrot.slane %v4769, 4
        %v4772 = vshll.u32 %v4713, 16
        %v4774 = vrot.slane %v4772, 5
        %v4775 = vor.u32 %v4771, %v4774
        %v4776 = vsel %vm794, %v4766, %v4775
        %v4778 = vshrl.u32 %v4714, 16
        %v4780 = vrot.slane %v4778, 4
        %v4781 = vshll.u32 %v4714, 16
        %v4783 = vrot.slane %v4781, 5
        %v4784 = vor.u32 %v4780, %v4783
        %v4785 = vsel %vm794, %v4775, %v4784
        %v4787 = vshrl.u32 %v4715, 16
        %v4789 = vrot.slane %v4787, 4
        %v4790 = vshll.u32 %v4715, 16
        %v4792 = vrot.slane %v4790, 5
        %v4793 = vor.u32 %v4789, %v4792
        %v4794 = vsel %vm794, %v4784, %v4793
        %v4796 = vshrl.u32 %v4716, 16
        %v4798 = vrot.slane %v4796, 4
        %v4799 = vshll.u32 %v4716, 16
        %v4801 = vrot.slane %v4799, 5
        %v4802 = vor.u32 %v4798, %v4801
        %v4803 = vsel %vm794, %v4793, %v4802
        %v4805 = vshrl.u32 %v4717, 16
        %v4807 = vrot.slane %v4805, 4
        %v4808 = vshll.u32 %v4717, 16
        %v4810 = vrot.slane %v4808, 5
        %v4811 = vor.u32 %v4807, %v4810
        %v4812 = vsel %vm794, %v4802, %v4811
        %v4814 = vshrl.u32 %v4718, 16
        %v4816 = vrot.slane %v4814, 4
        %v4817 = vshll.u32 %v4718, 16
        %v4819 = vrot.slane %v4817, 5
        %v4820 = vor.u32 %v4816, %v4819
        %v4821 = vsel %vm794, %v4811, %v4820
        %v4823 = vshrl.u32 %v4719, 16
        %v4825 = vrot.slane %v4823, 4
        %v4826 = vshll.u32 %v4719, 16
        %v4828 = vrot.slane %v4826, 5
        %v4829 = vor.u32 %v4825, %v4828
        %v4830 = vsel %vm794, %v4820, %v4829
        %v4832 = vshrl.u32 %v4720, 16
        %v4834 = vrot.slane %v4832, 4
        %v4835 = vshll.u32 %v4720, 16
        %v4837 = vrot.slane %v4835, 5
        %v4838 = vor.u32 %v4834, %v4837
        %v4839 = vsel %vm794, %v4829, %v4838
        %v4841 = vshrl.u32 %v4721, 16
        %v4843 = vrot.slane %v4841, 4
        %v4844 = vshll.u32 %v4721, 16
        %v4846 = vrot.slane %v4844, 5
        %v4847 = vor.u32 %v4843, %v4846
        %v4848 = vsel %vm794, %v4838, %v4847
        %v4850 = vshrl.u32 %v4722, 16
        %v4852 = vrot.slane %v4850, 4
        %v4853 = vshll.u32 %v4722, 16
        %v4855 = vrot.slane %v4853, 5
        %v4856 = vor.u32 %v4852, %v4855
        %v4857 = vsel %vm794, %v4847, %v4856
        %v4859 = vshrl.u32 %v4723, 16
        %v4861 = vrot.slane %v4859, 4
        %v4862 = vshll.u32 %v4723, 16
        %v4864 = vrot.slane %v4862, 5
        %v4865 = vor.u32 %v4861, %v4864
        %v4866 = vsel %vm794, %v4856, %v4865
        %v4868 = vshrl.u32 %v4724, 16
        %v4870 = vrot.slane %v4868, 4
        %v4871 = vshll.u32 %v4724, 16
        %v4873 = vrot.slane %v4871, 5
        %v4874 = vor.u32 %v4870, %v4873
        %v4875 = vsel %vm794, %v4865, %v4874
        %v4877 = vshrl.u32 %v4725, 16
        %v4879 = vrot.slane %v4877, 4
        %v4880 = vshll.u32 %v4725, 16
        %v4882 = vrot.slane %v4880, 5
        %v4883 = vor.u32 %v4879, %v4882
        %v4884 = vsel %vm794, %v4874, %v4883
        %v4886 = vshrl.u32 %v4726, 16
        %v4888 = vrot.slane %v4886, 4
        %v4889 = vshll.u32 %v4726, 16
        %v4891 = vrot.slane %v4889, 5
        %v4892 = vor.u32 %v4888, %v4891
        %v4893 = vsel %vm794, %v4883, %v4892
        %v4895 = vshrl.u32 %v4727, 16
        %v4897 = vrot.slane %v4895, 4
        %v4898 = vshll.u32 %v4727, 16
        %v4900 = vrot.slane %v4898, 5
        %v4901 = vor.u32 %v4897, %v4900
        %v4902 = vsel %vm794, %v4892, %v4901
        %v4904 = vshrl.u32 %v4728, 16
        %v4906 = vrot.slane %v4904, 4
        %v4907 = vshll.u32 %v4728, 16
        %v4909 = vrot.slane %v4907, 5
        %v4910 = vor.u32 %v4906, %v4909
        %v4911 = vsel %vm794, %v4901, %v4910
        %v4913 = vshrl.u32 %v4729, 16
        %v4915 = vrot.slane %v4913, 4
        %v4916 = vshll.u32 %v4729, 16
        %v4918 = vrot.slane %v4916, 5
        %v4919 = vor.u32 %v4915, %v4918
        %v4920 = vsel %vm794, %v4910, %v4919
        %v4922 = vshrl.u32 %v4730, 16
        %v4924 = vrot.slane %v4922, 4
        %v4925 = vshll.u32 %v4730, 16
        %v4927 = vrot.slane %v4925, 5
        %v4928 = vor.u32 %v4924, %v4927
        %v4929 = vsel %vm794, %v4919, %v4928
        %v4931 = vshrl.u32 %v4731, 16
        %v4933 = vrot.slane %v4931, 4
        %v4934 = vshll.u32 %v4731, 16
        %v4936 = vrot.slane %v4934, 5
        %v4937 = vor.u32 %v4933, %v4936
        %v4938 = vsel %vm794, %v4928, %v4937
        %v4940 = vshrl.u32 %v4732, 16
        %v4942 = vrot.slane %v4940, 4
        %v4943 = vshll.u32 %v4732, 16
        %v4945 = vrot.slane %v4943, 5
        %v4946 = vor.u32 %v4942, %v4945
        %v4947 = vsel %vm794, %v4937, %v4946
        %v4949 = vshrl.u32 %v4733, 16
        %v4951 = vrot.slane %v4949, 4
        %v4952 = vshll.u32 %v4733, 16
        %v4954 = vrot.slane %v4952, 5
        %v4955 = vor.u32 %v4951, %v4954
        %v4956 = vsel %vm794, %v4946, %v4955
        %v4958 = vshrl.u32 %v4734, 16
        %v4960 = vrot.slane %v4958, 4
        %v4961 = vshll.u32 %v4734, 16
        %v4963 = vrot.slane %v4961, 5
        %v4964 = vor.u32 %v4960, %v4963
        %v4965 = vsel %vm794, %v4955, %v4964
        %v4967 = vshrl.u32 %v4735, 16
        %v4969 = vrot.slane %v4967, 4
        %v4970 = vshll.u32 %v4735, 16
        %v4972 = vrot.slane %v4970, 5
        %v4973 = vor.u32 %v4969, %v4972
        %v4974 = vsel %vm794, %v4964, %v4973
        %v4976 = vshrl.u32 %v4736, 16
        %v4978 = vrot.slane %v4976, 4
        %v4979 = vshll.u32 %v4736, 16
        %v4981 = vrot.slane %v4979, 5
        %v4982 = vor.u32 %v4978, %v4981
        %v4983 = vsel %vm794, %v4973, %v4982
        %v4985 = vshrl.u32 %v4737, 16
        %v4987 = vrot.slane %v4985, 4
        %v4988 = vshll.u32 %v4737, 16
        %v4990 = vrot.slane %v4988, 5
        %v4991 = vor.u32 %v4987, %v4990
        %v4992 = vsel %vm794, %v4982, %v4991
        %v4994 = vshrl.u32 %v4738, 16
        %v4996 = vrot.slane %v4994, 4
        %v4997 = vshll.u32 %v4738, 16
        %v4999 = vrot.slane %v4997, 5
        %v5000 = vor.u32 %v4996, %v4999
        %v5001 = vsel %vm794, %v4991, %v5000
        %v5003 = vshrl.u32 %v4739, 16
        %v5005 = vrot.slane %v5003, 4
        %v5006 = vshll.u32 %v4739, 16
        %v5008 = vrot.slane %v5006, 5
        %v5009 = vor.u32 %v5005, %v5008
        %v5010 = vsel %vm794, %v5000, %v5009
        %v5012 = vshrl.u32 %v4740, 16
        %v5014 = vrot.slane %v5012, 4
        %v5015 = vshll.u32 %v4740, 16
        %v5017 = vrot.slane %v5015, 5
        %v5018 = vor.u32 %v5014, %v5017
        %v5019 = vsel %vm794, %v5009, %v5018
        %v5021 = vshrl.u32 %v4741, 16
        %v5023 = vrot.slane %v5021, 4
        %v5024 = vshll.u32 %v4741, 16
        %v5026 = vrot.slane %v5024, 5
        %v5027 = vor.u32 %v5023, %v5026
        %v5028 = vsel %vm794, %v5018, %v5027
        %5029 = vrot.lane.b32.xlu0 %v4749, 64
        %v5030 = vpop.permute.xlu0 %5029
        %5031 = vrot.lane.b32.xlu0 %v4758, 64
        %v5032 = vpop.permute.xlu0 %5031
        %5033 = vrot.lane.b32.xlu0 %v4767, 64
        %v5034 = vpop.permute.xlu0 %5033
        %5035 = vrot.lane.b32.xlu0 %v4776, 64
        %v5036 = vpop.permute.xlu0 %5035
        %5037 = vrot.lane.b32.xlu0 %v4785, 64
        %v5038 = vpop.permute.xlu0 %5037
        %5039 = vrot.lane.b32.xlu0 %v4794, 64
        %v5040 = vpop.permute.xlu0 %5039
        %5041 = vrot.lane.b32.xlu0 %v4803, 64
        %v5042 = vpop.permute.xlu0 %5041
        %5043 = vrot.lane.b32.xlu0 %v4812, 64
        %v5044 = vpop.permute.xlu0 %5043
        %5045 = vrot.lane.b32.xlu0 %v4821, 64
        %v5046 = vpop.permute.xlu0 %5045
        %5047 = vrot.lane.b32.xlu0 %v4830, 64
        %v5048 = vpop.permute.xlu0 %5047
        %5049 = vrot.lane.b32.xlu0 %v4839, 64
        %v5050 = vpop.permute.xlu0 %5049
        %5051 = vrot.lane.b32.xlu0 %v4848, 64
        %v5052 = vpop.permute.xlu0 %5051
        %5053 = vrot.lane.b32.xlu0 %v4857, 64
        %v5054 = vpop.permute.xlu0 %5053
        %5055 = vrot.lane.b32.xlu0 %v4866, 64
        %v5056 = vpop.permute.xlu0 %5055
        %5057 = vrot.lane.b32.xlu0 %v4875, 64
        %v5058 = vpop.permute.xlu0 %5057
        %5059 = vrot.lane.b32.xlu0 %v4884, 64
        %v5060 = vpop.permute.xlu0 %5059
        %5061 = vrot.lane.b32.xlu0 %v4893, 64
        %v5062 = vpop.permute.xlu0 %5061
        %5063 = vrot.lane.b32.xlu0 %v4902, 64
        %v5064 = vpop.permute.xlu0 %5063
        %5065 = vrot.lane.b32.xlu0 %v4911, 64
        %v5066 = vpop.permute.xlu0 %5065
        %5067 = vrot.lane.b32.xlu0 %v4920, 64
        %v5068 = vpop.permute.xlu0 %5067
        %5069 = vrot.lane.b32.xlu0 %v4929, 64
        %v5070 = vpop.permute.xlu0 %5069
        %5071 = vrot.lane.b32.xlu0 %v4938, 64
        %v5072 = vpop.permute.xlu0 %5071
        %5073 = vrot.lane.b32.xlu0 %v4947, 64
        %v5074 = vpop.permute.xlu0 %5073
        %5075 = vrot.lane.b32.xlu0 %v4956, 64
        %v5076 = vpop.permute.xlu0 %5075
        %5077 = vrot.lane.b32.xlu0 %v4965, 64
        %v5078 = vpop.permute.xlu0 %5077
        %5079 = vrot.lane.b32.xlu0 %v4974, 64
        %v5080 = vpop.permute.xlu0 %5079
        %5081 = vrot.lane.b32.xlu0 %v4983, 64
        %v5082 = vpop.permute.xlu0 %5081
        %5083 = vrot.lane.b32.xlu0 %v4992, 64
        %v5084 = vpop.permute.xlu0 %5083
        %5085 = vrot.lane.b32.xlu0 %v5001, 64
        %v5086 = vpop.permute.xlu0 %5085
        %5087 = vrot.lane.b32.xlu0 %v5010, 64
        %v5088 = vpop.permute.xlu0 %5087
        %5089 = vrot.lane.b32.xlu0 %v5019, 64
        %v5090 = vpop.permute.xlu0 %5089
        %5091 = vrot.lane.b32.xlu0 %v5028, 64
        %v5092 = vpop.permute.xlu0 %5091
        %5093 = vrot.lane.b32.xlu0 %v5027, 64
        %v5094 = vpop.permute.xlu0 %5093
        %v5096 = vunpack.c.l.b16 %v4534
        %v5097 = vpack.c.b16 %v5096, %v5096
        %v5098 = vrot.slane %v4710, 5
        %v5099 = vrot.slane %v4711, 5
        %v5100 = vsel %vm1151, %v5098, %v5099
        %v5101 = vrot.slane %v4712, 5
        %v5102 = vsel %vm1151, %v5099, %v5101
        %v5103 = vrot.slane %v4713, 5
        %v5104 = vsel %vm1151, %v5101, %v5103
        %v5105 = vrot.slane %v4714, 5
        %v5106 = vsel %vm1151, %v5103, %v5105
        %v5107 = vrot.slane %v4715, 5
        %v5108 = vsel %vm1151, %v5105, %v5107
        %v5109 = vrot.slane %v4716, 5
        %v5110 = vsel %vm1151, %v5107, %v5109
        %v5111 = vrot.slane %v4717, 5
        %v5112 = vsel %vm1151, %v5109, %v5111
        %v5113 = vrot.slane %v4718, 5
        %v5114 = vsel %vm1151, %v5111, %v5113
        %v5115 = vrot.slane %v4719, 5
        %v5116 = vsel %vm1151, %v5113, %v5115
        %v5117 = vrot.slane %v4720, 5
        %v5118 = vsel %vm1151, %v5115, %v5117
        %v5119 = vrot.slane %v4721, 5
        %v5120 = vsel %vm1151, %v5117, %v5119
        %v5121 = vrot.slane %v4722, 5
        %v5122 = vsel %vm1151, %v5119, %v5121
        %v5123 = vrot.slane %v4723, 5
        %v5124 = vsel %vm1151, %v5121, %v5123
        %v5125 = vrot.slane %v4724, 5
        %v5126 = vsel %vm1151, %v5123, %v5125
        %v5127 = vrot.slane %v4725, 5
        %v5128 = vsel %vm1151, %v5125, %v5127
        %v5129 = vrot.slane %v4726, 5
        %v5130 = vsel %vm1151, %v5127, %v5129
        %v5131 = vrot.slane %v4727, 5
        %v5132 = vsel %vm1151, %v5129, %v5131
        %v5133 = vrot.slane %v4728, 5
        %v5134 = vsel %vm1151, %v5131, %v5133
        %v5135 = vrot.slane %v4729, 5
        %v5136 = vsel %vm1151, %v5133, %v5135
        %v5137 = vrot.slane %v4730, 5
        %v5138 = vsel %vm1151, %v5135, %v5137
        %v5139 = vrot.slane %v4731, 5
        %v5140 = vsel %vm1151, %v5137, %v5139
        %v5141 = vrot.slane %v4732, 5
        %v5142 = vsel %vm1151, %v5139, %v5141
        %v5143 = vrot.slane %v4733, 5
        %v5144 = vsel %vm1151, %v5141, %v5143
        %v5145 = vrot.slane %v4734, 5
        %v5146 = vsel %vm1151, %v5143, %v5145
        %v5147 = vrot.slane %v4735, 5
        %v5148 = vsel %vm1151, %v5145, %v5147
        %v5149 = vrot.slane %v4736, 5
        %v5150 = vsel %vm1151, %v5147, %v5149
        %v5151 = vrot.slane %v4737, 5
        %v5152 = vsel %vm1151, %v5149, %v5151
        %v5153 = vrot.slane %v4738, 5
        %v5154 = vsel %vm1151, %v5151, %v5153
        %v5155 = vrot.slane %v4739, 5
        %v5156 = vsel %vm1151, %v5153, %v5155
        %v5157 = vrot.slane %v4740, 5
        %v5158 = vsel %vm1151, %v5155, %v5157
        %v5159 = vrot.slane %v4741, 5
        %v5160 = vsel %vm1151, %v5157, %v5159
        %v5161 = vrot.slane %v5097, 5
        %v5162 = vsel %vm1151, %v5159, %v5161
        %v5168 = vunpack.c.l.b16 %v4535
        %v5169 = vunpack.c.l.b16 %v4536
        %v5170 = vunpack.c.l.b16 %v4537
        %v5171 = vunpack.c.l.b16 %v4538
        %v5172 = vunpack.c.l.b16 %v4539
        %v5173 = vpack.c.b16 %v4617, %v5168
        %v5174 = vpack.c.b16 %v5169, %v4676
        %v5175 = vpack.c.b16 %v5171, %v5170
        %v5176 = vpack.c.b16 %v5172, %v5172
        %5177 = vrot.lane.b32.xlu0 %v5173, 64
        %v5178 = vpop.permute.xlu0 %5177
        %5179 = vrot.lane.b32.xlu0 %v4680, 64
        %v5180 = vpop.permute.xlu0 %5179
        %5181 = vrot.lane.b32.xlu0 %v4681, 64
        %v5182 = vpop.permute.xlu0 %5181
        %5183 = vrot.lane.b32.xlu0 %v4682, 64
        %v5184 = vpop.permute.xlu0 %5183
        %5185 = vrot.lane.b32.xlu0 %v4683, 64
        %v5186 = vpop.permute.xlu0 %5185
        %5187 = vrot.lane.b32.xlu0 %v4684, 64
        %v5188 = vpop.permute.xlu0 %5187
        %5189 = vrot.lane.b32.xlu0 %v4685, 64
        %v5190 = vpop.permute.xlu0 %5189
        %5191 = vrot.lane.b32.xlu0 %v4686, 64
        %v5192 = vpop.permute.xlu0 %5191
        %5193 = vrot.lane.b32.xlu0 %v4687, 64
        %v5194 = vpop.permute.xlu0 %5193
        %5195 = vrot.lane.b32.xlu0 %v4688, 64
        %v5196 = vpop.permute.xlu0 %5195
        %5197 = vrot.lane.b32.xlu0 %v4689, 64
        %v5198 = vpop.permute.xlu0 %5197
        %5199 = vrot.lane.b32.xlu0 %v4690, 64
        %v5200 = vpop.permute.xlu0 %5199
        %5201 = vrot.lane.b32.xlu0 %v4691, 64
        %v5202 = vpop.permute.xlu0 %5201
        %5203 = vrot.lane.b32.xlu0 %v4692, 64
        %v5204 = vpop.permute.xlu0 %5203
        %5205 = vrot.lane.b32.xlu0 %v4693, 64
        %v5206 = vpop.permute.xlu0 %5205
        %5207 = vrot.lane.b32.xlu0 %v4694, 64
        %v5208 = vpop.permute.xlu0 %5207
        %5209 = vrot.lane.b32.xlu0 %v4695, 64
        %v5210 = vpop.permute.xlu0 %5209
        %5211 = vrot.lane.b32.xlu0 %v4696, 64
        %v5212 = vpop.permute.xlu0 %5211
        %5213 = vrot.lane.b32.xlu0 %v4697, 64
        %v5214 = vpop.permute.xlu0 %5213
        %5215 = vrot.lane.b32.xlu0 %v4698, 64
        %v5216 = vpop.permute.xlu0 %5215
        %5217 = vrot.lane.b32.xlu0 %v4699, 64
        %v5218 = vpop.permute.xlu0 %5217
        %5219 = vrot.lane.b32.xlu0 %v4700, 64
        %v5220 = vpop.permute.xlu0 %5219
        %5221 = vrot.lane.b32.xlu0 %v4701, 64
        %v5222 = vpop.permute.xlu0 %5221
        %5223 = vrot.lane.b32.xlu0 %v4702, 64
        %v5224 = vpop.permute.xlu0 %5223
        %5225 = vrot.lane.b32.xlu0 %v4703, 64
        %v5226 = vpop.permute.xlu0 %5225
        %5227 = vrot.lane.b32.xlu0 %v4704, 64
        %v5228 = vpop.permute.xlu0 %5227
        %5229 = vrot.lane.b32.xlu0 %v4705, 64
        %v5230 = vpop.permute.xlu0 %5229
        %5231 = vrot.lane.b32.xlu0 %v4706, 64
        %v5232 = vpop.permute.xlu0 %5231
        %5233 = vrot.lane.b32.xlu0 %v4707, 64
        %v5234 = vpop.permute.xlu0 %5233
        %5235 = vrot.lane.b32.xlu0 %v4708, 64
        %v5236 = vpop.permute.xlu0 %5235
        %5237 = vrot.lane.b32.xlu0 %v5174, 64
        %v5238 = vpop.permute.xlu0 %5237
        %5239 = vrot.lane.b32.xlu0 %v5175, 64
        %v5240 = vpop.permute.xlu0 %5239
        %5241 = vrot.lane.b32.xlu0 %v5176, 64
        %v5242 = vpop.permute.xlu0 %5241
        %v5243 = vpack.c.b16 %v5170, %v5169
        %v5244 = vpack.c.b16 %v5172, %v5171
        %v5246 = vshrl.u32 %v5243, 16
        %v5248 = vrot.slane %v5246, 4
        %v5249 = vshll.u32 %v5243, 16
        %v5251 = vrot.slane %v5249, 5
        %v5252 = vor.u32 %v5248, %v5251
        %v5253 = vsel %vm794, %v5027, %v5252
        %v5255 = vshrl.u32 %v5244, 16
        %v5257 = vrot.slane %v5255, 4
        %v5258 = vshll.u32 %v5244, 16
        %v5260 = vrot.slane %v5258, 5
        %v5261 = vor.u32 %v5257, %v5260
        %v5262 = vsel %vm794, %v5252, %v5261
        %v5264 = vunpack.c.l.b16 %v4540
        %v5265 = vpack.c.b16 %v5264, %v5264
        %v5266 = vrot.slane %v5243, 5
        %v5267 = vsel %vm1151, %v5159, %v5266
        %v5268 = vrot.slane %v5244, 5
        %v5269 = vsel %vm1151, %v5266, %v5268
        %v5270 = vrot.slane %v5265, 5
        %v5271 = vsel %vm1151, %v5268, %v5270
        %5272 = vrot.lane.b32.xlu0 %v5101, 64
        %v5273 = vpop.permute.xlu0 %5272
        %5274 = vrot.lane.b32.xlu0 %v5104, 64
        %v5275 = vpop.permute.xlu0 %5274
        %5276 = vrot.lane.b32.xlu0 %v5106, 64
        %v5277 = vpop.permute.xlu0 %5276
        %5278 = vrot.lane.b32.xlu0 %v5108, 64
        %v5279 = vpop.permute.xlu0 %5278
        %5280 = vrot.lane.b32.xlu0 %v5110, 64
        %v5281 = vpop.permute.xlu0 %5280
        %5282 = vrot.lane.b32.xlu0 %v5112, 64
        %v5283 = vpop.permute.xlu0 %5282
        %5284 = vrot.lane.b32.xlu0 %v5114, 64
        %v5285 = vpop.permute.xlu0 %5284
        %5286 = vrot.lane.b32.xlu0 %v5116, 64
        %v5287 = vpop.permute.xlu0 %5286
        %5288 = vrot.lane.b32.xlu0 %v5118, 64
        %v5289 = vpop.permute.xlu0 %5288
        %5290 = vrot.lane.b32.xlu0 %v5120, 64
        %v5291 = vpop.permute.xlu0 %5290
        %5292 = vrot.lane.b32.xlu0 %v5122, 64
        %v5293 = vpop.permute.xlu0 %5292
        %5294 = vrot.lane.b32.xlu0 %v5124, 64
        %v5295 = vpop.permute.xlu0 %5294
        %5296 = vrot.lane.b32.xlu0 %v5126, 64
        %v5297 = vpop.permute.xlu0 %5296
        %5298 = vrot.lane.b32.xlu0 %v5128, 64
        %v5299 = vpop.permute.xlu0 %5298
        %5300 = vrot.lane.b32.xlu0 %v5130, 64
        %v5301 = vpop.permute.xlu0 %5300
        %5302 = vrot.lane.b32.xlu0 %v5132, 64
        %v5303 = vpop.permute.xlu0 %5302
        %5304 = vrot.lane.b32.xlu0 %v5134, 64
        %v5305 = vpop.permute.xlu0 %5304
        %5306 = vrot.lane.b32.xlu0 %v5136, 64
        %v5307 = vpop.permute.xlu0 %5306
        %5308 = vrot.lane.b32.xlu0 %v5138, 64
        %v5309 = vpop.permute.xlu0 %5308
        %5310 = vrot.lane.b32.xlu0 %v5140, 64
        %v5311 = vpop.permute.xlu0 %5310
        %5312 = vrot.lane.b32.xlu0 %v5142, 64
        %v5313 = vpop.permute.xlu0 %5312
        %5314 = vrot.lane.b32.xlu0 %v5144, 64
        %v5315 = vpop.permute.xlu0 %5314
        %5316 = vrot.lane.b32.xlu0 %v5146, 64
        %v5317 = vpop.permute.xlu0 %5316
        %5318 = vrot.lane.b32.xlu0 %v5148, 64
        %v5319 = vpop.permute.xlu0 %5318
        %5320 = vrot.lane.b32.xlu0 %v5150, 64
        %v5321 = vpop.permute.xlu0 %5320
        %5322 = vrot.lane.b32.xlu0 %v5152, 64
        %v5323 = vpop.permute.xlu0 %5322
        %5324 = vrot.lane.b32.xlu0 %v5154, 64
        %v5325 = vpop.permute.xlu0 %5324
        %5326 = vrot.lane.b32.xlu0 %v5156, 64
        %v5327 = vpop.permute.xlu0 %5326
        %5328 = vrot.lane.b32.xlu0 %v5158, 64
        %v5329 = vpop.permute.xlu0 %5328
        %5330 = vrot.lane.b32.xlu0 %v5160, 64
        %v5331 = vpop.permute.xlu0 %5330
        %5332 = vrot.lane.b32.xlu0 %v5267, 64
        %v5333 = vpop.permute.xlu0 %5332
        %5334 = vrot.lane.b32.xlu0 %v5269, 64
        %v5335 = vpop.permute.xlu0 %5334
        %5336 = vrot.lane.b32.xlu0 %v5271, 64
        %v5337 = vpop.permute.xlu0 %5336
        %v5343 = vunpack.c.l.b16 %v4541
        %v5344 = vunpack.c.l.b16 %v4542
        %v5345 = vunpack.c.l.b16 %v4543
        %v5346 = vunpack.c.l.b16 %v4544
        %v5347 = vunpack.c.l.b16 %v4545
        %v5348 = vpack.c.b16 %v4621, %v5343
        %v5349 = vpack.c.b16 %v5344, %v5172
        %v5350 = vpack.c.b16 %v5346, %v5345
        %v5351 = vpack.c.b16 %v5347, %v5347
        %v5352 = vpack.c.b16 %v5345, %v5344
        %v5353 = vpack.c.b16 %v5347, %v5346
        %v5355 = vshrl.u32 %v5352, 16
        %v5357 = vrot.slane %v5355, 4
        %v5358 = vshll.u32 %v5352, 16
        %v5360 = vrot.slane %v5358, 5
        %v5361 = vor.u32 %v5357, %v5360
        %v5362 = vsel %vm794, %v5261, %v5361
        %v5364 = vshrl.u32 %v5353, 16
        %v5366 = vrot.slane %v5364, 4
        %v5367 = vshll.u32 %v5353, 16
        %v5369 = vrot.slane %v5367, 5
        %v5370 = vor.u32 %v5366, %v5369
        %v5371 = vsel %vm794, %v5361, %v5370
        %5372 = vrot.lane.b32.xlu0 %v4784, 64
        %v5373 = vpop.permute.xlu0 %5372
        %5374 = vrot.lane.b32.xlu0 %v5253, 64
        %v5375 = vpop.permute.xlu0 %5374
        %5376 = vrot.lane.b32.xlu0 %v5262, 64
        %v5377 = vpop.permute.xlu0 %5376
        %5378 = vrot.lane.b32.xlu0 %v5362, 64
        %v5379 = vpop.permute.xlu0 %5378
        %5380 = vrot.lane.b32.xlu0 %v5371, 64
        %v5381 = vpop.permute.xlu0 %5380
        %5382 = vrot.lane.b32.xlu0 %v5370, 64
        %v5383 = vpop.permute.xlu0 %5382
        %v5385 = vunpack.c.l.b16 %v4546
        %v5386 = vpack.c.b16 %v5385, %v5385
        %v5387 = vrot.slane %v5352, 5
        %v5388 = vsel %vm1151, %v5268, %v5387
        %v5389 = vrot.slane %v5353, 5
        %v5390 = vsel %vm1151, %v5387, %v5389
        %v5391 = vrot.slane %v5386, 5
        %v5392 = vsel %vm1151, %v5389, %v5391
        %v5395 = vsel %vm1447, %v4677, %v5030
        %v5398 = vsel %vm1447, %v4678, %v5032
        %v5401 = vsel %vm1447, %v4679, %v5034
        %v5404 = vsel %vm1447, %v4680, %v5036
        %v5407 = vsel %vm1447, %v4681, %v5038
        %v5410 = vsel %vm1447, %v4682, %v5040
        %v5413 = vsel %vm1447, %v4683, %v5042
        %v5416 = vsel %vm1447, %v4684, %v5044
        %v5419 = vsel %vm1447, %v4685, %v5046
        %v5422 = vsel %vm1447, %v4686, %v5048
        %v5425 = vsel %vm1447, %v4687, %v5050
        %v5428 = vsel %vm1447, %v4688, %v5052
        %v5431 = vsel %vm1447, %v4689, %v5054
        %v5434 = vsel %vm1447, %v4690, %v5056
        %v5437 = vsel %vm1447, %v4691, %v5058
        %v5440 = vsel %vm1447, %v4692, %v5060
        %v5443 = vsel %vm1447, %v4693, %v5062
        %v5446 = vsel %vm1447, %v4694, %v5064
        %v5449 = vsel %vm1447, %v4695, %v5066
        %v5452 = vsel %vm1447, %v4696, %v5068
        %v5455 = vsel %vm1447, %v4697, %v5070
        %v5458 = vsel %vm1447, %v4698, %v5072
        %v5461 = vsel %vm1447, %v4699, %v5074
        %v5464 = vsel %vm1447, %v4700, %v5076
        %v5467 = vsel %vm1447, %v4701, %v5078
        %v5470 = vsel %vm1447, %v4702, %v5080
        %v5473 = vsel %vm1447, %v4703, %v5082
        %v5476 = vsel %vm1447, %v4704, %v5084
        %v5479 = vsel %vm1447, %v4705, %v5086
        %v5482 = vsel %vm1447, %v4706, %v5088
        %v5485 = vsel %vm1447, %v4707, %v5090
        %v5488 = vsel %vm1447, %v4708, %v5092
        %v5491 = vsel %vm1447, %v4709, %v5094
        %v5494 = vsel %vm1447, %v5098, %v5178
        %v5497 = vsel %vm1447, %v5100, %v5180
        %v5500 = vsel %vm1447, %v5102, %v5182
        %v5503 = vsel %vm1447, %v5104, %v5184
        %v5506 = vsel %vm1447, %v5106, %v5186
        %v5509 = vsel %vm1447, %v5108, %v5188
        %v5512 = vsel %vm1447, %v5110, %v5190
        %v5515 = vsel %vm1447, %v5112, %v5192
        %v5518 = vsel %vm1447, %v5114, %v5194
        %v5521 = vsel %vm1447, %v5116, %v5196
        %v5524 = vsel %vm1447, %v5118, %v5198
        %v5527 = vsel %vm1447, %v5120, %v5200
        %v5530 = vsel %vm1447, %v5122, %v5202
        %v5533 = vsel %vm1447, %v5124, %v5204
        %v5536 = vsel %vm1447, %v5126, %v5206
        %v5539 = vsel %vm1447, %v5128, %v5208
        %v5542 = vsel %vm1447, %v5130, %v5210
        %v5545 = vsel %vm1447, %v5132, %v5212
        %v5548 = vsel %vm1447, %v5134, %v5214
        %v5551 = vsel %vm1447, %v5136, %v5216
        %v5554 = vsel %vm1447, %v5138, %v5218
        %v5557 = vsel %vm1447, %v5140, %v5220
        %v5560 = vsel %vm1447, %v5142, %v5222
        %v5563 = vsel %vm1447, %v5144, %v5224
        %v5566 = vsel %vm1447, %v5146, %v5226
        %v5569 = vsel %vm1447, %v5148, %v5228
        %v5572 = vsel %vm1447, %v5150, %v5230
        %v5575 = vsel %vm1447, %v5152, %v5232
        %v5578 = vsel %vm1447, %v5154, %v5234
        %v5581 = vsel %vm1447, %v5156, %v5236
        %v5584 = vsel %vm1447, %v5158, %v5238
        %v5587 = vsel %vm1447, %v5160, %v5240
        %v5590 = vsel %vm1447, %v5162, %v5242
        %v5593 = vsel %vm1447, %v4766, %v5273
        %v5596 = vsel %vm1447, %v4776, %v5275
        %v5599 = vsel %vm1447, %v4785, %v5277
        %v5602 = vsel %vm1447, %v4794, %v5279
        %v5605 = vsel %vm1447, %v4803, %v5281
        %v5608 = vsel %vm1447, %v4812, %v5283
        %v5611 = vsel %vm1447, %v4821, %v5285
        %v5614 = vsel %vm1447, %v4830, %v5287
        %v5617 = vsel %vm1447, %v4839, %v5289
        %v5620 = vsel %vm1447, %v4848, %v5291
        %v5623 = vsel %vm1447, %v4857, %v5293
        %v5626 = vsel %vm1447, %v4866, %v5295
        %v5629 = vsel %vm1447, %v4875, %v5297
        %v5632 = vsel %vm1447, %v4884, %v5299
        %v5635 = vsel %vm1447, %v4893, %v5301
        %v5638 = vsel %vm1447, %v4902, %v5303
        %v5641 = vsel %vm1447, %v4911, %v5305
        %v5644 = vsel %vm1447, %v4920, %v5307
        %v5647 = vsel %vm1447, %v4929, %v5309
        %v5650 = vsel %vm1447, %v4938, %v5311
        %v5653 = vsel %vm1447, %v4947, %v5313
        %v5656 = vsel %vm1447, %v4956, %v5315
        %v5659 = vsel %vm1447, %v4965, %v5317
        %v5662 = vsel %vm1447, %v4974, %v5319
        %v5665 = vsel %vm1447, %v4983, %v5321
        %v5668 = vsel %vm1447, %v4992, %v5323
        %v5671 = vsel %vm1447, %v5001, %v5325
        %v5674 = vsel %vm1447, %v5010, %v5327
        %v5677 = vsel %vm1447, %v5019, %v5329
        %v5680 = vsel %vm1447, %v5028, %v5331
        %v5683 = vsel %vm1447, %v5253, %v5333
        %v5686 = vsel %vm1447, %v5262, %v5335
        %v5689 = vsel %vm1447, %v5261, %v5337
        %v5692 = vsel %vm1447, %v5348, %v5373
        %v5695 = vsel %vm1447, %v5174, %v5375
        %v5698 = vsel %vm1447, %v5175, %v5377
        %v5701 = vsel %vm1447, %v5349, %v5379
        %v5704 = vsel %vm1447, %v5350, %v5381
        %v5707 = vsel %vm1447, %v5351, %v5383
        %v5708 = vld [vmem:[%s3] sm:$0xf]
        %v5709 = vld [vmem:[%s3 + $0x4] sm:$0xf]
        %v5710 = vld [vmem:[%s3 + $0x8] sm:$0xf]
        %v5711 = vld [vmem:[%s3 + $0xc] sm:$0xf]
        %v5712 = vld [vmem:[%s3 + $0x10] sm:$0xf]
        %v5713 = vld [vmem:[%s3 + $0x14] sm:$0xf]
        %v5714 = vld [vmem:[%s3 + $0x18] sm:$0xf]
        %v5715 = vld [vmem:[%s3 + $0x1c] sm:$0xf]
        %v5716 = vld [vmem:[%s3 + $0x20] sm:$0xf]
        %v5717 = vld [vmem:[%s3 + $0x24] sm:$0xf]
        %v5718 = vld [vmem:[%s3 + $0x28] sm:$0xf]
        %v5719 = vld [vmem:[%s3 + $0x2c] sm:$0xf]
        %v5720 = vld [vmem:[%s3 + $0x30] sm:$0xf]
        %v5721 = vld [vmem:[%s3 + $0x34] sm:$0xf]
        %v5722 = vld [vmem:[%s3 + $0x38] sm:$0xf]
        %v5723 = vld [vmem:[%s3 + $0x3c] sm:$0xf]
        %v5724 = vld [vmem:[%s3 + $0x40] sm:$0xf]
        %v5725 = vld [vmem:[%s3 + $0x44] sm:$0xf]
        %v5726 = vld [vmem:[%s3 + $0x48] sm:$0xf]
        %v5727 = vld [vmem:[%s3 + $0x4c] sm:$0xf]
        %v5728 = vld [vmem:[%s3 + $0x50] sm:$0xf]
        %v5729 = vld [vmem:[%s3 + $0x54] sm:$0xf]
        %v5730 = vld [vmem:[%s3 + $0x58] sm:$0xf]
        %v5731 = vld [vmem:[%s3 + $0x5c] sm:$0xf]
        %v5732 = vld [vmem:[%s3 + $0x60] sm:$0xf]
        %v5733 = vld [vmem:[%s3 + $0x64] sm:$0xf]
        %v5734 = vld [vmem:[%s3 + $0x68] sm:$0xf]
        %v5735 = vld [vmem:[%s3 + $0x6c] sm:$0xf]
        %v5736 = vld [vmem:[%s3 + $0x70] sm:$0xf]
        %v5737 = vld [vmem:[%s3 + $0x74] sm:$0xf]
        %v5738 = vld [vmem:[%s3 + $0x78] sm:$0xf]
        %v5739 = vld [vmem:[%s3 + $0x7c] sm:$0xf]
        %v5740 = vld [vmem:[%s3 + $0x80] sm:$0xf]
        %v5741 = vld [vmem:[%s3 + $0x84] sm:$0xf]
        %v5742 = vld [vmem:[%s3 + $0x88] sm:$0xf]
        %v5743 = vld [vmem:[%s3 + $0x8c] sm:$0xf]
        %v5744 = vld [vmem:[%s3 + $0x90] sm:$0xf]
        %v5745 = vld [vmem:[%s3 + $0x94] sm:$0xf]
        %v5746 = vld [vmem:[%s3 + $0x98] sm:$0xf]
        %v5747 = vld [vmem:[%s3 + $0x9c] sm:$0xf]
        %v5748 = vld [vmem:[%s3 + $0xa0] sm:$0xf]
        %v5749 = vld [vmem:[%s3 + $0xa4] sm:$0xf]
        %v5750 = vld [vmem:[%s3 + $0xa8] sm:$0xf]
        %v5751 = vld [vmem:[%s3 + $0xac] sm:$0xf]
        %v5752 = vld [vmem:[%s3 + $0xb0] sm:$0xf]
        %v5753 = vld [vmem:[%s3 + $0xb4] sm:$0xf]
        %v5754 = vld [vmem:[%s3 + $0xb8] sm:$0xf]
        %v5755 = vld [vmem:[%s3 + $0xbc] sm:$0xf]
        %v5756 = vld [vmem:[%s3 + $0xc0] sm:$0xf]
        %v5757 = vld [vmem:[%s3 + $0xc4] sm:$0xf]
        %v5758 = vld [vmem:[%s3 + $0xc8] sm:$0xf]
        %v5759 = vld [vmem:[%s3 + $0xcc] sm:$0xf]
        %v5760 = vld [vmem:[%s3 + $0xd0] sm:$0xf]
        %v5761 = vld [vmem:[%s3 + $0xd4] sm:$0xf]
        %v5762 = vld [vmem:[%s3 + $0xd8] sm:$0xf]
        %v5763 = vld [vmem:[%s3 + $0xdc] sm:$0xf]
        %v5764 = vld [vmem:[%s3 + $0xe0] sm:$0xf]
        %v5765 = vld [vmem:[%s3 + $0xe4] sm:$0xf]
        %v5766 = vld [vmem:[%s3 + $0xe8] sm:$0xf]
        %v5767 = vld [vmem:[%s3 + $0xec] sm:$0xf]
        %v5768 = vld [vmem:[%s3 + $0xf0] sm:$0xf]
        %v5769 = vld [vmem:[%s3 + $0xf4] sm:$0xf]
        %v5770 = vld [vmem:[%s3 + $0xf8] sm:$0xf]
        %v5771 = vld [vmem:[%s3 + $0xfc] sm:$0xf]
        %v5772 = vld [vmem:[%s3 + $0x100] sm:$0xf]
        %v5773 = vld [vmem:[%s3 + $0x104] sm:$0xf]
        %v5774 = vld [vmem:[%s3 + $0x108] sm:$0xf]
        %v5775 = vld [vmem:[%s3 + $0x10c] sm:$0xf]
        %v5776 = vld [vmem:[%s3 + $0x110] sm:$0xf]
        %v5777 = vld [vmem:[%s3 + $0x114] sm:$0xf]
        %v5778 = vld [vmem:[%s3 + $0x118] sm:$0xf]
        %v5779 = vld [vmem:[%s3 + $0x11c] sm:$0xf]
        %v5780 = vld [vmem:[%s4] sm:$0x1]
        %v5782 = vperm.slane %v5780, 0
        %v5784 = vshrl.u32 %v5395, 16
        %v5786 = vrot.slane %v5784, 3
        %v5787 = vshll.u32 %v5395, 16
        %v5789 = vrot.slane %v5787, 4
        %v5790 = vor.u32 %v5786, %v5789
        %v5791 = vshrl.u32 %v5398, 16
        %v5793 = vrot.slane %v5791, 3
        %v5794 = vshll.u32 %v5398, 16
        %v5796 = vrot.slane %v5794, 4
        %v5797 = vor.u32 %v5793, %v5796
        %v5798 = vsel %vm1839, %v5790, %v5797
        %v5799 = vshrl.u32 %v5494, 16
        %v5801 = vrot.slane %v5799, 3
        %v5802 = vshll.u32 %v5494, 16
        %v5804 = vrot.slane %v5802, 4
        %v5805 = vor.u32 %v5801, %v5804
        %v5806 = vshrl.u32 %v5497, 16
        %v5808 = vrot.slane %v5806, 3
        %v5809 = vshll.u32 %v5497, 16
        %v5811 = vrot.slane %v5809, 4
        %v5812 = vor.u32 %v5808, %v5811
        %v5813 = vsel %vm1839, %v5805, %v5812
        %v5814 = vshrl.u32 %v5593, 16
        %v5816 = vrot.slane %v5814, 3
        %v5817 = vshll.u32 %v5593, 16
        %v5819 = vrot.slane %v5817, 4
        %v5820 = vor.u32 %v5816, %v5819
        %v5821 = vshrl.u32 %v5596, 16
        %v5823 = vrot.slane %v5821, 3
        %v5824 = vshll.u32 %v5596, 16
        %v5826 = vrot.slane %v5824, 4
        %v5827 = vor.u32 %v5823, %v5826
        %v5828 = vsel %vm1839, %v5820, %v5827
        %v5829 = vshrl.u32 %v5692, 16
        %v5831 = vrot.slane %v5829, 3
        %v5832 = vshll.u32 %v5692, 16
        %v5834 = vrot.slane %v5832, 4
        %v5835 = vor.u32 %v5831, %v5834
        %v5836 = vshrl.u32 %v5410, 16
        %v5838 = vrot.slane %v5836, 3
        %v5839 = vshll.u32 %v5410, 16
        %v5841 = vrot.slane %v5839, 4
        %v5842 = vor.u32 %v5838, %v5841
        %v5843 = vsel %vm1839, %v5835, %v5842
        %v5845 = vshrl.u32 %v5105, 16
        %v5847 = vrot.slane %v5845, 3
        %v5848 = vshll.u32 %v5105, 16
        %v5850 = vrot.slane %v5848, 4
        %v5851 = vor.u32 %v5847, %v5850
        %v5852 = vshrl.u32 %v5108, 16
        %v5854 = vrot.slane %v5852, 3
        %v5855 = vshll.u32 %v5108, 16
        %v5857 = vrot.slane %v5855, 4
        %v5858 = vor.u32 %v5854, %v5857
        %v5859 = vsel %vm1839, %v5851, %v5858
        %v5860 = vshrl.u32 %v5401, 16
        %v5862 = vrot.slane %v5860, 3
        %v5863 = vshll.u32 %v5401, 16
        %v5865 = vrot.slane %v5863, 4
        %v5866 = vor.u32 %v5862, %v5865
        %v5867 = vsel %vm1839, %v5797, %v5866
        %v5868 = vshrl.u32 %v5500, 16
        %v5870 = vrot.slane %v5868, 3
        %v5871 = vshll.u32 %v5500, 16
        %v5873 = vrot.slane %v5871, 4
        %v5874 = vor.u32 %v5870, %v5873
        %v5875 = vsel %vm1839, %v5812, %v5874
        %v5876 = vshrl.u32 %v5599, 16
        %v5878 = vrot.slane %v5876, 3
        %v5879 = vshll.u32 %v5599, 16
        %v5881 = vrot.slane %v5879, 4
        %v5882 = vor.u32 %v5878, %v5881
        %v5883 = vsel %vm1839, %v5827, %v5882
        %v5884 = vshrl.u32 %v5413, 16
        %v5886 = vrot.slane %v5884, 3
        %v5887 = vshll.u32 %v5413, 16
        %v5889 = vrot.slane %v5887, 4
        %v5890 = vor.u32 %v5886, %v5889
        %v5891 = vsel %vm1839, %v5842, %v5890
        %v5892 = vshrl.u32 %v5110, 16
        %v5894 = vrot.slane %v5892, 3
        %v5895 = vshll.u32 %v5110, 16
        %v5897 = vrot.slane %v5895, 4
        %v5898 = vor.u32 %v5894, %v5897
        %v5899 = vsel %vm1839, %v5858, %v5898
        %v5900 = vshrl.u32 %v5404, 16
        %v5902 = vrot.slane %v5900, 3
        %v5903 = vshll.u32 %v5404, 16
        %v5905 = vrot.slane %v5903, 4
        %v5906 = vor.u32 %v5902, %v5905
        %v5907 = vsel %vm1839, %v5866, %v5906
        %v5908 = vshrl.u32 %v5503, 16
        %v5910 = vrot.slane %v5908, 3
        %v5911 = vshll.u32 %v5503, 16
        %v5913 = vrot.slane %v5911, 4
        %v5914 = vor.u32 %v5910, %v5913
        %v5915 = vsel %vm1839, %v5874, %v5914
        %v5916 = vshrl.u32 %v5602, 16
        %v5918 = vrot.slane %v5916, 3
        %v5919 = vshll.u32 %v5602, 16
        %v5921 = vrot.slane %v5919, 4
        %v5922 = vor.u32 %v5918, %v5921
        %v5923 = vsel %vm1839, %v5882, %v5922
        %v5924 = vshrl.u32 %v5416, 16
        %v5926 = vrot.slane %v5924, 3
        %v5927 = vshll.u32 %v5416, 16
        %v5929 = vrot.slane %v5927, 4
        %v5930 = vor.u32 %v5926, %v5929
        %v5931 = vsel %vm1839, %v5890, %v5930
        %v5932 = vshrl.u32 %v5112, 16
        %v5934 = vrot.slane %v5932, 3
        %v5935 = vshll.u32 %v5112, 16
        %v5937 = vrot.slane %v5935, 4
        %v5938 = vor.u32 %v5934, %v5937
        %v5939 = vsel %vm1839, %v5898, %v5938
        %v5940 = vshrl.u32 %v5407, 16
        %v5942 = vrot.slane %v5940, 3
        %v5943 = vshll.u32 %v5407, 16
        %v5945 = vrot.slane %v5943, 4
        %v5946 = vor.u32 %v5942, %v5945
        %v5947 = vsel %vm1839, %v5906, %v5946
        %v5948 = vshrl.u32 %v5506, 16
        %v5950 = vrot.slane %v5948, 3
        %v5951 = vshll.u32 %v5506, 16
        %v5953 = vrot.slane %v5951, 4
        %v5954 = vor.u32 %v5950, %v5953
        %v5955 = vsel %vm1839, %v5914, %v5954
        %v5956 = vshrl.u32 %v5605, 16
        %v5958 = vrot.slane %v5956, 3
        %v5959 = vshll.u32 %v5605, 16
        %v5961 = vrot.slane %v5959, 4
        %v5962 = vor.u32 %v5958, %v5961
        %v5963 = vsel %vm1839, %v5922, %v5962
        %v5964 = vshrl.u32 %v5419, 16
        %v5966 = vrot.slane %v5964, 3
        %v5967 = vshll.u32 %v5419, 16
        %v5969 = vrot.slane %v5967, 4
        %v5970 = vor.u32 %v5966, %v5969
        %v5971 = vsel %vm1839, %v5930, %v5970
        %v5972 = vshrl.u32 %v5114, 16
        %v5974 = vrot.slane %v5972, 3
        %v5975 = vshll.u32 %v5114, 16
        %v5977 = vrot.slane %v5975, 4
        %v5978 = vor.u32 %v5974, %v5977
        %v5979 = vsel %vm1839, %v5938, %v5978
        %v5980 = vsel %vm1839, %v5946, %v5842
        %v5981 = vshrl.u32 %v5509, 16
        %v5983 = vrot.slane %v5981, 3
        %v5984 = vshll.u32 %v5509, 16
        %v5986 = vrot.slane %v5984, 4
        %v5987 = vor.u32 %v5983, %v5986
        %v5988 = vsel %vm1839, %v5954, %v5987
        %v5989 = vshrl.u32 %v5608, 16
        %v5991 = vrot.slane %v5989, 3
        %v5992 = vshll.u32 %v5608, 16
        %v5994 = vrot.slane %v5992, 4
        %v5995 = vor.u32 %v5991, %v5994
        %v5996 = vsel %vm1839, %v5962, %v5995
        %v5997 = vshrl.u32 %v5422, 16
        %v5999 = vrot.slane %v5997, 3
        %v6000 = vshll.u32 %v5422, 16
        %v6002 = vrot.slane %v6000, 4
        %v6003 = vor.u32 %v5999, %v6002
        %v6004 = vsel %vm1839, %v5970, %v6003
        %v6005 = vshrl.u32 %v5116, 16
        %v6007 = vrot.slane %v6005, 3
        %v6008 = vshll.u32 %v5116, 16
        %v6010 = vrot.slane %v6008, 4
        %v6011 = vor.u32 %v6007, %v6010
        %v6012 = vsel %vm1839, %v5978, %v6011
        %v6013 = vshrl.u32 %v5512, 16
        %v6015 = vrot.slane %v6013, 3
        %v6016 = vshll.u32 %v5512, 16
        %v6018 = vrot.slane %v6016, 4
        %v6019 = vor.u32 %v6015, %v6018
        %v6020 = vsel %vm1839, %v5987, %v6019
        %v6021 = vshrl.u32 %v5611, 16
        %v6023 = vrot.slane %v6021, 3
        %v6024 = vshll.u32 %v5611, 16
        %v6026 = vrot.slane %v6024, 4
        %v6027 = vor.u32 %v6023, %v6026
        %v6028 = vsel %vm1839, %v5995, %v6027
        %v6029 = vshrl.u32 %v5425, 16
        %v6031 = vrot.slane %v6029, 3
        %v6032 = vshll.u32 %v5425, 16
        %v6034 = vrot.slane %v6032, 4
        %v6035 = vor.u32 %v6031, %v6034
        %v6036 = vsel %vm1839, %v6003, %v6035
        %v6037 = vshrl.u32 %v5118, 16
        %v6039 = vrot.slane %v6037, 3
        %v6040 = vshll.u32 %v5118, 16
        %v6042 = vrot.slane %v6040, 4
        %v6043 = vor.u32 %v6039, %v6042
        %v6044 = vsel %vm1839, %v6011, %v6043
        %v6045 = vshrl.u32 %v5515, 16
        %v6047 = vrot.slane %v6045, 3
        %v6048 = vshll.u32 %v5515, 16
        %v6050 = vrot.slane %v6048, 4
        %v6051 = vor.u32 %v6047, %v6050
        %v6052 = vsel %vm1839, %v6019, %v6051
        %v6053 = vshrl.u32 %v5614, 16
        %v6055 = vrot.slane %v6053, 3
        %v6056 = vshll.u32 %v5614, 16
        %v6058 = vrot.slane %v6056, 4
        %v6059 = vor.u32 %v6055, %v6058
        %v6060 = vsel %vm1839, %v6027, %v6059
        %v6061 = vshrl.u32 %v5428, 16
        %v6063 = vrot.slane %v6061, 3
        %v6064 = vshll.u32 %v5428, 16
        %v6066 = vrot.slane %v6064, 4
        %v6067 = vor.u32 %v6063, %v6066
        %v6068 = vsel %vm1839, %v6035, %v6067
        %v6069 = vshrl.u32 %v5120, 16
        %v6071 = vrot.slane %v6069, 3
        %v6072 = vshll.u32 %v5120, 16
        %v6074 = vrot.slane %v6072, 4
        %v6075 = vor.u32 %v6071, %v6074
        %v6076 = vsel %vm1839, %v6043, %v6075
        %v6077 = vshrl.u32 %v5518, 16
        %v6079 = vrot.slane %v6077, 3
        %v6080 = vshll.u32 %v5518, 16
        %v6082 = vrot.slane %v6080, 4
        %v6083 = vor.u32 %v6079, %v6082
        %v6084 = vsel %vm1839, %v6051, %v6083
        %v6085 = vshrl.u32 %v5617, 16
        %v6087 = vrot.slane %v6085, 3
        %v6088 = vshll.u32 %v5617, 16
        %v6090 = vrot.slane %v6088, 4
        %v6091 = vor.u32 %v6087, %v6090
        %v6092 = vsel %vm1839, %v6059, %v6091
        %v6093 = vshrl.u32 %v5431, 16
        %v6095 = vrot.slane %v6093, 3
        %v6096 = vshll.u32 %v5431, 16
        %v6098 = vrot.slane %v6096, 4
        %v6099 = vor.u32 %v6095, %v6098
        %v6100 = vsel %vm1839, %v6067, %v6099
        %v6101 = vshrl.u32 %v5122, 16
        %v6103 = vrot.slane %v6101, 3
        %v6104 = vshll.u32 %v5122, 16
        %v6106 = vrot.slane %v6104, 4
        %v6107 = vor.u32 %v6103, %v6106
        %v6108 = vsel %vm1839, %v6075, %v6107
        %v6109 = vshrl.u32 %v5521, 16
        %v6111 = vrot.slane %v6109, 3
        %v6112 = vshll.u32 %v5521, 16
        %v6114 = vrot.slane %v6112, 4
        %v6115 = vor.u32 %v6111, %v6114
        %v6116 = vsel %vm1839, %v6083, %v6115
        %v6117 = vshrl.u32 %v5620, 16
        %v6119 = vrot.slane %v6117, 3
        %v6120 = vshll.u32 %v5620, 16
        %v6122 = vrot.slane %v6120, 4
        %v6123 = vor.u32 %v6119, %v6122
        %v6124 = vsel %vm1839, %v6091, %v6123
        %v6125 = vshrl.u32 %v5434, 16
        %v6127 = vrot.slane %v6125, 3
        %v6128 = vshll.u32 %v5434, 16
        %v6130 = vrot.slane %v6128, 4
        %v6131 = vor.u32 %v6127, %v6130
        %v6132 = vsel %vm1839, %v6099, %v6131
        %v6133 = vshrl.u32 %v5124, 16
        %v6135 = vrot.slane %v6133, 3
        %v6136 = vshll.u32 %v5124, 16
        %v6138 = vrot.slane %v6136, 4
        %v6139 = vor.u32 %v6135, %v6138
        %v6140 = vsel %vm1839, %v6107, %v6139
        %v6141 = vshrl.u32 %v5524, 16
        %v6143 = vrot.slane %v6141, 3
        %v6144 = vshll.u32 %v5524, 16
        %v6146 = vrot.slane %v6144, 4
        %v6147 = vor.u32 %v6143, %v6146
        %v6148 = vsel %vm1839, %v6115, %v6147
        %v6149 = vshrl.u32 %v5623, 16
        %v6151 = vrot.slane %v6149, 3
        %v6152 = vshll.u32 %v5623, 16
        %v6154 = vrot.slane %v6152, 4
        %v6155 = vor.u32 %v6151, %v6154
        %v6156 = vsel %vm1839, %v6123, %v6155
        %v6157 = vshrl.u32 %v5437, 16
        %v6159 = vrot.slane %v6157, 3
        %v6160 = vshll.u32 %v5437, 16
        %v6162 = vrot.slane %v6160, 4
        %v6163 = vor.u32 %v6159, %v6162
        %v6164 = vsel %vm1839, %v6131, %v6163
        %v6165 = vshrl.u32 %v5126, 16
        %v6167 = vrot.slane %v6165, 3
        %v6168 = vshll.u32 %v5126, 16
        %v6170 = vrot.slane %v6168, 4
        %v6171 = vor.u32 %v6167, %v6170
        %v6172 = vsel %vm1839, %v6139, %v6171
        %v6173 = vshrl.u32 %v5527, 16
        %v6175 = vrot.slane %v6173, 3
        %v6176 = vshll.u32 %v5527, 16
        %v6178 = vrot.slane %v6176, 4
        %v6179 = vor.u32 %v6175, %v6178
        %v6180 = vsel %vm1839, %v6147, %v6179
        %v6181 = vshrl.u32 %v5626, 16
        %v6183 = vrot.slane %v6181, 3
        %v6184 = vshll.u32 %v5626, 16
        %v6186 = vrot.slane %v6184, 4
        %v6187 = vor.u32 %v6183, %v6186
        %v6188 = vsel %vm1839, %v6155, %v6187
        %v6189 = vshrl.u32 %v5440, 16
        %v6191 = vrot.slane %v6189, 3
        %v6192 = vshll.u32 %v5440, 16
        %v6194 = vrot.slane %v6192, 4
        %v6195 = vor.u32 %v6191, %v6194
        %v6196 = vsel %vm1839, %v6163, %v6195
        %v6197 = vshrl.u32 %v5128, 16
        %v6199 = vrot.slane %v6197, 3
        %v6200 = vshll.u32 %v5128, 16
        %v6202 = vrot.slane %v6200, 4
        %v6203 = vor.u32 %v6199, %v6202
        %v6204 = vsel %vm1839, %v6171, %v6203
        %v6205 = vshrl.u32 %v5530, 16
        %v6207 = vrot.slane %v6205, 3
        %v6208 = vshll.u32 %v5530, 16
        %v6210 = vrot.slane %v6208, 4
        %v6211 = vor.u32 %v6207, %v6210
        %v6212 = vsel %vm1839, %v6179, %v6211
        %v6213 = vshrl.u32 %v5629, 16
        %v6215 = vrot.slane %v6213, 3
        %v6216 = vshll.u32 %v5629, 16
        %v6218 = vrot.slane %v6216, 4
        %v6219 = vor.u32 %v6215, %v6218
        %v6220 = vsel %vm1839, %v6187, %v6219
        %v6221 = vshrl.u32 %v5443, 16
        %v6223 = vrot.slane %v6221, 3
        %v6224 = vshll.u32 %v5443, 16
        %v6226 = vrot.slane %v6224, 4
        %v6227 = vor.u32 %v6223, %v6226
        %v6228 = vsel %vm1839, %v6195, %v6227
        %v6229 = vshrl.u32 %v5130, 16
        %v6231 = vrot.slane %v6229, 3
        %v6232 = vshll.u32 %v5130, 16
        %v6234 = vrot.slane %v6232, 4
        %v6235 = vor.u32 %v6231, %v6234
        %v6236 = vsel %vm1839, %v6203, %v6235
        %v6237 = vshrl.u32 %v5533, 16
        %v6239 = vrot.slane %v6237, 3
        %v6240 = vshll.u32 %v5533, 16
        %v6242 = vrot.slane %v6240, 4
        %v6243 = vor.u32 %v6239, %v6242
        %v6244 = vsel %vm1839, %v6211, %v6243
        %v6245 = vshrl.u32 %v5632, 16
        %v6247 = vrot.slane %v6245, 3
        %v6248 = vshll.u32 %v5632, 16
        %v6250 = vrot.slane %v6248, 4
        %v6251 = vor.u32 %v6247, %v6250
        %v6252 = vsel %vm1839, %v6219, %v6251
        %v6253 = vshrl.u32 %v5446, 16
        %v6255 = vrot.slane %v6253, 3
        %v6256 = vshll.u32 %v5446, 16
        %v6258 = vrot.slane %v6256, 4
        %v6259 = vor.u32 %v6255, %v6258
        %v6260 = vsel %vm1839, %v6227, %v6259
        %v6261 = vshrl.u32 %v5132, 16
        %v6263 = vrot.slane %v6261, 3
        %v6264 = vshll.u32 %v5132, 16
        %v6266 = vrot.slane %v6264, 4
        %v6267 = vor.u32 %v6263, %v6266
        %v6268 = vsel %vm1839, %v6235, %v6267
        %v6269 = vshrl.u32 %v5536, 16
        %v6271 = vrot.slane %v6269, 3
        %v6272 = vshll.u32 %v5536, 16
        %v6274 = vrot.slane %v6272, 4
        %v6275 = vor.u32 %v6271, %v6274
        %v6276 = vsel %vm1839, %v6243, %v6275
        %v6277 = vshrl.u32 %v5635, 16
        %v6279 = vrot.slane %v6277, 3
        %v6280 = vshll.u32 %v5635, 16
        %v6282 = vrot.slane %v6280, 4
        %v6283 = vor.u32 %v6279, %v6282
        %v6284 = vsel %vm1839, %v6251, %v6283
        %v6285 = vshrl.u32 %v5449, 16
        %v6287 = vrot.slane %v6285, 3
        %v6288 = vshll.u32 %v5449, 16
        %v6290 = vrot.slane %v6288, 4
        %v6291 = vor.u32 %v6287, %v6290
        %v6292 = vsel %vm1839, %v6259, %v6291
        %v6293 = vshrl.u32 %v5134, 16
        %v6295 = vrot.slane %v6293, 3
        %v6296 = vshll.u32 %v5134, 16
        %v6298 = vrot.slane %v6296, 4
        %v6299 = vor.u32 %v6295, %v6298
        %v6300 = vsel %vm1839, %v6267, %v6299
        %v6301 = vshrl.u32 %v5539, 16
        %v6303 = vrot.slane %v6301, 3
        %v6304 = vshll.u32 %v5539, 16
        %v6306 = vrot.slane %v6304, 4
        %v6307 = vor.u32 %v6303, %v6306
        %v6308 = vsel %vm1839, %v6275, %v6307
        %v6309 = vshrl.u32 %v5638, 16
        %v6311 = vrot.slane %v6309, 3
        %v6312 = vshll.u32 %v5638, 16
        %v6314 = vrot.slane %v6312, 4
        %v6315 = vor.u32 %v6311, %v6314
        %v6316 = vsel %vm1839, %v6283, %v6315
        %v6317 = vshrl.u32 %v5452, 16
        %v6319 = vrot.slane %v6317, 3
        %v6320 = vshll.u32 %v5452, 16
        %v6322 = vrot.slane %v6320, 4
        %v6323 = vor.u32 %v6319, %v6322
        %v6324 = vsel %vm1839, %v6291, %v6323
        %v6325 = vshrl.u32 %v5136, 16
        %v6327 = vrot.slane %v6325, 3
        %v6328 = vshll.u32 %v5136, 16
        %v6330 = vrot.slane %v6328, 4
        %v6331 = vor.u32 %v6327, %v6330
        %v6332 = vsel %vm1839, %v6299, %v6331
        %v6333 = vshrl.u32 %v5542, 16
        %v6335 = vrot.slane %v6333, 3
        %v6336 = vshll.u32 %v5542, 16
        %v6338 = vrot.slane %v6336, 4
        %v6339 = vor.u32 %v6335, %v6338
        %v6340 = vsel %vm1839, %v6307, %v6339
        %v6341 = vshrl.u32 %v5641, 16
        %v6343 = vrot.slane %v6341, 3
        %v6344 = vshll.u32 %v5641, 16
        %v6346 = vrot.slane %v6344, 4
        %v6347 = vor.u32 %v6343, %v6346
        %v6348 = vsel %vm1839, %v6315, %v6347
        %v6349 = vshrl.u32 %v5455, 16
        %v6351 = vrot.slane %v6349, 3
        %v6352 = vshll.u32 %v5455, 16
        %v6354 = vrot.slane %v6352, 4
        %v6355 = vor.u32 %v6351, %v6354
        %v6356 = vsel %vm1839, %v6323, %v6355
        %v6357 = vshrl.u32 %v5138, 16
        %v6359 = vrot.slane %v6357, 3
        %v6360 = vshll.u32 %v5138, 16
        %v6362 = vrot.slane %v6360, 4
        %v6363 = vor.u32 %v6359, %v6362
        %v6364 = vsel %vm1839, %v6331, %v6363
        %v6365 = vshrl.u32 %v5545, 16
        %v6367 = vrot.slane %v6365, 3
        %v6368 = vshll.u32 %v5545, 16
        %v6370 = vrot.slane %v6368, 4
        %v6371 = vor.u32 %v6367, %v6370
        %v6372 = vsel %vm1839, %v6339, %v6371
        %v6373 = vshrl.u32 %v5644, 16
        %v6375 = vrot.slane %v6373, 3
        %v6376 = vshll.u32 %v5644, 16
        %v6378 = vrot.slane %v6376, 4
        %v6379 = vor.u32 %v6375, %v6378
        %v6380 = vsel %vm1839, %v6347, %v6379
        %v6381 = vshrl.u32 %v5458, 16
        %v6383 = vrot.slane %v6381, 3
        %v6384 = vshll.u32 %v5458, 16
        %v6386 = vrot.slane %v6384, 4
        %v6387 = vor.u32 %v6383, %v6386
        %v6388 = vsel %vm1839, %v6355, %v6387
        %v6389 = vshrl.u32 %v5140, 16
        %v6391 = vrot.slane %v6389, 3
        %v6392 = vshll.u32 %v5140, 16
        %v6394 = vrot.slane %v6392, 4
        %v6395 = vor.u32 %v6391, %v6394
        %v6396 = vsel %vm1839, %v6363, %v6395
        %v6397 = vshrl.u32 %v5548, 16
        %v6399 = vrot.slane %v6397, 3
        %v6400 = vshll.u32 %v5548, 16
        %v6402 = vrot.slane %v6400, 4
        %v6403 = vor.u32 %v6399, %v6402
        %v6404 = vsel %vm1839, %v6371, %v6403
        %v6405 = vshrl.u32 %v5647, 16
        %v6407 = vrot.slane %v6405, 3
        %v6408 = vshll.u32 %v5647, 16
        %v6410 = vrot.slane %v6408, 4
        %v6411 = vor.u32 %v6407, %v6410
        %v6412 = vsel %vm1839, %v6379, %v6411
        %v6413 = vshrl.u32 %v5461, 16
        %v6415 = vrot.slane %v6413, 3
        %v6416 = vshll.u32 %v5461, 16
        %v6418 = vrot.slane %v6416, 4
        %v6419 = vor.u32 %v6415, %v6418
        %v6420 = vsel %vm1839, %v6387, %v6419
        %v6421 = vshrl.u32 %v5142, 16
        %v6423 = vrot.slane %v6421, 3
        %v6424 = vshll.u32 %v5142, 16
        %v6426 = vrot.slane %v6424, 4
        %v6427 = vor.u32 %v6423, %v6426
        %v6428 = vsel %vm1839, %v6395, %v6427
        %v6429 = vshrl.u32 %v5551, 16
        %v6431 = vrot.slane %v6429, 3
        %v6432 = vshll.u32 %v5551, 16
        %v6434 = vrot.slane %v6432, 4
        %v6435 = vor.u32 %v6431, %v6434
        %v6436 = vsel %vm1839, %v6403, %v6435
        %v6437 = vshrl.u32 %v5650, 16
        %v6439 = vrot.slane %v6437, 3
        %v6440 = vshll.u32 %v5650, 16
        %v6442 = vrot.slane %v6440, 4
        %v6443 = vor.u32 %v6439, %v6442
        %v6444 = vsel %vm1839, %v6411, %v6443
        %v6445 = vshrl.u32 %v5464, 16
        %v6447 = vrot.slane %v6445, 3
        %v6448 = vshll.u32 %v5464, 16
        %v6450 = vrot.slane %v6448, 4
        %v6451 = vor.u32 %v6447, %v6450
        %v6452 = vsel %vm1839, %v6419, %v6451
        %v6453 = vshrl.u32 %v5144, 16
        %v6455 = vrot.slane %v6453, 3
        %v6456 = vshll.u32 %v5144, 16
        %v6458 = vrot.slane %v6456, 4
        %v6459 = vor.u32 %v6455, %v6458
        %v6460 = vsel %vm1839, %v6427, %v6459
        %v6461 = vshrl.u32 %v5554, 16
        %v6463 = vrot.slane %v6461, 3
        %v6464 = vshll.u32 %v5554, 16
        %v6466 = vrot.slane %v6464, 4
        %v6467 = vor.u32 %v6463, %v6466
        %v6468 = vsel %vm1839, %v6435, %v6467
        %v6469 = vshrl.u32 %v5653, 16
        %v6471 = vrot.slane %v6469, 3
        %v6472 = vshll.u32 %v5653, 16
        %v6474 = vrot.slane %v6472, 4
        %v6475 = vor.u32 %v6471, %v6474
        %v6476 = vsel %vm1839, %v6443, %v6475
        %v6477 = vshrl.u32 %v5467, 16
        %v6479 = vrot.slane %v6477, 3
        %v6480 = vshll.u32 %v5467, 16
        %v6482 = vrot.slane %v6480, 4
        %v6483 = vor.u32 %v6479, %v6482
        %v6484 = vsel %vm1839, %v6451, %v6483
        %v6485 = vshrl.u32 %v5146, 16
        %v6487 = vrot.slane %v6485, 3
        %v6488 = vshll.u32 %v5146, 16
        %v6490 = vrot.slane %v6488, 4
        %v6491 = vor.u32 %v6487, %v6490
        %v6492 = vsel %vm1839, %v6459, %v6491
        %v6493 = vshrl.u32 %v5557, 16
        %v6495 = vrot.slane %v6493, 3
        %v6496 = vshll.u32 %v5557, 16
        %v6498 = vrot.slane %v6496, 4
        %v6499 = vor.u32 %v6495, %v6498
        %v6500 = vsel %vm1839, %v6467, %v6499
        %v6501 = vshrl.u32 %v5656, 16
        %v6503 = vrot.slane %v6501, 3
        %v6504 = vshll.u32 %v5656, 16
        %v6506 = vrot.slane %v6504, 4
        %v6507 = vor.u32 %v6503, %v6506
        %v6508 = vsel %vm1839, %v6475, %v6507
        %v6509 = vshrl.u32 %v5470, 16
        %v6511 = vrot.slane %v6509, 3
        %v6512 = vshll.u32 %v5470, 16
        %v6514 = vrot.slane %v6512, 4
        %v6515 = vor.u32 %v6511, %v6514
        %v6516 = vsel %vm1839, %v6483, %v6515
        %v6517 = vshrl.u32 %v5148, 16
        %v6519 = vrot.slane %v6517, 3
        %v6520 = vshll.u32 %v5148, 16
        %v6522 = vrot.slane %v6520, 4
        %v6523 = vor.u32 %v6519, %v6522
        %v6524 = vsel %vm1839, %v6491, %v6523
        %v6525 = vshrl.u32 %v5560, 16
        %v6527 = vrot.slane %v6525, 3
        %v6528 = vshll.u32 %v5560, 16
        %v6530 = vrot.slane %v6528, 4
        %v6531 = vor.u32 %v6527, %v6530
        %v6532 = vsel %vm1839, %v6499, %v6531
        %v6533 = vshrl.u32 %v5659, 16
        %v6535 = vrot.slane %v6533, 3
        %v6536 = vshll.u32 %v5659, 16
        %v6538 = vrot.slane %v6536, 4
        %v6539 = vor.u32 %v6535, %v6538
        %v6540 = vsel %vm1839, %v6507, %v6539
        %v6541 = vshrl.u32 %v5473, 16
        %v6543 = vrot.slane %v6541, 3
        %v6544 = vshll.u32 %v5473, 16
        %v6546 = vrot.slane %v6544, 4
        %v6547 = vor.u32 %v6543, %v6546
        %v6548 = vsel %vm1839, %v6515, %v6547
        %v6549 = vshrl.u32 %v5150, 16
        %v6551 = vrot.slane %v6549, 3
        %v6552 = vshll.u32 %v5150, 16
        %v6554 = vrot.slane %v6552, 4
        %v6555 = vor.u32 %v6551, %v6554
        %v6556 = vsel %vm1839, %v6523, %v6555
        %v6557 = vshrl.u32 %v5563, 16
        %v6559 = vrot.slane %v6557, 3
        %v6560 = vshll.u32 %v5563, 16
        %v6562 = vrot.slane %v6560, 4
        %v6563 = vor.u32 %v6559, %v6562
        %v6564 = vsel %vm1839, %v6531, %v6563
        %v6565 = vshrl.u32 %v5662, 16
        %v6567 = vrot.slane %v6565, 3
        %v6568 = vshll.u32 %v5662, 16
        %v6570 = vrot.slane %v6568, 4
        %v6571 = vor.u32 %v6567, %v6570
        %v6572 = vsel %vm1839, %v6539, %v6571
        %v6573 = vshrl.u32 %v5476, 16
        %v6575 = vrot.slane %v6573, 3
        %v6576 = vshll.u32 %v5476, 16
        %v6578 = vrot.slane %v6576, 4
        %v6579 = vor.u32 %v6575, %v6578
        %v6580 = vsel %vm1839, %v6547, %v6579
        %v6581 = vshrl.u32 %v5152, 16
        %v6583 = vrot.slane %v6581, 3
        %v6584 = vshll.u32 %v5152, 16
        %v6586 = vrot.slane %v6584, 4
        %v6587 = vor.u32 %v6583, %v6586
        %v6588 = vsel %vm1839, %v6555, %v6587
        %v6589 = vshrl.u32 %v5566, 16
        %v6591 = vrot.slane %v6589, 3
        %v6592 = vshll.u32 %v5566, 16
        %v6594 = vrot.slane %v6592, 4
        %v6595 = vor.u32 %v6591, %v6594
        %v6596 = vsel %vm1839, %v6563, %v6595
        %v6597 = vshrl.u32 %v5665, 16
        %v6599 = vrot.slane %v6597, 3
        %v6600 = vshll.u32 %v5665, 16
        %v6602 = vrot.slane %v6600, 4
        %v6603 = vor.u32 %v6599, %v6602
        %v6604 = vsel %vm1839, %v6571, %v6603
        %v6605 = vshrl.u32 %v5479, 16
        %v6607 = vrot.slane %v6605, 3
        %v6608 = vshll.u32 %v5479, 16
        %v6610 = vrot.slane %v6608, 4
        %v6611 = vor.u32 %v6607, %v6610
        %v6612 = vsel %vm1839, %v6579, %v6611
        %v6613 = vshrl.u32 %v5154, 16
        %v6615 = vrot.slane %v6613, 3
        %v6616 = vshll.u32 %v5154, 16
        %v6618 = vrot.slane %v6616, 4
        %v6619 = vor.u32 %v6615, %v6618
        %v6620 = vsel %vm1839, %v6587, %v6619
        %v6621 = vshrl.u32 %v5569, 16
        %v6623 = vrot.slane %v6621, 3
        %v6624 = vshll.u32 %v5569, 16
        %v6626 = vrot.slane %v6624, 4
        %v6627 = vor.u32 %v6623, %v6626
        %v6628 = vsel %vm1839, %v6595, %v6627
        %v6629 = vshrl.u32 %v5668, 16
        %v6631 = vrot.slane %v6629, 3
        %v6632 = vshll.u32 %v5668, 16
        %v6634 = vrot.slane %v6632, 4
        %v6635 = vor.u32 %v6631, %v6634
        %v6636 = vsel %vm1839, %v6603, %v6635
        %v6637 = vshrl.u32 %v5482, 16
        %v6639 = vrot.slane %v6637, 3
        %v6640 = vshll.u32 %v5482, 16
        %v6642 = vrot.slane %v6640, 4
        %v6643 = vor.u32 %v6639, %v6642
        %v6644 = vsel %vm1839, %v6611, %v6643
        %v6645 = vshrl.u32 %v5156, 16
        %v6647 = vrot.slane %v6645, 3
        %v6648 = vshll.u32 %v5156, 16
        %v6650 = vrot.slane %v6648, 4
        %v6651 = vor.u32 %v6647, %v6650
        %v6652 = vsel %vm1839, %v6619, %v6651
        %v6653 = vshrl.u32 %v5572, 16
        %v6655 = vrot.slane %v6653, 3
        %v6656 = vshll.u32 %v5572, 16
        %v6658 = vrot.slane %v6656, 4
        %v6659 = vor.u32 %v6655, %v6658
        %v6660 = vsel %vm1839, %v6627, %v6659
        %v6661 = vshrl.u32 %v5671, 16
        %v6663 = vrot.slane %v6661, 3
        %v6664 = vshll.u32 %v5671, 16
        %v6666 = vrot.slane %v6664, 4
        %v6667 = vor.u32 %v6663, %v6666
        %v6668 = vsel %vm1839, %v6635, %v6667
        %v6669 = vshrl.u32 %v5485, 16
        %v6671 = vrot.slane %v6669, 3
        %v6672 = vshll.u32 %v5485, 16
        %v6674 = vrot.slane %v6672, 4
        %v6675 = vor.u32 %v6671, %v6674
        %v6676 = vsel %vm1839, %v6643, %v6675
        %v6677 = vshrl.u32 %v5158, 16
        %v6679 = vrot.slane %v6677, 3
        %v6680 = vshll.u32 %v5158, 16
        %v6682 = vrot.slane %v6680, 4
        %v6683 = vor.u32 %v6679, %v6682
        %v6684 = vsel %vm1839, %v6651, %v6683
        %v6685 = vshrl.u32 %v5575, 16
        %v6687 = vrot.slane %v6685, 3
        %v6688 = vshll.u32 %v5575, 16
        %v6690 = vrot.slane %v6688, 4
        %v6691 = vor.u32 %v6687, %v6690
        %v6692 = vsel %vm1839, %v6659, %v6691
        %v6693 = vshrl.u32 %v5674, 16
        %v6695 = vrot.slane %v6693, 3
        %v6696 = vshll.u32 %v5674, 16
        %v6698 = vrot.slane %v6696, 4
        %v6699 = vor.u32 %v6695, %v6698
        %v6700 = vsel %vm1839, %v6667, %v6699
        %v6701 = vshrl.u32 %v5488, 16
        %v6703 = vrot.slane %v6701, 3
        %v6704 = vshll.u32 %v5488, 16
        %v6706 = vrot.slane %v6704, 4
        %v6707 = vor.u32 %v6703, %v6706
        %v6708 = vsel %vm1839, %v6675, %v6707
        %v6709 = vshrl.u32 %v5160, 16
        %v6711 = vrot.slane %v6709, 3
        %v6712 = vshll.u32 %v5160, 16
        %v6714 = vrot.slane %v6712, 4
        %v6715 = vor.u32 %v6711, %v6714
        %v6716 = vsel %vm1839, %v6683, %v6715
        %v6717 = vshrl.u32 %v5578, 16
        %v6719 = vrot.slane %v6717, 3
        %v6720 = vshll.u32 %v5578, 16
        %v6722 = vrot.slane %v6720, 4
        %v6723 = vor.u32 %v6719, %v6722
        %v6724 = vsel %vm1839, %v6691, %v6723
        %v6725 = vshrl.u32 %v5677, 16
        %v6727 = vrot.slane %v6725, 3
        %v6728 = vshll.u32 %v5677, 16
        %v6730 = vrot.slane %v6728, 4
        %v6731 = vor.u32 %v6727, %v6730
        %v6732 = vsel %vm1839, %v6699, %v6731
        %v6733 = vshrl.u32 %v5695, 16
        %v6735 = vrot.slane %v6733, 3
        %v6736 = vshll.u32 %v5695, 16
        %v6738 = vrot.slane %v6736, 4
        %v6739 = vor.u32 %v6735, %v6738
        %v6740 = vsel %vm1839, %v6707, %v6739
        %v6742 = vshrl.u32 %v5267, 16
        %v6744 = vrot.slane %v6742, 3
        %v6745 = vshll.u32 %v5267, 16
        %v6747 = vrot.slane %v6745, 4
        %v6748 = vor.u32 %v6744, %v6747
        %v6749 = vsel %vm1839, %v6715, %v6748
        %v6750 = vshrl.u32 %v5581, 16
        %v6752 = vrot.slane %v6750, 3
        %v6753 = vshll.u32 %v5581, 16
        %v6755 = vrot.slane %v6753, 4
        %v6756 = vor.u32 %v6752, %v6755
        %v6757 = vsel %vm1839, %v6723, %v6756
        %v6758 = vshrl.u32 %v5680, 16
        %v6760 = vrot.slane %v6758, 3
        %v6761 = vshll.u32 %v5680, 16
        %v6763 = vrot.slane %v6761, 4
        %v6764 = vor.u32 %v6760, %v6763
        %v6765 = vsel %vm1839, %v6731, %v6764
        %v6766 = vshrl.u32 %v5698, 16
        %v6768 = vrot.slane %v6766, 3
        %v6769 = vshll.u32 %v5698, 16
        %v6771 = vrot.slane %v6769, 4
        %v6772 = vor.u32 %v6768, %v6771
        %v6773 = vsel %vm1839, %v6739, %v6772
        %v6775 = vshrl.u32 %v5269, 16
        %v6777 = vrot.slane %v6775, 3
        %v6778 = vshll.u32 %v5269, 16
        %v6780 = vrot.slane %v6778, 4
        %v6781 = vor.u32 %v6777, %v6780
        %v6782 = vsel %vm1839, %v6748, %v6781
        %v6783 = vshrl.u32 %v5584, 16
        %v6785 = vrot.slane %v6783, 3
        %v6786 = vshll.u32 %v5584, 16
        %v6788 = vrot.slane %v6786, 4
        %v6789 = vor.u32 %v6785, %v6788
        %v6790 = vsel %vm1839, %v6756, %v6789
        %v6791 = vshrl.u32 %v5683, 16
        %v6793 = vrot.slane %v6791, 3
        %v6794 = vshll.u32 %v5683, 16
        %v6796 = vrot.slane %v6794, 4
        %v6797 = vor.u32 %v6793, %v6796
        %v6798 = vsel %vm1839, %v6764, %v6797
        %v6799 = vshrl.u32 %v5701, 16
        %v6801 = vrot.slane %v6799, 3
        %v6802 = vshll.u32 %v5701, 16
        %v6804 = vrot.slane %v6802, 4
        %v6805 = vor.u32 %v6801, %v6804
        %v6806 = vsel %vm1839, %v6772, %v6805
        %v6808 = vshrl.u32 %v5388, 16
        %v6810 = vrot.slane %v6808, 3
        %v6811 = vshll.u32 %v5388, 16
        %v6813 = vrot.slane %v6811, 4
        %v6814 = vor.u32 %v6810, %v6813
        %v6815 = vsel %vm1839, %v6781, %v6814
        %v6816 = vshrl.u32 %v5587, 16
        %v6818 = vrot.slane %v6816, 3
        %v6819 = vshll.u32 %v5587, 16
        %v6821 = vrot.slane %v6819, 4
        %v6822 = vor.u32 %v6818, %v6821
        %v6823 = vsel %vm1839, %v6789, %v6822
        %v6824 = vshrl.u32 %v5686, 16
        %v6826 = vrot.slane %v6824, 3
        %v6827 = vshll.u32 %v5686, 16
        %v6829 = vrot.slane %v6827, 4
        %v6830 = vor.u32 %v6826, %v6829
        %v6831 = vsel %vm1839, %v6797, %v6830
        %v6832 = vshrl.u32 %v5704, 16
        %v6834 = vrot.slane %v6832, 3
        %v6835 = vshll.u32 %v5704, 16
        %v6837 = vrot.slane %v6835, 4
        %v6838 = vor.u32 %v6834, %v6837
        %v6839 = vsel %vm1839, %v6805, %v6838
        %v6841 = vshrl.u32 %v5390, 16
        %v6843 = vrot.slane %v6841, 3
        %v6844 = vshll.u32 %v5390, 16
        %v6846 = vrot.slane %v6844, 4
        %v6847 = vor.u32 %v6843, %v6846
        %v6848 = vsel %vm1839, %v6814, %v6847
        %v6849 = vshrl.u32 %v5491, 16
        %v6851 = vrot.slane %v6849, 3
        %v6852 = vshll.u32 %v5491, 16
        %v6854 = vrot.slane %v6852, 4
        %v6855 = vor.u32 %v6851, %v6854
        %v6856 = vsel %vm1839, %v6707, %v6855
        %v6857 = vshrl.u32 %v5590, 16
        %v6859 = vrot.slane %v6857, 3
        %v6860 = vshll.u32 %v5590, 16
        %v6862 = vrot.slane %v6860, 4
        %v6863 = vor.u32 %v6859, %v6862
        %v6864 = vsel %vm1839, %v6822, %v6863
        %v6865 = vshrl.u32 %v5689, 16
        %v6867 = vrot.slane %v6865, 3
        %v6868 = vshll.u32 %v5689, 16
        %v6870 = vrot.slane %v6868, 4
        %v6871 = vor.u32 %v6867, %v6870
        %v6872 = vsel %vm1839, %v6830, %v6871
        %v6873 = vshrl.u32 %v5707, 16
        %v6875 = vrot.slane %v6873, 3
        %v6876 = vshll.u32 %v5707, 16
        %v6878 = vrot.slane %v6876, 4
        %v6879 = vor.u32 %v6875, %v6878
        %v6880 = vsel %vm1839, %v6838, %v6879
        %v6882 = vshrl.u32 %v5392, 16
        %v6884 = vrot.slane %v6882, 3
        %v6885 = vshll.u32 %v5392, 16
        %v6887 = vrot.slane %v6885, 4
        %v6888 = vor.u32 %v6884, %v6887
        %v6889 = vsel %vm1839, %v6847, %v6888
        %v7064 = vunpack.c.l.b16 %v5708
        %v7065 = vunpack.c.l.b16 %v5709
        %v7066 = vunpack.c.l.b16 %v5710
        %v7067 = vunpack.c.l.b16 %v5711
        %v7068 = vunpack.c.l.b16 %v5712
        %v7069 = vunpack.c.l.b16 %v5713
        %v7070 = vunpack.c.l.b16 %v5714
        %v7071 = vunpack.c.l.b16 %v5715
        %v7072 = vunpack.c.l.b16 %v5716
        %v7073 = vunpack.c.l.b16 %v5717
        %v7074 = vunpack.c.l.b16 %v5718
        %v7075 = vunpack.c.l.b16 %v5719
        %v7076 = vunpack.c.l.b16 %v5720
        %v7077 = vunpack.c.l.b16 %v5721
        %v7078 = vunpack.c.l.b16 %v5722
        %v7079 = vunpack.c.l.b16 %v5723
        %v7080 = vunpack.c.l.b16 %v5724
        %v7081 = vunpack.c.l.b16 %v5725
        %v7082 = vunpack.c.l.b16 %v5726
        %v7083 = vunpack.c.l.b16 %v5727
        %v7084 = vunpack.c.l.b16 %v5728
        %v7085 = vunpack.c.l.b16 %v5729
        %v7086 = vunpack.c.l.b16 %v5730
        %v7087 = vunpack.c.l.b16 %v5731
        %v7088 = vunpack.c.l.b16 %v5732
        %v7089 = vunpack.c.l.b16 %v5733
        %v7090 = vunpack.c.l.b16 %v5734
        %v7091 = vunpack.c.l.b16 %v5735
        %v7092 = vunpack.c.l.b16 %v5736
        %v7093 = vunpack.c.l.b16 %v5737
        %v7094 = vunpack.c.l.b16 %v5738
        %v7095 = vunpack.c.l.b16 %v5739
        %v7096 = vunpack.c.l.b16 %v5740
        %v7097 = vunpack.c.l.b16 %v5741
        %v7098 = vunpack.c.l.b16 %v5742
        %v7099 = vunpack.c.l.b16 %v5743
        %v7100 = vunpack.c.l.b16 %v5744
        %v7101 = vunpack.c.l.b16 %v5745
        %v7102 = vunpack.c.l.b16 %v5746
        %v7103 = vunpack.c.l.b16 %v5747
        %v7104 = vunpack.c.l.b16 %v5748
        %v7105 = vunpack.c.l.b16 %v5749
        %v7106 = vunpack.c.l.b16 %v5750
        %v7107 = vunpack.c.l.b16 %v5751
        %v7108 = vunpack.c.l.b16 %v5752
        %v7109 = vunpack.c.l.b16 %v5753
        %v7110 = vunpack.c.l.b16 %v5754
        %v7111 = vunpack.c.l.b16 %v5755
        %v7112 = vunpack.c.l.b16 %v5756
        %v7113 = vunpack.c.l.b16 %v5757
        %v7114 = vunpack.c.l.b16 %v5758
        %v7115 = vunpack.c.l.b16 %v5759
        %v7116 = vunpack.c.l.b16 %v5760
        %v7117 = vunpack.c.l.b16 %v5761
        %v7118 = vunpack.c.l.b16 %v5762
        %v7119 = vunpack.c.l.b16 %v5763
        %v7120 = vunpack.c.l.b16 %v5764
        %v7121 = vunpack.c.l.b16 %v5765
        %v7122 = vunpack.c.l.b16 %v5766
        %v7123 = vunpack.c.l.b16 %v5767
        %v7124 = vunpack.c.l.b16 %v5768
        %v7125 = vunpack.c.l.b16 %v5769
        %v7126 = vunpack.c.l.b16 %v5770
        %v7127 = vunpack.c.l.b16 %v5771
        %v7128 = vunpack.c.l.b16 %v5772
        %v7129 = vunpack.c.l.b16 %v5773
        %v7130 = vunpack.c.l.b16 %v5774
        %v7131 = vunpack.c.l.b16 %v5775
        %v7132 = vunpack.c.l.b16 %v5776
        %v7133 = vunpack.c.l.b16 %v5777
        %v7134 = vunpack.c.l.b16 %v5778
        %v7135 = vunpack.c.l.b16 %v5779
        %v7136 = vpack.c.b16 %v7065, %v7064
        %v7137 = vpack.c.b16 %v7067, %v7066
        %v7138 = vpack.c.b16 %v7069, %v7068
        %v7139 = vpack.c.b16 %v7071, %v7070
        %v7140 = vpack.c.b16 %v7073, %v7072
        %v7141 = vpack.c.b16 %v7075, %v7074
        %v7142 = vpack.c.b16 %v7077, %v7076
        %v7143 = vpack.c.b16 %v7079, %v7078
        %v7144 = vpack.c.b16 %v7081, %v7080
        %v7145 = vpack.c.b16 %v7083, %v7082
        %v7146 = vpack.c.b16 %v7085, %v7084
        %v7147 = vpack.c.b16 %v7087, %v7086
        %v7148 = vpack.c.b16 %v7089, %v7088
        %v7149 = vpack.c.b16 %v7091, %v7090
        %v7150 = vpack.c.b16 %v7093, %v7092
        %v7151 = vpack.c.b16 %v7095, %v7094
        %v7152 = vpack.c.b16 %v7097, %v7096
        %v7153 = vpack.c.b16 %v7099, %v7098
        %v7154 = vpack.c.b16 %v7101, %v7100
        %v7155 = vpack.c.b16 %v7103, %v7102
        %v7156 = vpack.c.b16 %v7105, %v7104
        %v7157 = vpack.c.b16 %v7107, %v7106
        %v7158 = vpack.c.b16 %v7109, %v7108
        %v7159 = vpack.c.b16 %v7111, %v7110
        %v7160 = vpack.c.b16 %v7113, %v7112
        %v7161 = vpack.c.b16 %v7115, %v7114
        %v7162 = vpack.c.b16 %v7117, %v7116
        %v7163 = vpack.c.b16 %v7119, %v7118
        %v7164 = vpack.c.b16 %v7121, %v7120
        %v7165 = vpack.c.b16 %v7123, %v7122
        %v7166 = vpack.c.b16 %v7125, %v7124
        %v7167 = vpack.c.b16 %v7127, %v7126
        %v7168 = vpack.c.b16 %v7129, %v7128
        %v7169 = vpack.c.b16 %v7131, %v7130
        %v7170 = vpack.c.b16 %v7133, %v7132
        %v7171 = vpack.c.b16 %v7135, %v7134
        %v7209 = vsel %vm1447, %v5859, 0
        %v7212 = vsel %vm1447, %v5899, 0
        %v7215 = vsel %vm1447, %v5939, 0
        %v7218 = vsel %vm1447, %v5979, 0
        %v7221 = vsel %vm1447, %v6012, 0
        %v7224 = vsel %vm1447, %v6044, 0
        %v7227 = vsel %vm1447, %v6076, 0
        %v7230 = vsel %vm1447, %v6108, 0
        %v7233 = vsel %vm1447, %v6140, 0
        %v7236 = vsel %vm1447, %v6172, 0
        %v7239 = vsel %vm1447, %v6204, 0
        %v7242 = vsel %vm1447, %v6236, 0
        %v7245 = vsel %vm1447, %v6268, 0
        %v7248 = vsel %vm1447, %v6300, 0
        %v7251 = vsel %vm1447, %v6332, 0
        %v7254 = vsel %vm1447, %v6364, 0
        %v7257 = vsel %vm1447, %v6396, 0
        %v7260 = vsel %vm1447, %v6428, 0
        %v7263 = vsel %vm1447, %v6460, 0
        %v7266 = vsel %vm1447, %v6492, 0
        %v7269 = vsel %vm1447, %v6524, 0
        %v7272 = vsel %vm1447, %v6556, 0
        %v7275 = vsel %vm1447, %v6588, 0
        %v7278 = vsel %vm1447, %v6620, 0
        %v7281 = vsel %vm1447, %v6652, 0
        %v7284 = vsel %vm1447, %v6684, 0
        %v7287 = vsel %vm1447, %v6716, 0
        %v7290 = vsel %vm1447, %v6749, 0
        %v7293 = vsel %vm1447, %v6782, 0
        %v7296 = vsel %vm1447, %v6815, 0
        %v7299 = vsel %vm1447, %v6848, 0
        %v7302 = vsel %vm1447, %v6889, 0
        %7304 = vmatpush.bf16.msra.mxu0 %v7143
        %7305 = vmatpush.bf16.msra.mxu0 %v7142
        %7306 = vmatpush.bf16.msra.mxu0 %v7141
        %7307 = vmatpush.bf16.msra.mxu0 %v7140
        %7308 = vmatpush.bf16.msra.mxu0 %v7139
        %7309 = vmatpush.bf16.msra.mxu0 %v7138
        %7310 = vmatpush.bf16.msra.mxu0 %v7137
        %7311 = vmatpush.bf16.msra.mxu0 %v7136
        %7312 = vmatmul.bf16.gmra.mxu0 %v5798
        %v7313 = vpop.f32.mrf.mxu0
        %v7314 = vadd.f32 %v5782, %v7313
        %v7315 = vpop.f32.mrf.mxu0
        %v7316 = vadd.f32 %v5782, %v7315
        %7317 = vmatmul.bf16.gmra.mxu0 %v5867
        %v7318 = vpop.f32.mrf.mxu0
        %v7319 = vpop.f32.mrf.mxu0
        %7320 = vmatmul.bf16.gmra.mxu0 %v5907
        %v7321 = vpop.f32.mrf.mxu0
        %v7322 = vadd.f32 %v5782, %v7321
        %v7323 = vpop.f32.mrf.mxu0
        %v7324 = vadd.f32 %v5782, %v7323
        %7325 = vmatmul.bf16.gmra.mxu0 %v5947
        %v7326 = vpop.f32.mrf.mxu0
        %v7327 = vpop.f32.mrf.mxu0
        %7328 = vmatmul.bf16.gmra.mxu0 %v5980
        %v7329 = vpop.f32.mrf.mxu0
        %v7330 = vadd.f32 %v5782, %v7329
        %v7331 = vpop.f32.mrf.mxu0
        %v7332 = vadd.f32 %v5782, %v7331
        %7333 = vmatmul.bf16.gmra.mxu0 %v5891
        %v7334 = vpop.f32.mrf.mxu0
        %v7335 = vpop.f32.mrf.mxu0
        %7336 = vmatmul.bf16.gmra.mxu0 %v5931
        %v7337 = vpop.f32.mrf.mxu0
        %v7338 = vadd.f32 %v5782, %v7337
        %v7339 = vpop.f32.mrf.mxu0
        %v7340 = vadd.f32 %v5782, %v7339
        %7341 = vmatmul.bf16.gmra.mxu0 %v5971
        %v7342 = vpop.f32.mrf.mxu0
        %v7343 = vpop.f32.mrf.mxu0
        %7344 = vmatmul.bf16.gmra.mxu0 %v6004
        %v7345 = vpop.f32.mrf.mxu0
        %v7346 = vadd.f32 %v5782, %v7345
        %v7347 = vpop.f32.mrf.mxu0
        %v7348 = vadd.f32 %v5782, %v7347
        %7349 = vmatmul.bf16.gmra.mxu0 %v6036
        %v7350 = vpop.f32.mrf.mxu0
        %v7351 = vpop.f32.mrf.mxu0
        %7352 = vmatmul.bf16.gmra.mxu0 %v6068
        %v7353 = vpop.f32.mrf.mxu0
        %v7354 = vadd.f32 %v5782, %v7353
        %v7355 = vpop.f32.mrf.mxu0
        %v7356 = vadd.f32 %v5782, %v7355
        %7357 = vmatmul.bf16.gmra.mxu0 %v6100
        %v7358 = vpop.f32.mrf.mxu0
        %v7359 = vpop.f32.mrf.mxu0
        %7360 = vmatmul.bf16.gmra.mxu0 %v6132
        %v7361 = vpop.f32.mrf.mxu0
        %v7362 = vadd.f32 %v5782, %v7361
        %v7363 = vpop.f32.mrf.mxu0
        %v7364 = vadd.f32 %v5782, %v7363
        %7365 = vmatmul.bf16.gmra.mxu0 %v6164
        %v7366 = vpop.f32.mrf.mxu0
        %v7367 = vpop.f32.mrf.mxu0
        %7368 = vmatmul.bf16.gmra.mxu0 %v6196
        %v7369 = vpop.f32.mrf.mxu0
        %v7370 = vadd.f32 %v5782, %v7369
        %v7371 = vpop.f32.mrf.mxu0
        %v7372 = vadd.f32 %v5782, %v7371
        %7373 = vmatmul.bf16.gmra.mxu0 %v6228
        %v7374 = vpop.f32.mrf.mxu0
        %v7375 = vpop.f32.mrf.mxu0
        %7376 = vmatmul.bf16.gmra.mxu0 %v6260
        %v7377 = vpop.f32.mrf.mxu0
        %v7378 = vadd.f32 %v5782, %v7377
        %v7379 = vpop.f32.mrf.mxu0
        %v7380 = vadd.f32 %v5782, %v7379
        %7381 = vmatmul.bf16.gmra.mxu0 %v6292
        %v7382 = vpop.f32.mrf.mxu0
        %v7383 = vpop.f32.mrf.mxu0
        %7384 = vmatmul.bf16.gmra.mxu0 %v6324
        %v7385 = vpop.f32.mrf.mxu0
        %v7386 = vadd.f32 %v5782, %v7385
        %v7387 = vpop.f32.mrf.mxu0
        %v7388 = vadd.f32 %v5782, %v7387
        %7389 = vmatmul.bf16.gmra.mxu0 %v6356
        %v7390 = vpop.f32.mrf.mxu0
        %v7391 = vpop.f32.mrf.mxu0
        %7392 = vmatmul.bf16.gmra.mxu0 %v6388
        %v7393 = vpop.f32.mrf.mxu0
        %v7394 = vadd.f32 %v5782, %v7393
        %v7395 = vpop.f32.mrf.mxu0
        %v7396 = vadd.f32 %v5782, %v7395
        %7397 = vmatmul.bf16.gmra.mxu0 %v6420
        %v7398 = vpop.f32.mrf.mxu0
        %v7399 = vpop.f32.mrf.mxu0
        %7400 = vmatmul.bf16.gmra.mxu0 %v6452
        %v7401 = vpop.f32.mrf.mxu0
        %v7402 = vadd.f32 %v5782, %v7401
        %v7403 = vpop.f32.mrf.mxu0
        %v7404 = vadd.f32 %v5782, %v7403
        %7405 = vmatmul.bf16.gmra.mxu0 %v6484
        %v7406 = vpop.f32.mrf.mxu0
        %v7407 = vpop.f32.mrf.mxu0
        %7408 = vmatmul.bf16.gmra.mxu0 %v6516
        %v7409 = vpop.f32.mrf.mxu0
        %v7410 = vadd.f32 %v5782, %v7409
        %v7411 = vpop.f32.mrf.mxu0
        %v7412 = vadd.f32 %v5782, %v7411
        %7413 = vmatmul.bf16.gmra.mxu0 %v6548
        %v7414 = vpop.f32.mrf.mxu0
        %v7415 = vpop.f32.mrf.mxu0
        %7416 = vmatmul.bf16.gmra.mxu0 %v6580
        %v7417 = vpop.f32.mrf.mxu0
        %v7418 = vadd.f32 %v5782, %v7417
        %v7419 = vpop.f32.mrf.mxu0
        %v7420 = vadd.f32 %v5782, %v7419
        %7421 = vmatmul.bf16.gmra.mxu0 %v6612
        %v7422 = vpop.f32.mrf.mxu0
        %v7423 = vpop.f32.mrf.mxu0
        %7424 = vmatmul.bf16.gmra.mxu0 %v6644
        %v7425 = vpop.f32.mrf.mxu0
        %v7426 = vadd.f32 %v5782, %v7425
        %v7427 = vpop.f32.mrf.mxu0
        %v7428 = vadd.f32 %v5782, %v7427
        %7429 = vmatmul.bf16.gmra.mxu0 %v6676
        %v7430 = vpop.f32.mrf.mxu0
        %v7431 = vpop.f32.mrf.mxu0
        %7432 = vmatmul.bf16.gmra.mxu0 %v6708
        %v7433 = vpop.f32.mrf.mxu0
        %v7434 = vadd.f32 %v5782, %v7433
        %v7435 = vpop.f32.mrf.mxu0
        %v7436 = vadd.f32 %v5782, %v7435
        %7437 = vmatmul.bf16.gmra.mxu0 %v6856
        %v7438 = vpop.f32.mrf.mxu0
        %v7439 = vpop.f32.mrf.mxu0
        %7440 = vdwg.mxu0
        %7441 = vmatpush.bf16.msra.mxu0 %v7151
        %7442 = vmatpush.bf16.msra.mxu0 %v7150
        %7443 = vmatpush.bf16.msra.mxu0 %v7149
        %7444 = vmatpush.bf16.msra.mxu0 %v7148
        %7445 = vmatpush.bf16.msra.mxu0 %v7147
        %7446 = vmatpush.bf16.msra.mxu0 %v7146
        %7447 = vmatpush.bf16.msra.mxu0 %v7145
        %7448 = vmatpush.bf16.msra.mxu0 %v7144
        %7449 = vmatmul.bf16.gmra.mxu0 %v5813
        %v7450 = vpop.f32.mrf.mxu0
        %v7451 = vadd.f32 %v7314, %v7450
        %v7452 = vpop.f32.mrf.mxu0
        %v7453 = vadd.f32 %v7316, %v7452
        %7454 = vmatmul.bf16.gmra.mxu0 %v5875
        %v7455 = vpop.f32.mrf.mxu0
        %v7456 = vpop.f32.mrf.mxu0
        %7457 = vmatmul.bf16.gmra.mxu0 %v5915
        %v7458 = vpop.f32.mrf.mxu0
        %v7459 = vadd.f32 %v7322, %v7458
        %v7460 = vpop.f32.mrf.mxu0
        %v7461 = vadd.f32 %v7324, %v7460
        %7462 = vmatmul.bf16.gmra.mxu0 %v5955
        %v7463 = vpop.f32.mrf.mxu0
        %v7464 = vpop.f32.mrf.mxu0
        %7465 = vmatmul.bf16.gmra.mxu0 %v5988
        %v7466 = vpop.f32.mrf.mxu0
        %v7467 = vadd.f32 %v7330, %v7466
        %v7468 = vpop.f32.mrf.mxu0
        %v7469 = vadd.f32 %v7332, %v7468
        %7470 = vmatmul.bf16.gmra.mxu0 %v6020
        %v7471 = vpop.f32.mrf.mxu0
        %v7472 = vpop.f32.mrf.mxu0
        %7473 = vmatmul.bf16.gmra.mxu0 %v6052
        %v7474 = vpop.f32.mrf.mxu0
        %v7475 = vadd.f32 %v7338, %v7474
        %v7476 = vpop.f32.mrf.mxu0
        %v7477 = vadd.f32 %v7340, %v7476
        %7478 = vmatmul.bf16.gmra.mxu0 %v6084
        %v7479 = vpop.f32.mrf.mxu0
        %v7480 = vpop.f32.mrf.mxu0
        %7481 = vmatmul.bf16.gmra.mxu0 %v6116
        %v7482 = vpop.f32.mrf.mxu0
        %v7483 = vadd.f32 %v7346, %v7482
        %v7484 = vpop.f32.mrf.mxu0
        %v7485 = vadd.f32 %v7348, %v7484
        %7486 = vmatmul.bf16.gmra.mxu0 %v6148
        %v7487 = vpop.f32.mrf.mxu0
        %v7488 = vpop.f32.mrf.mxu0
        %7489 = vmatmul.bf16.gmra.mxu0 %v6180
        %v7490 = vpop.f32.mrf.mxu0
        %v7491 = vadd.f32 %v7354, %v7490
        %v7492 = vpop.f32.mrf.mxu0
        %v7493 = vadd.f32 %v7356, %v7492
        %7494 = vmatmul.bf16.gmra.mxu0 %v6212
        %v7495 = vpop.f32.mrf.mxu0
        %v7496 = vpop.f32.mrf.mxu0
        %7497 = vmatmul.bf16.gmra.mxu0 %v6244
        %v7498 = vpop.f32.mrf.mxu0
        %v7499 = vadd.f32 %v7362, %v7498
        %v7500 = vpop.f32.mrf.mxu0
        %v7501 = vadd.f32 %v7364, %v7500
        %7502 = vmatmul.bf16.gmra.mxu0 %v6276
        %v7503 = vpop.f32.mrf.mxu0
        %v7504 = vpop.f32.mrf.mxu0
        %7505 = vmatmul.bf16.gmra.mxu0 %v6308
        %v7506 = vpop.f32.mrf.mxu0
        %v7507 = vadd.f32 %v7370, %v7506
        %v7508 = vpop.f32.mrf.mxu0
        %v7509 = vadd.f32 %v7372, %v7508
        %7510 = vmatmul.bf16.gmra.mxu0 %v6340
        %v7511 = vpop.f32.mrf.mxu0
        %v7512 = vpop.f32.mrf.mxu0
        %7513 = vmatmul.bf16.gmra.mxu0 %v6372
        %v7514 = vpop.f32.mrf.mxu0
        %v7515 = vadd.f32 %v7378, %v7514
        %v7516 = vpop.f32.mrf.mxu0
        %v7517 = vadd.f32 %v7380, %v7516
        %7518 = vmatmul.bf16.gmra.mxu0 %v6404
        %v7519 = vpop.f32.mrf.mxu0
        %v7520 = vpop.f32.mrf.mxu0
        %7521 = vmatmul.bf16.gmra.mxu0 %v6436
        %v7522 = vpop.f32.mrf.mxu0
        %v7523 = vadd.f32 %v7386, %v7522
        %v7524 = vpop.f32.mrf.mxu0
        %v7525 = vadd.f32 %v7388, %v7524
        %7526 = vmatmul.bf16.gmra.mxu0 %v6468
        %v7527 = vpop.f32.mrf.mxu0
        %v7528 = vpop.f32.mrf.mxu0
        %7529 = vmatmul.bf16.gmra.mxu0 %v6500
        %v7530 = vpop.f32.mrf.mxu0
        %v7531 = vadd.f32 %v7394, %v7530
        %v7532 = vpop.f32.mrf.mxu0
        %v7533 = vadd.f32 %v7396, %v7532
        %7534 = vmatmul.bf16.gmra.mxu0 %v6532
        %v7535 = vpop.f32.mrf.mxu0
        %v7536 = vpop.f32.mrf.mxu0
        %7537 = vmatmul.bf16.gmra.mxu0 %v6564
        %v7538 = vpop.f32.mrf.mxu0
        %v7539 = vadd.f32 %v7402, %v7538
        %v7540 = vpop.f32.mrf.mxu0
        %v7541 = vadd.f32 %v7404, %v7540
        %7542 = vmatmul.bf16.gmra.mxu0 %v6596
        %v7543 = vpop.f32.mrf.mxu0
        %v7544 = vpop.f32.mrf.mxu0
        %7545 = vmatmul.bf16.gmra.mxu0 %v6628
        %v7546 = vpop.f32.mrf.mxu0
        %v7547 = vadd.f32 %v7410, %v7546
        %v7548 = vpop.f32.mrf.mxu0
        %v7549 = vadd.f32 %v7412, %v7548
        %7550 = vmatmul.bf16.gmra.mxu0 %v6660
        %v7551 = vpop.f32.mrf.mxu0
        %v7552 = vpop.f32.mrf.mxu0
        %7553 = vmatmul.bf16.gmra.mxu0 %v6692
        %v7554 = vpop.f32.mrf.mxu0
        %v7555 = vadd.f32 %v7418, %v7554
        %v7556 = vpop.f32.mrf.mxu0
        %v7557 = vadd.f32 %v7420, %v7556
        %7558 = vmatmul.bf16.gmra.mxu0 %v6724
        %v7559 = vpop.f32.mrf.mxu0
        %v7560 = vpop.f32.mrf.mxu0
        %7561 = vmatmul.bf16.gmra.mxu0 %v6757
        %v7562 = vpop.f32.mrf.mxu0
        %v7563 = vadd.f32 %v7426, %v7562
        %v7564 = vpop.f32.mrf.mxu0
        %v7565 = vadd.f32 %v7428, %v7564
        %7566 = vmatmul.bf16.gmra.mxu0 %v6790
        %v7567 = vpop.f32.mrf.mxu0
        %v7568 = vpop.f32.mrf.mxu0
        %7569 = vmatmul.bf16.gmra.mxu0 %v6823
        %v7570 = vpop.f32.mrf.mxu0
        %v7571 = vadd.f32 %v7434, %v7570
        %v7572 = vpop.f32.mrf.mxu0
        %v7573 = vadd.f32 %v7436, %v7572
        %7574 = vmatmul.bf16.gmra.mxu0 %v6864
        %v7575 = vpop.f32.mrf.mxu0
        %v7576 = vpop.f32.mrf.mxu0
        %7577 = vdwg.mxu0
        %7578 = vmatpush.bf16.msra.mxu0 %v7159
        %7579 = vmatpush.bf16.msra.mxu0 %v7158
        %7580 = vmatpush.bf16.msra.mxu0 %v7157
        %7581 = vmatpush.bf16.msra.mxu0 %v7156
        %7582 = vmatpush.bf16.msra.mxu0 %v7155
        %7583 = vmatpush.bf16.msra.mxu0 %v7154
        %7584 = vmatpush.bf16.msra.mxu0 %v7153
        %7585 = vmatpush.bf16.msra.mxu0 %v7152
        %7586 = vmatmul.bf16.gmra.mxu0 %v5828
        %v7587 = vpop.f32.mrf.mxu0
        %v7588 = vadd.f32 %v7451, %v7587
        %v7589 = vpop.f32.mrf.mxu0
        %v7590 = vadd.f32 %v7453, %v7589
        %7591 = vmatmul.bf16.gmra.mxu0 %v5883
        %v7592 = vpop.f32.mrf.mxu0
        %v7593 = vpop.f32.mrf.mxu0
        %7594 = vmatmul.bf16.gmra.mxu0 %v5923
        %v7595 = vpop.f32.mrf.mxu0
        %v7596 = vadd.f32 %v7459, %v7595
        %v7597 = vpop.f32.mrf.mxu0
        %v7598 = vadd.f32 %v7461, %v7597
        %7599 = vmatmul.bf16.gmra.mxu0 %v5963
        %v7600 = vpop.f32.mrf.mxu0
        %v7601 = vpop.f32.mrf.mxu0
        %7602 = vmatmul.bf16.gmra.mxu0 %v5996
        %v7603 = vpop.f32.mrf.mxu0
        %v7604 = vadd.f32 %v7467, %v7603
        %v7605 = vpop.f32.mrf.mxu0
        %v7606 = vadd.f32 %v7469, %v7605
        %7607 = vmatmul.bf16.gmra.mxu0 %v6028
        %v7608 = vpop.f32.mrf.mxu0
        %v7609 = vpop.f32.mrf.mxu0
        %7610 = vmatmul.bf16.gmra.mxu0 %v6060
        %v7611 = vpop.f32.mrf.mxu0
        %v7612 = vadd.f32 %v7475, %v7611
        %v7613 = vpop.f32.mrf.mxu0
        %v7614 = vadd.f32 %v7477, %v7613
        %7615 = vmatmul.bf16.gmra.mxu0 %v6092
        %v7616 = vpop.f32.mrf.mxu0
        %v7617 = vpop.f32.mrf.mxu0
        %7618 = vmatmul.bf16.gmra.mxu0 %v6124
        %v7619 = vpop.f32.mrf.mxu0
        %v7620 = vadd.f32 %v7483, %v7619
        %v7621 = vpop.f32.mrf.mxu0
        %v7622 = vadd.f32 %v7485, %v7621
        %7623 = vmatmul.bf16.gmra.mxu0 %v6156
        %v7624 = vpop.f32.mrf.mxu0
        %v7625 = vpop.f32.mrf.mxu0
        %7626 = vmatmul.bf16.gmra.mxu0 %v6188
        %v7627 = vpop.f32.mrf.mxu0
        %v7628 = vadd.f32 %v7491, %v7627
        %v7629 = vpop.f32.mrf.mxu0
        %v7630 = vadd.f32 %v7493, %v7629
        %7631 = vmatmul.bf16.gmra.mxu0 %v6220
        %v7632 = vpop.f32.mrf.mxu0
        %v7633 = vpop.f32.mrf.mxu0
        %7634 = vmatmul.bf16.gmra.mxu0 %v6252
        %v7635 = vpop.f32.mrf.mxu0
        %v7636 = vadd.f32 %v7499, %v7635
        %v7637 = vpop.f32.mrf.mxu0
        %v7638 = vadd.f32 %v7501, %v7637
        %7639 = vmatmul.bf16.gmra.mxu0 %v6284
        %v7640 = vpop.f32.mrf.mxu0
        %v7641 = vpop.f32.mrf.mxu0
        %7642 = vmatmul.bf16.gmra.mxu0 %v6316
        %v7643 = vpop.f32.mrf.mxu0
        %v7644 = vadd.f32 %v7507, %v7643
        %v7645 = vpop.f32.mrf.mxu0
        %v7646 = vadd.f32 %v7509, %v7645
        %7647 = vmatmul.bf16.gmra.mxu0 %v6348
        %v7648 = vpop.f32.mrf.mxu0
        %v7649 = vpop.f32.mrf.mxu0
        %7650 = vmatmul.bf16.gmra.mxu0 %v6380
        %v7651 = vpop.f32.mrf.mxu0
        %v7652 = vadd.f32 %v7515, %v7651
        %v7653 = vpop.f32.mrf.mxu0
        %v7654 = vadd.f32 %v7517, %v7653
        %7655 = vmatmul.bf16.gmra.mxu0 %v6412
        %v7656 = vpop.f32.mrf.mxu0
        %v7657 = vpop.f32.mrf.mxu0
        %7658 = vmatmul.bf16.gmra.mxu0 %v6444
        %v7659 = vpop.f32.mrf.mxu0
        %v7660 = vadd.f32 %v7523, %v7659
        %v7661 = vpop.f32.mrf.mxu0
        %v7662 = vadd.f32 %v7525, %v7661
        %7663 = vmatmul.bf16.gmra.mxu0 %v6476
        %v7664 = vpop.f32.mrf.mxu0
        %v7665 = vpop.f32.mrf.mxu0
        %7666 = vmatmul.bf16.gmra.mxu0 %v6508
        %v7667 = vpop.f32.mrf.mxu0
        %v7668 = vadd.f32 %v7531, %v7667
        %v7669 = vpop.f32.mrf.mxu0
        %v7670 = vadd.f32 %v7533, %v7669
        %7671 = vmatmul.bf16.gmra.mxu0 %v6540
        %v7672 = vpop.f32.mrf.mxu0
        %v7673 = vpop.f32.mrf.mxu0
        %7674 = vmatmul.bf16.gmra.mxu0 %v6572
        %v7675 = vpop.f32.mrf.mxu0
        %v7676 = vadd.f32 %v7539, %v7675
        %v7677 = vpop.f32.mrf.mxu0
        %v7678 = vadd.f32 %v7541, %v7677
        %7679 = vmatmul.bf16.gmra.mxu0 %v6604
        %v7680 = vpop.f32.mrf.mxu0
        %v7681 = vpop.f32.mrf.mxu0
        %7682 = vmatmul.bf16.gmra.mxu0 %v6636
        %v7683 = vpop.f32.mrf.mxu0
        %v7684 = vadd.f32 %v7547, %v7683
        %v7685 = vpop.f32.mrf.mxu0
        %v7686 = vadd.f32 %v7549, %v7685
        %7687 = vmatmul.bf16.gmra.mxu0 %v6668
        %v7688 = vpop.f32.mrf.mxu0
        %v7689 = vpop.f32.mrf.mxu0
        %7690 = vmatmul.bf16.gmra.mxu0 %v6700
        %v7691 = vpop.f32.mrf.mxu0
        %v7692 = vadd.f32 %v7555, %v7691
        %v7693 = vpop.f32.mrf.mxu0
        %v7694 = vadd.f32 %v7557, %v7693
        %7695 = vmatmul.bf16.gmra.mxu0 %v6732
        %v7696 = vpop.f32.mrf.mxu0
        %v7697 = vpop.f32.mrf.mxu0
        %7698 = vmatmul.bf16.gmra.mxu0 %v6765
        %v7699 = vpop.f32.mrf.mxu0
        %v7700 = vadd.f32 %v7563, %v7699
        %v7701 = vpop.f32.mrf.mxu0
        %v7702 = vadd.f32 %v7565, %v7701
        %7703 = vmatmul.bf16.gmra.mxu0 %v6798
        %v7704 = vpop.f32.mrf.mxu0
        %v7705 = vpop.f32.mrf.mxu0
        %7706 = vmatmul.bf16.gmra.mxu0 %v6831
        %v7707 = vpop.f32.mrf.mxu0
        %v7708 = vadd.f32 %v7571, %v7707
        %v7709 = vpop.f32.mrf.mxu0
        %v7710 = vadd.f32 %v7573, %v7709
        %7711 = vmatmul.bf16.gmra.mxu0 %v6872
        %v7712 = vpop.f32.mrf.mxu0
        %v7713 = vpop.f32.mrf.mxu0
        %7714 = vdwg.mxu0
        %7715 = vmatpush.bf16.msra.mxu0 %v7167
        %7716 = vmatpush.bf16.msra.mxu0 %v7166
        %7717 = vmatpush.bf16.msra.mxu0 %v7165
        %7718 = vmatpush.bf16.msra.mxu0 %v7164
        %7719 = vmatpush.bf16.msra.mxu0 %v7163
        %7720 = vmatpush.bf16.msra.mxu0 %v7162
        %7721 = vmatpush.bf16.msra.mxu0 %v7161
        %7722 = vmatpush.bf16.msra.mxu0 %v7160
        %7723 = vmatmul.bf16.gmra.mxu0 %v5843
        %v7724 = vpop.f32.mrf.mxu0
        %v7725 = vadd.f32 %v7588, %v7724
        %v7726 = vpop.f32.mrf.mxu0
        %v7727 = vadd.f32 %v7590, %v7726
        %7728 = vmatmul.bf16.gmra.mxu0 %v5891
        %v7729 = vpop.f32.mrf.mxu0
        %v7730 = vpop.f32.mrf.mxu0
        %7731 = vmatmul.bf16.gmra.mxu0 %v5931
        %v7732 = vpop.f32.mrf.mxu0
        %v7733 = vadd.f32 %v7596, %v7732
        %v7734 = vpop.f32.mrf.mxu0
        %v7735 = vadd.f32 %v7598, %v7734
        %7736 = vmatmul.bf16.gmra.mxu0 %v5971
        %v7737 = vpop.f32.mrf.mxu0
        %v7738 = vpop.f32.mrf.mxu0
        %7739 = vmatmul.bf16.gmra.mxu0 %v6004
        %v7740 = vpop.f32.mrf.mxu0
        %v7741 = vadd.f32 %v7604, %v7740
        %v7742 = vpop.f32.mrf.mxu0
        %v7743 = vadd.f32 %v7606, %v7742
        %7744 = vmatmul.bf16.gmra.mxu0 %v6036
        %v7745 = vpop.f32.mrf.mxu0
        %v7746 = vpop.f32.mrf.mxu0
        %7747 = vmatmul.bf16.gmra.mxu0 %v6068
        %v7748 = vpop.f32.mrf.mxu0
        %v7749 = vadd.f32 %v7612, %v7748
        %v7750 = vpop.f32.mrf.mxu0
        %v7751 = vadd.f32 %v7614, %v7750
        %7752 = vmatmul.bf16.gmra.mxu0 %v6100
        %v7753 = vpop.f32.mrf.mxu0
        %v7754 = vpop.f32.mrf.mxu0
        %7755 = vmatmul.bf16.gmra.mxu0 %v6132
        %v7756 = vpop.f32.mrf.mxu0
        %v7757 = vadd.f32 %v7620, %v7756
        %v7758 = vpop.f32.mrf.mxu0
        %v7759 = vadd.f32 %v7622, %v7758
        %7760 = vmatmul.bf16.gmra.mxu0 %v6164
        %v7761 = vpop.f32.mrf.mxu0
        %v7762 = vpop.f32.mrf.mxu0
        %7763 = vmatmul.bf16.gmra.mxu0 %v6196
        %v7764 = vpop.f32.mrf.mxu0
        %v7765 = vadd.f32 %v7628, %v7764
        %v7766 = vpop.f32.mrf.mxu0
        %v7767 = vadd.f32 %v7630, %v7766
        %7768 = vmatmul.bf16.gmra.mxu0 %v6228
        %v7769 = vpop.f32.mrf.mxu0
        %v7770 = vpop.f32.mrf.mxu0
        %7771 = vmatmul.bf16.gmra.mxu0 %v6260
        %v7772 = vpop.f32.mrf.mxu0
        %v7773 = vadd.f32 %v7636, %v7772
        %v7774 = vpop.f32.mrf.mxu0
        %v7775 = vadd.f32 %v7638, %v7774
        %7776 = vmatmul.bf16.gmra.mxu0 %v6292
        %v7777 = vpop.f32.mrf.mxu0
        %v7778 = vpop.f32.mrf.mxu0
        %7779 = vmatmul.bf16.gmra.mxu0 %v6324
        %v7780 = vpop.f32.mrf.mxu0
        %v7781 = vadd.f32 %v7644, %v7780
        %v7782 = vpop.f32.mrf.mxu0
        %v7783 = vadd.f32 %v7646, %v7782
        %7784 = vmatmul.bf16.gmra.mxu0 %v6356
        %v7785 = vpop.f32.mrf.mxu0
        %v7786 = vpop.f32.mrf.mxu0
        %7787 = vmatmul.bf16.gmra.mxu0 %v6388
        %v7788 = vpop.f32.mrf.mxu0
        %v7789 = vadd.f32 %v7652, %v7788
        %v7790 = vpop.f32.mrf.mxu0
        %v7791 = vadd.f32 %v7654, %v7790
        %7792 = vmatmul.bf16.gmra.mxu0 %v6420
        %v7793 = vpop.f32.mrf.mxu0
        %v7794 = vpop.f32.mrf.mxu0
        %7795 = vmatmul.bf16.gmra.mxu0 %v6452
        %v7796 = vpop.f32.mrf.mxu0
        %v7797 = vadd.f32 %v7660, %v7796
        %v7798 = vpop.f32.mrf.mxu0
        %v7799 = vadd.f32 %v7662, %v7798
        %7800 = vmatmul.bf16.gmra.mxu0 %v6484
        %v7801 = vpop.f32.mrf.mxu0
        %v7802 = vpop.f32.mrf.mxu0
        %7803 = vmatmul.bf16.gmra.mxu0 %v6516
        %v7804 = vpop.f32.mrf.mxu0
        %v7805 = vadd.f32 %v7668, %v7804
        %v7806 = vpop.f32.mrf.mxu0
        %v7807 = vadd.f32 %v7670, %v7806
        %7808 = vmatmul.bf16.gmra.mxu0 %v6548
        %v7809 = vpop.f32.mrf.mxu0
        %v7810 = vpop.f32.mrf.mxu0
        %7811 = vmatmul.bf16.gmra.mxu0 %v6580
        %v7812 = vpop.f32.mrf.mxu0
        %v7813 = vadd.f32 %v7676, %v7812
        %v7814 = vpop.f32.mrf.mxu0
        %v7815 = vadd.f32 %v7678, %v7814
        %7816 = vmatmul.bf16.gmra.mxu0 %v6612
        %v7817 = vpop.f32.mrf.mxu0
        %v7818 = vpop.f32.mrf.mxu0
        %7819 = vmatmul.bf16.gmra.mxu0 %v6644
        %v7820 = vpop.f32.mrf.mxu0
        %v7821 = vadd.f32 %v7684, %v7820
        %v7822 = vpop.f32.mrf.mxu0
        %v7823 = vadd.f32 %v7686, %v7822
        %7824 = vmatmul.bf16.gmra.mxu0 %v6676
        %v7825 = vpop.f32.mrf.mxu0
        %v7826 = vpop.f32.mrf.mxu0
        %7827 = vmatmul.bf16.gmra.mxu0 %v6708
        %v7828 = vpop.f32.mrf.mxu0
        %v7829 = vadd.f32 %v7692, %v7828
        %v7830 = vpop.f32.mrf.mxu0
        %v7831 = vadd.f32 %v7694, %v7830
        %7832 = vmatmul.bf16.gmra.mxu0 %v6740
        %v7833 = vpop.f32.mrf.mxu0
        %v7834 = vpop.f32.mrf.mxu0
        %7835 = vmatmul.bf16.gmra.mxu0 %v6773
        %v7836 = vpop.f32.mrf.mxu0
        %v7837 = vadd.f32 %v7700, %v7836
        %v7838 = vpop.f32.mrf.mxu0
        %v7839 = vadd.f32 %v7702, %v7838
        %7840 = vmatmul.bf16.gmra.mxu0 %v6806
        %v7841 = vpop.f32.mrf.mxu0
        %v7842 = vpop.f32.mrf.mxu0
        %7843 = vmatmul.bf16.gmra.mxu0 %v6839
        %v7844 = vpop.f32.mrf.mxu0
        %v7845 = vadd.f32 %v7708, %v7844
        %v7846 = vpop.f32.mrf.mxu0
        %v7847 = vadd.f32 %v7710, %v7846
        %7848 = vmatmul.bf16.gmra.mxu0 %v6880
        %v7849 = vpop.f32.mrf.mxu0
        %v7850 = vpop.f32.mrf.mxu0
        %7851 = vdwg.mxu0
        %7852 = vmatpush.bf16.msra.mxu0 0
        %7853 = vmatpush.bf16.msra.mxu0 0
        %7854 = vmatpush.bf16.msra.mxu0 0
        %7855 = vmatpush.bf16.msra.mxu0 0
        %7856 = vmatpush.bf16.msra.mxu0 %v7171
        %7857 = vmatpush.bf16.msra.mxu0 %v7170
        %7858 = vmatpush.bf16.msra.mxu0 %v7169
        %7859 = vmatpush.bf16.msra.mxu0 %v7168
        %7860 = vmatmul.bf16.gmra.mxu0 %v7209
        %v7861 = vpop.f32.mrf.mxu0
        %v7862 = vadd.f32 %v7725, %v7861
        %v7863 = vpop.f32.mrf.mxu0
        %v7864 = vadd.f32 %v7727, %v7863
        %7865 = vmatmul.bf16.gmra.mxu0 %v7212
        %v7866 = vpop.f32.mrf.mxu0
        %v7867 = vpop.f32.mrf.mxu0
        %7868 = vmatmul.bf16.gmra.mxu0 %v7215
        %v7869 = vpop.f32.mrf.mxu0
        %v7870 = vadd.f32 %v7733, %v7869
        %v7871 = vpop.f32.mrf.mxu0
        %v7872 = vadd.f32 %v7735, %v7871
        %7873 = vmatmul.bf16.gmra.mxu0 %v7218
        %v7874 = vpop.f32.mrf.mxu0
        %v7875 = vpop.f32.mrf.mxu0
        %7876 = vmatmul.bf16.gmra.mxu0 %v7221
        %v7877 = vpop.f32.mrf.mxu0
        %v7878 = vadd.f32 %v7741, %v7877
        %v7879 = vpop.f32.mrf.mxu0
        %v7880 = vadd.f32 %v7743, %v7879
        %7881 = vmatmul.bf16.gmra.mxu0 %v7224
        %v7882 = vpop.f32.mrf.mxu0
        %v7883 = vpop.f32.mrf.mxu0
        %7884 = vmatmul.bf16.gmra.mxu0 %v7227
        %v7885 = vpop.f32.mrf.mxu0
        %v7886 = vadd.f32 %v7749, %v7885
        %v7887 = vpop.f32.mrf.mxu0
        %v7888 = vadd.f32 %v7751, %v7887
        %7889 = vmatmul.bf16.gmra.mxu0 %v7230
        %v7890 = vpop.f32.mrf.mxu0
        %v7891 = vpop.f32.mrf.mxu0
        %7892 = vmatmul.bf16.gmra.mxu0 %v7233
        %v7893 = vpop.f32.mrf.mxu0
        %v7894 = vadd.f32 %v7757, %v7893
        %v7895 = vpop.f32.mrf.mxu0
        %v7896 = vadd.f32 %v7759, %v7895
        %7897 = vmatmul.bf16.gmra.mxu0 %v7236
        %v7898 = vpop.f32.mrf.mxu0
        %v7899 = vpop.f32.mrf.mxu0
        %7900 = vmatmul.bf16.gmra.mxu0 %v7239
        %v7901 = vpop.f32.mrf.mxu0
        %v7902 = vadd.f32 %v7765, %v7901
        %v7903 = vpop.f32.mrf.mxu0
        %v7904 = vadd.f32 %v7767, %v7903
        %7905 = vmatmul.bf16.gmra.mxu0 %v7242
        %v7906 = vpop.f32.mrf.mxu0
        %v7907 = vpop.f32.mrf.mxu0
        %7908 = vmatmul.bf16.gmra.mxu0 %v7245
        %v7909 = vpop.f32.mrf.mxu0
        %v7910 = vadd.f32 %v7773, %v7909
        %v7911 = vpop.f32.mrf.mxu0
        %v7912 = vadd.f32 %v7775, %v7911
        %7913 = vmatmul.bf16.gmra.mxu0 %v7248
        %v7914 = vpop.f32.mrf.mxu0
        %v7915 = vpop.f32.mrf.mxu0
        %7916 = vmatmul.bf16.gmra.mxu0 %v7251
        %v7917 = vpop.f32.mrf.mxu0
        %v7918 = vadd.f32 %v7781, %v7917
        %v7919 = vpop.f32.mrf.mxu0
        %v7920 = vadd.f32 %v7783, %v7919
        %7921 = vmatmul.bf16.gmra.mxu0 %v7254
        %v7922 = vpop.f32.mrf.mxu0
        %v7923 = vpop.f32.mrf.mxu0
        %7924 = vmatmul.bf16.gmra.mxu0 %v7257
        %v7925 = vpop.f32.mrf.mxu0
        %v7926 = vadd.f32 %v7789, %v7925
        %v7927 = vpop.f32.mrf.mxu0
        %v7928 = vadd.f32 %v7791, %v7927
        %7929 = vmatmul.bf16.gmra.mxu0 %v7260
        %v7930 = vpop.f32.mrf.mxu0
        %v7931 = vpop.f32.mrf.mxu0
        %7932 = vmatmul.bf16.gmra.mxu0 %v7263
        %v7933 = vpop.f32.mrf.mxu0
        %v7934 = vadd.f32 %v7797, %v7933
        %v7935 = vpop.f32.mrf.mxu0
        %v7936 = vadd.f32 %v7799, %v7935
        %7937 = vmatmul.bf16.gmra.mxu0 %v7266
        %v7938 = vpop.f32.mrf.mxu0
        %v7939 = vpop.f32.mrf.mxu0
        %7940 = vmatmul.bf16.gmra.mxu0 %v7269
        %v7941 = vpop.f32.mrf.mxu0
        %v7942 = vadd.f32 %v7805, %v7941
        %v7943 = vpop.f32.mrf.mxu0
        %v7944 = vadd.f32 %v7807, %v7943
        %7945 = vmatmul.bf16.gmra.mxu0 %v7272
        %v7946 = vpop.f32.mrf.mxu0
        %v7947 = vpop.f32.mrf.mxu0
        %7948 = vmatmul.bf16.gmra.mxu0 %v7275
        %v7949 = vpop.f32.mrf.mxu0
        %v7950 = vadd.f32 %v7813, %v7949
        %v7951 = vpop.f32.mrf.mxu0
        %v7952 = vadd.f32 %v7815, %v7951
        %7953 = vmatmul.bf16.gmra.mxu0 %v7278
        %v7954 = vpop.f32.mrf.mxu0
        %v7955 = vpop.f32.mrf.mxu0
        %7956 = vmatmul.bf16.gmra.mxu0 %v7281
        %v7957 = vpop.f32.mrf.mxu0
        %v7958 = vadd.f32 %v7821, %v7957
        %v7959 = vpop.f32.mrf.mxu0
        %v7960 = vadd.f32 %v7823, %v7959
        %7961 = vmatmul.bf16.gmra.mxu0 %v7284
        %v7962 = vpop.f32.mrf.mxu0
        %v7963 = vpop.f32.mrf.mxu0
        %7964 = vmatmul.bf16.gmra.mxu0 %v7287
        %v7965 = vpop.f32.mrf.mxu0
        %v7966 = vadd.f32 %v7829, %v7965
        %v7967 = vpop.f32.mrf.mxu0
        %v7968 = vadd.f32 %v7831, %v7967
        %7969 = vmatmul.bf16.gmra.mxu0 %v7290
        %v7970 = vpop.f32.mrf.mxu0
        %v7971 = vpop.f32.mrf.mxu0
        %7972 = vmatmul.bf16.gmra.mxu0 %v7293
        %v7973 = vpop.f32.mrf.mxu0
        %v7974 = vadd.f32 %v7837, %v7973
        %v7975 = vpop.f32.mrf.mxu0
        %v7976 = vadd.f32 %v7839, %v7975
        %7977 = vmatmul.bf16.gmra.mxu0 %v7296
        %v7978 = vpop.f32.mrf.mxu0
        %v7979 = vpop.f32.mrf.mxu0
        %7980 = vmatmul.bf16.gmra.mxu0 %v7299
        %v7981 = vpop.f32.mrf.mxu0
        %v7982 = vadd.f32 %v7845, %v7981
        %v7983 = vpop.f32.mrf.mxu0
        %v7984 = vadd.f32 %v7847, %v7983
        %7985 = vmatmul.bf16.gmra.mxu0 %v7302
        %v7986 = vpop.f32.mrf.mxu0
        %v7987 = vpop.f32.mrf.mxu0
        %7988 = vdwg.mxu0
        %v7989 = vld [vmem:[%s222] sm:$0xff]
        %v7990 = vld [vmem:[%s222 + $0x8] sm:$0xff]
        %v7991 = vld [vmem:[%s222 + $0x10] sm:$0xff]
        %v7992 = vld [vmem:[%s222 + $0x18] sm:$0xff]
        %v7993 = vld [vmem:[%s222 + $0x20] sm:$0xff]
        %v7994 = vld [vmem:[%s222 + $0x28] sm:$0xff]
        %v7995 = vld [vmem:[%s222 + $0x30] sm:$0xff]
        %v7996 = vld [vmem:[%s222 + $0x38] sm:$0xff]
        %v7997 = vld [vmem:[%s222 + $0x40] sm:$0xff]
        %v7998 = vld [vmem:[%s222 + $0x48] sm:$0xff]
        %v7999 = vld [vmem:[%s222 + $0x50] sm:$0xff]
        %v8000 = vld [vmem:[%s222 + $0x58] sm:$0xff]
        %v8001 = vld [vmem:[%s222 + $0x60] sm:$0xff]
        %v8002 = vld [vmem:[%s222 + $0x68] sm:$0xff]
        %v8003 = vld [vmem:[%s222 + $0x70] sm:$0xff]
        %v8004 = vld [vmem:[%s222 + $0x78] sm:$0xff]
        %v8005 = vld [vmem:[%s222 + $0x80] sm:$0xff]
        %v8006 = vld [vmem:[%s222 + $0x88] sm:$0xff]
        %v8007 = vld [vmem:[%s222 + $0x90] sm:$0xff]
        %v8008 = vld [vmem:[%s222 + $0x98] sm:$0xff]
        %v8009 = vld [vmem:[%s222 + $0xa0] sm:$0xff]
        %v8010 = vld [vmem:[%s222 + $0xa8] sm:$0xff]
        %v8011 = vld [vmem:[%s222 + $0xb0] sm:$0xff]
        %v8012 = vld [vmem:[%s222 + $0xb8] sm:$0xff]
        %v8013 = vld [vmem:[%s222 + $0xc0] sm:$0xff]
        %v8014 = vld [vmem:[%s222 + $0xc8] sm:$0xff]
        %v8015 = vld [vmem:[%s222 + $0xd0] sm:$0xff]
        %v8016 = vld [vmem:[%s222 + $0xd8] sm:$0xff]
        %v8017 = vld [vmem:[%s222 + $0xe0] sm:$0xff]
        %v8018 = vld [vmem:[%s222 + $0xe8] sm:$0xff]
        %v8019 = vld [vmem:[%s222 + $0xf0] sm:$0xff]
        %v8020 = vld [vmem:[%s222 + $0xf8] sm:$0xff]
        %v8021 = vadd.f32 %v7989, %v7862
        %v8022 = vadd.f32 %v7990, %v7864
        %v8023 = vadd.f32 %v7991, %v7870
        %v8024 = vadd.f32 %v7992, %v7872
        %v8025 = vadd.f32 %v7993, %v7878
        %v8026 = vadd.f32 %v7994, %v7880
        %v8027 = vadd.f32 %v7995, %v7886
        %v8028 = vadd.f32 %v7996, %v7888
        %v8029 = vadd.f32 %v7997, %v7894
        %v8030 = vadd.f32 %v7998, %v7896
        %v8031 = vadd.f32 %v7999, %v7902
        %v8032 = vadd.f32 %v8000, %v7904
        %v8033 = vadd.f32 %v8001, %v7910
        %v8034 = vadd.f32 %v8002, %v7912
        %v8035 = vadd.f32 %v8003, %v7918
        %v8036 = vadd.f32 %v8004, %v7920
        %v8037 = vadd.f32 %v8005, %v7926
        %v8038 = vadd.f32 %v8006, %v7928
        %v8039 = vadd.f32 %v8007, %v7934
        %v8040 = vadd.f32 %v8008, %v7936
        %v8041 = vadd.f32 %v8009, %v7942
        %v8042 = vadd.f32 %v8010, %v7944
        %v8043 = vadd.f32 %v8011, %v7950
        %v8044 = vadd.f32 %v8012, %v7952
        %v8045 = vadd.f32 %v8013, %v7958
        %v8046 = vadd.f32 %v8014, %v7960
        %v8047 = vadd.f32 %v8015, %v7966
        %v8048 = vadd.f32 %v8016, %v7968
        %v8049 = vadd.f32 %v8017, %v7974
        %v8050 = vadd.f32 %v8018, %v7976
        %v8051 = vadd.f32 %v8019, %v7982
        %v8052 = vadd.f32 %v8020, %v7984
        %8053 = vst.msk [vmem:[%s217] sm:$0xff] %vm1447, %v8021
        %8054 = vst.msk [vmem:[%s217 + $0x8] sm:$0xff] %vm1447, %v8022
        %8055 = vst.msk [vmem:[%s217 + $0x10] sm:$0xff] %vm1447, %v8023
        %8056 = vst.msk [vmem:[%s217 + $0x18] sm:$0xff] %vm1447, %v8024
        %8057 = vst.msk [vmem:[%s217 + $0x20] sm:$0xff] %vm1447, %v8025
        %8058 = vst.msk [vmem:[%s217 + $0x28] sm:$0xff] %vm1447, %v8026
        %8059 = vst.msk [vmem:[%s217 + $0x30] sm:$0xff] %vm1447, %v8027
        %8060 = vst.msk [vmem:[%s217 + $0x38] sm:$0xff] %vm1447, %v8028
        %8061 = vst.msk [vmem:[%s217 + $0x40] sm:$0xff] %vm1447, %v8029
        %8062 = vst.msk [vmem:[%s217 + $0x48] sm:$0xff] %vm1447, %v8030
        %8063 = vst.msk [vmem:[%s217 + $0x50] sm:$0xff] %vm1447, %v8031
        %8064 = vst.msk [vmem:[%s217 + $0x58] sm:$0xff] %vm1447, %v8032
        %8065 = vst.msk [vmem:[%s217 + $0x60] sm:$0xff] %vm1447, %v8033
        %8066 = vst.msk [vmem:[%s217 + $0x68] sm:$0xff] %vm1447, %v8034
        %8067 = vst.msk [vmem:[%s217 + $0x70] sm:$0xff] %vm1447, %v8035
        %8068 = vst.msk [vmem:[%s217 + $0x78] sm:$0xff] %vm1447, %v8036
        %8069 = vst.msk [vmem:[%s217 + $0x80] sm:$0xff] %vm1447, %v8037
        %8070 = vst.msk [vmem:[%s217 + $0x88] sm:$0xff] %vm1447, %v8038
        %8071 = vst.msk [vmem:[%s217 + $0x90] sm:$0xff] %vm1447, %v8039
        %8072 = vst.msk [vmem:[%s217 + $0x98] sm:$0xff] %vm1447, %v8040
        %8073 = vst.msk [vmem:[%s217 + $0xa0] sm:$0xff] %vm1447, %v8041
        %8074 = vst.msk [vmem:[%s217 + $0xa8] sm:$0xff] %vm1447, %v8042
        %8075 = vst.msk [vmem:[%s217 + $0xb0] sm:$0xff] %vm1447, %v8043
        %8076 = vst.msk [vmem:[%s217 + $0xb8] sm:$0xff] %vm1447, %v8044
        %8077 = vst.msk [vmem:[%s217 + $0xc0] sm:$0xff] %vm1447, %v8045
        %8078 = vst.msk [vmem:[%s217 + $0xc8] sm:$0xff] %vm1447, %v8046
        %8079 = vst.msk [vmem:[%s217 + $0xd0] sm:$0xff] %vm1447, %v8047
        %8080 = vst.msk [vmem:[%s217 + $0xd8] sm:$0xff] %vm1447, %v8048
        %8081 = vst.msk [vmem:[%s217 + $0xe0] sm:$0xff] %vm1447, %v8049
        %8082 = vst.msk [vmem:[%s217 + $0xe8] sm:$0xff] %vm1447, %v8050
        %8083 = vst.msk [vmem:[%s217 + $0xf0] sm:$0xff] %vm1447, %v8051
        %8084 = vst.msk [vmem:[%s217 + $0xf8] sm:$0xff] %vm1447, %v8052
        %s8085 = sand.u32 %s137, 1
        %s8086 = scalar_lea.sflag [#allocation5], %s8085
        %s8087 = sand.u32 %s137, 1
        %s8088 = smul.addr %s8087, 256
        %s8089 = scalar_lea.vmem [#allocation4], %s8088
        // Predicated region
        $region41: #{tpu_custom_call.1} parent=39 // pred_check
          %p8090 = pneg %p147
        $region42: #{tpu_custom_call.1} parent=39 // pred_check_branch
          %8092 = sbr.rel (%p8090) target = $region44
        $region43: #{tpu_custom_call.1} parent=39 // pred_region
          %8094 = vsyncadd %s8086, 0
          %s8095 = smul.addr %s19, 32
          %s8096 = smul.addr %s8095, 8
          %s8097 = scalar_lea.hbm %s5, %s8096
          %s8098 = sshll.u32 %s8089, 4
          %s8099 = int_to_ptr.vmem [resolvable:$true] %s8098
          %s8100 = sshll.u32 %s8097, 4
          %s8101 = int_to_ptr.hbm [resolvable:$true] %s8100
          %8106 = dma.vmem_to_hbm [thread:$0]  %s8099, 4096, %s8101, %s8086, 128, 128, 8
        $region44: #{tpu_custom_call.1} parent=39 // pred_fallthru
          _
      $region40: #{tpu_custom_call.1} parent=5 // pred_fallthru
        _
      %p8107 = scmp.le.s32.totalorder 2, %s14
      // Predicated region
      $region45: #{tpu_custom_call.1} parent=5 // pred_check
        %p8108 = pneg %p8107
      $region46: #{tpu_custom_call.1} parent=5 // pred_check_branch
        %8110 = sbr.rel (%p8108) target = $region48
      $region47: #{tpu_custom_call.1} parent=5 // pred_region
        %s8111 = ssub.s32 %s14, 2
        // Predicated region
        $region49: #{tpu_custom_call.1} parent=47 // pred_check
          %p8112 = pneg %p153
        $region50: #{tpu_custom_call.1} parent=47 // pred_check_branch
          %8114 = sbr.rel (%p8112) target = $region52
        $region51: #{tpu_custom_call.1} parent=47 // pred_region
          %s8115 = sand.u32 %s138, 1
          %s8116 = scalar_lea.sflag [#allocation5], %s8115
          %s8117 = sand.u32 %s138, 1
          %s8118 = smul.addr %s8117, 256
          %s8119 = scalar_lea.vmem [#allocation4], %s8118
          %8121 = dma.done %s8116, 4096
        $region52: #{tpu_custom_call.1} parent=47 // pred_fallthru
          _
      $region48: #{tpu_custom_call.1} parent=5 // pred_fallthru
        _
    $region6: #{tpu_custom_call.1} parent=1 // loop_footer
      %s18 = sadd.s32 1, %s14
    $region7: #{tpu_custom_call.1} parent=1 // loop_footer_branch
      %13 = sbr.rel target = $region3
    $region8: #{tpu_custom_call.1} parent=1 // loop_exit
      _
    %8122 = vsyncpa [#allocation5], 1
    %s8123 = scalar_lea.sflag [#allocation5], 1
    %8124 = vsyncpa %s8123, 1

</llo_original>
